<compile_context>
chip_gen: v7x
topology: tpu7x:2x2x1
jax: 0.10.0
libtpu: 0.0.40
codegen_flags: <defaults>
</compile_context>

<pallas_src>
import math
import numpy as np
import jax
import jax.numpy as jnp
from jax.experimental import pallas as pl
from jax.experimental.pallas import tpu as pltpu

EPS = 1e-6          # annotated-transformer LayerNorm eps (added to std)
NEG_INF = -1e9      # masked_fill value


def _layer_norm(v, gamma, beta):
    # Matches the reference LayerNorm: torch.std is unbiased (ddof=1), eps on std.
    d = v.shape[-1]
    mean = jnp.mean(v, axis=-1, keepdims=True)
    var = jnp.sum((v - mean) ** 2, axis=-1, keepdims=True) / (d - 1)
    return gamma * (v - mean) / (jnp.sqrt(var) + EPS) + beta


# ---------------------------------------------------------------------------
# Fused decoder-layer kernel (one batch element x one query tile per grid step)
# ---------------------------------------------------------------------------
def make_decoder_layer_kernel(n_heads, compute_dtype, fuse_final_norm):
    cdt = jnp.dtype(compute_dtype)
    use_approx_recip = (cdt == jnp.dtype(jnp.bfloat16))
    f32 = jnp.float32
    H = n_heads

    def kernel(x_ref, mem_ref, tgt_bias_ref, src_bias_ref,
               ln_w_ref, ln_b_ref, attn_w_ref, attn_b_ref,
               ff_w1_ref, ff_b1_ref, ff_w2_ref, ff_b2_ref, *rest):
        if fuse_final_norm:
            (fin_w_ref, fin_b_ref, o_ref,
             k_self_ref, v_self_ref, k_mem_ref, v_mem_ref) = rest
        else:
            (o_ref, k_self_ref, v_self_ref, k_mem_ref, v_mem_ref) = rest

        T, D = x_ref.shape
        TQ = o_ref.shape[0]
        d_k = D // H

        qi = pl.program_id(1)
        q0 = pl.multiple_of(qi * TQ, TQ)

        gamma = lambda i: ln_w_ref[i:i + 1, :]
        beta = lambda i: ln_b_ref[i:i + 1, :]

        def head_split(rows):          # (n, D) -> (H, n, d_k)
            n = rows.shape[0]
            return jnp.swapaxes(rows.reshape(n, H, d_k), 0, 1)

        def proj(rows_cdt, w_idx):     # (n, D) x (D, D) full-width MXU matmul
            return (jnp.dot(rows_cdt, attn_w_ref[w_idx],
                            preferred_element_type=f32) + attn_b_ref[w_idx])

        # ---- per-batch-element K/V caches: computed once at the first query
        # tile, reused by every subsequent tile of the same batch element.
        @pl.when(qi == 0)
        def _():
            xn_kv = _layer_norm(x_ref[...].astype(f32), gamma(0), beta(0)).astype(cdt)
            k_self_ref[...] = head_split(proj(xn_kv, 1)).astype(cdt)
            v_self_ref[...] = head_split(proj(xn_kv, 2)).astype(cdt)
            mem = mem_ref[...].astype(cdt)
            k_mem_ref[...] = head_split(proj(mem, 5)).astype(cdt)
            v_mem_ref[...] = head_split(proj(mem, 6)).astype(cdt)

        # ---- additive attention biases (no dense mask DMA, no compare+select
        # on score tiles).  Causal part regenerated from iota per query tile.
        rows = jax.lax.broadcasted_iota(jnp.int32, (TQ, T), 0) + q0
        cols = jax.lax.broadcasted_iota(jnp.int32, (TQ, T), 1)
        self_bias = jnp.where(rows >= cols, 0.0, NEG_INF) + tgt_bias_ref[...]  # (TQ, T)
        src_bias = src_bias_ref[...]                                           # (1, S)

        def softmax(s):  # f32 in / f32 out
            m = jnp.max(s, axis=-1, keepdims=True)
            e = jnp.exp(s - m)
            denom = jnp.sum(e, axis=-1, keepdims=True)
            if use_approx_recip:
                return e * pl.reciprocal(denom, approx=True)   # EUP slot, ~free
            return e / denom

        def mha(q_rows, base, k_cache_ref, v_cache_ref, bias):
            # 1/sqrt(d_k) is folded into Wq / bq at host prepack time.
            q = proj(q_rows.astype(cdt), base + 0)              # (TQ, D), f32
            qh = head_split(q).astype(cdt)                      # (H, TQ, d_k)
            kh = k_cache_ref[...]                               # (H, Skv, d_k), cdt
            vh = v_cache_ref[...]
            s = jnp.einsum('hqk,hsk->hqs', qh, kh, preferred_element_type=f32)
            p = softmax(s + bias[None])
            # TODO(synk): for long T/S on v7x, tile the key axis with an online
            # softmax (flash-style) to cap the (H, TQ, T) f32 score memory.
            o = jnp.einsum('hqs,hsk->hqk', p.astype(cdt), vh,
                           preferred_element_type=f32)          # (H, TQ, d_k)
            # Output projection: concat heads and do ONE (TQ,D)x(D,D) dot; the
            # head sum is carried out inside the MXU contraction.
            o_cat = jnp.swapaxes(o, 0, 1).reshape(TQ, D).astype(cdt)
            return jnp.dot(o_cat, attn_w_ref[base + 3],
                           preferred_element_type=f32) + attn_b_ref[base + 3]

        # query tile sliced from the (already resident) full x block
        x_q = x_ref[pl.ds(q0, TQ), :].astype(f32)               # (TQ, D)

        # sublayer 1: masked self-attention (pre-norm residual, dropout = id)
        xn = _layer_norm(x_q, gamma(0), beta(0))
        x_t = x_q + mha(xn, 0, k_self_ref, v_self_ref, self_bias)

        # sublayer 2: cross-attention over encoder memory
        xn = _layer_norm(x_t, gamma(1), beta(1))
        x_t = x_t + mha(xn, 4, k_mem_ref, v_mem_ref, src_bias)

        # sublayer 3: position-wise feed-forward w2(relu(w1(x)))
        xn = _layer_norm(x_t, gamma(2), beta(2))
        h1 = jnp.maximum(
            jnp.dot(xn.astype(cdt), ff_w1_ref[...], preferred_element_type=f32)
            + ff_b1_ref[...], 0.0)
        x_t = x_t + jnp.dot(h1.astype(cdt), ff_w2_ref[...],
                            preferred_element_type=f32) + ff_b2_ref[...]

        if fuse_final_norm:   # Decoder.norm fused into the last layer kernel
            x_t = _layer_norm(x_t, fin_w_ref[...], fin_b_ref[...])

        o_ref[...] = x_t.astype(o_ref.dtype)

    return kernel


def decoder_layer_apply(x, memory, tgt_bias, src_bias, lp, n_heads, *,
                        q_tile=None, compute_dtype=jnp.float32, final_norm=None):
    B, T, D = x.shape
    S = memory.shape[1]
    assert D % n_heads == 0
    d_k = D // n_heads
    cdt = jnp.dtype(compute_dtype)

    if q_tile is not None:
        TQ = q_tile
    elif T % 256 == 0:        # match the 256-row MXU on v6e/v7x
        TQ = 256
    elif T % 128 == 0:
        TQ = 128
    else:
        TQ = T
    if T % TQ != 0 or (TQ % 8 != 0 and TQ != T):
        TQ = T
    n_qt = T // TQ

    # Host prepack: keep the torch (D, D) layout; fold 1/sqrt(d_k) into Wq and
    # bq (self + cross) so the kernel does no q scaling.
    scale = 1.0 / math.sqrt(d_k)
    s_vec = jnp.array([scale, 1, 1, 1, scale, 1, 1, 1], jnp.float32)
    attn_w = (lp["attn_w"].astype(jnp.float32) * s_vec[:, None, None]).astype(cdt)
    attn_b = (lp["attn_b"].astype(jnp.float32) * s_vec[:, None]).reshape(8, 1, D)
    D_ff = lp["ff_w1"].shape[1]

    fuse_final = final_norm is not None
    kernel = make_decoder_layer_kernel(n_heads, cdt, fuse_final)

    # TODO(synk): on v7x, consider pipeline_mode=pl.Buffered(1) on the constant
    # weight specs below to avoid double-buffering weights that never change.
    in_specs = [
        pl.BlockSpec((None, T, D), lambda b, qi: (b, 0, 0)),     # x: full per-batch block
        pl.BlockSpec((None, S, D), lambda b, qi: (b, 0, 0)),     # encoder memory
        pl.BlockSpec((None, 1, T), lambda b, qi: (b, 0, 0)),     # tgt key-padding bias row
        pl.BlockSpec((None, 1, S), lambda b, qi: (b, 0, 0)),     # src key-padding bias row
        pl.BlockSpec((3, D), lambda b, qi: (0, 0)),              # ln gammas
        pl.BlockSpec((3, D), lambda b, qi: (0, 0)),              # ln betas
        pl.BlockSpec((8, D, D), lambda b, qi: (0, 0, 0)),        # attn weights (torch layout)
        pl.BlockSpec((8, 1, D), lambda b, qi: (0, 0, 0)),        # attn biases
        pl.BlockSpec((D, D_ff), lambda b, qi: (0, 0)),           # ff w1
        pl.BlockSpec((1, D_ff), lambda b, qi: (0, 0)),           # ff b1
        pl.BlockSpec((D_ff, D), lambda b, qi: (0, 0)),           # ff w2
        pl.BlockSpec((1, D), lambda b, qi: (0, 0)),              # ff b2
    ]
    args = [x, memory, tgt_bias, src_bias,
            lp["ln_w"].astype(jnp.float32), lp["ln_b"].astype(jnp.float32),
            attn_w, attn_b,
            lp["ff_w1"].astype(cdt), lp["ff_b1"].astype(jnp.float32),
            lp["ff_w2"].astype(cdt), lp["ff_b2"].astype(jnp.float32)]
    if fuse_final:
        in_specs += [pl.BlockSpec((1, D), lambda b, qi: (0, 0)),
                     pl.BlockSpec((1, D), lambda b, qi: (0, 0))]
        args += [final_norm[0].astype(jnp.float32), final_norm[1].astype(jnp.float32)]

    # Per-batch-element K/V caches (head-major so the per-tile relayout is paid once).
    scratch_shapes = [
        pltpu.VMEM((n_heads, T, d_k), cdt),   # self-attn K cache
        pltpu.VMEM((n_heads, T, d_k), cdt),   # self-attn V cache
        pltpu.VMEM((n_heads, S, d_k), cdt),   # cross-attn K cache
        pltpu.VMEM((n_heads, S, d_k), cdt),   # cross-attn V cache
    ]

    # VMEM budget from the actual chip: ~75% of capacity (96 MiB on v5e/v6e's
    # 128 MiB, 48 MiB under v7x's 64 MiB ceiling), capped for safety.
    try:
        vmem_cap = pltpu.get_tpu_info().vmem_capacity_bytes
    except Exception:
        vmem_cap = 64 * 1024 * 1024
    vmem_limit = min(int(vmem_cap * 3 // 4), 100 * 1024 * 1024)

    return pl.pallas_call(
        kernel,
        out_shape=jax.ShapeDtypeStruct((B, T, D), jnp.float32),  # residual stream stays f32
        grid=(B, n_qt),
        in_specs=in_specs,
        out_specs=pl.BlockSpec((None, TQ, D), lambda b, qi: (b, qi, 0)),
        scratch_shapes=scratch_shapes,
        compiler_params=pltpu.CompilerParams(
            # b parallel (megacore shards batch), qi arbitrary (K/V cache reuse).
            dimension_semantics=("parallel", "arbitrary"),
            vmem_limit_bytes=vmem_limit),
    )(*args)


# ---------------------------------------------------------------------------
# Decoder.forward
# ---------------------------------------------------------------------------
def decoder_forward(x, memory, src_mask, tgt_mask, params, n_heads,
                    q_tile=None, compute_dtype=jnp.float32):
    B, T, _ = x.shape
    S = memory.shape[1]
    # Layer I/O (residual stream) stays f32 even on the bf16 compute path.
    x = x.astype(jnp.float32)
    memory = memory.astype(jnp.float32)

    # Compact additive bias rows instead of dense (B,T,T)/(B,T,S) f32 masks.
    # The causal part of tgt_mask is regenerated in-kernel from iota; the key
    # padding component is the last query row of the given mask.
    # TODO(synk): fully arbitrary (non causal-and-padding) tgt_mask patterns
    # would need a dense-mask kernel path.
    src_row = jnp.broadcast_to(src_mask.astype(jnp.float32)[..., -1, :], (B, S))
    tgt_row = jnp.broadcast_to(tgt_mask.astype(jnp.float32)[..., -1, :], (B, T))
    src_bias = jnp.where(src_row != 0, 0.0, NEG_INF).reshape(B, 1, S)
    tgt_bias = jnp.where(tgt_row != 0, 0.0, NEG_INF).reshape(B, 1, T)

    n_layers = len(params["layers"])
    for i, lp in enumerate(params["layers"]):
        final = (params["norm_w"], params["norm_b"]) if i == n_layers - 1 else None
        x = decoder_layer_apply(x, memory, tgt_bias, src_bias, lp, n_heads,
                                q_tile=q_tile, compute_dtype=compute_dtype,
                                final_norm=final)
    return x


# ---------------------------------------------------------------------------
# Deterministic synthetic parameter init (torch-equivalent layout)
# ---------------------------------------------------------------------------
def init_params(key, n_layers, d_model, d_ff):
    layers = []
    for _ in range(n_layers):
        key, k0, k1, k2, k3, k4, k5 = jax.random.split(key, 7)
        layers.append(dict(
            ln_w=jnp.ones((3, d_model), jnp.float32),
            ln_b=jnp.zeros((3, d_model), jnp.float32),
            # 8 = [self: Wq,Wk,Wv,Wo | src: Wq,Wk,Wv,Wo], stored (in, out)
            attn_w=jax.random.normal(k0, (8, d_model, d_model), jnp.float32) / math.sqrt(d_model),
            attn_b=jax.random.normal(k1, (8, d_model), jnp.float32) * 0.02,
            ff_w1=jax.random.normal(k2, (d_model, d_ff), jnp.float32) / math.sqrt(d_model),
            ff_b1=jax.random.normal(k3, (1, d_ff), jnp.float32) * 0.02,
            ff_w2=jax.random.normal(k4, (d_ff, d_model), jnp.float32) / math.sqrt(d_ff),
            ff_b2=jax.random.normal(k5, (1, d_model), jnp.float32) * 0.02,
        ))
    return dict(layers=layers,
                norm_w=jnp.ones((1, d_model), jnp.float32),
                norm_b=jnp.zeros((1, d_model), jnp.float32))


# ---------------------------------------------------------------------------
# Pure-JAX reference (for correctness check)
# ---------------------------------------------------------------------------
def reference_forward(x, memory, src_mask, tgt_mask, params, n_heads):
    B, T, D = x.shape
    S = memory.shape[1]
    d_k = D // n_heads
    tgt_m = jnp.broadcast_to(tgt_mask.astype(jnp.float32), (B, T, T))
    src_m = jnp.broadcast_to(src_mask.astype(jnp.float32), (B, T, S))

    def ln(v, g, b):
        mean = jnp.mean(v, axis=-1, keepdims=True)
        var = jnp.sum((v - mean) ** 2, axis=-1, keepdims=True) / (D - 1)
        return g * (v - mean) / (jnp.sqrt(var) + EPS) + b

    def mha(q_in, kv_in, w, bvec, base, mask):
        q = q_in @ w[base + 0] + bvec[base + 0]
        k = kv_in @ w[base + 1] + bvec[base + 1]
        v = kv_in @ w[base + 2] + bvec[base + 2]
        split = lambda t: t.reshape(t.shape[0], t.shape[1], n_heads, d_k).transpose(0, 2, 1, 3)
        qh, kh, vh = split(q), split(k), split(v)
        s = jnp.einsum("bhqd,bhkd->bhqk", qh, kh) / math.sqrt(d_k)
        s = jnp.where(mask[:, None, :, :] != 0.0, s, NEG_INF)
        p = jax.nn.softmax(s, axis=-1)
        o = jnp.einsum("bhqk,bhkd->bhqd", p, vh).transpose(0, 2, 1, 3).reshape(B, q.shape[1], D)
        return o @ w[base + 3] + bvec[base + 3]

    for lp in params["layers"]:
        xn = ln(x, lp["ln_w"][0], lp["ln_b"][0])
        x = x + mha(xn, xn, lp["attn_w"], lp["attn_b"], 0, tgt_m)
        xn = ln(x, lp["ln_w"][1], lp["ln_b"][1])
        x = x + mha(xn, memory, lp["attn_w"], lp["attn_b"], 4, src_m)
        xn = ln(x, lp["ln_w"][2], lp["ln_b"][2])
        h1 = jnp.maximum(xn @ lp["ff_w1"] + lp["ff_b1"], 0.0)
        x = x + h1 @ lp["ff_w2"] + lp["ff_b2"]
    return ln(x, params["norm_w"], params["norm_b"])


if __name__ == "__main__":
    B, T, S, D, H, D_FF, N = 2, 16, 8, 32, 4, 64, 2
    TQ = 8   # two query tiles per batch element -> exercises the K/V-cache reuse path
    key = jax.random.PRNGKey(0)
    k_x, k_m, k_p = jax.random.split(key, 3)

    x = jax.random.normal(k_x, (B, T, D), jnp.float32)
    memory = jax.random.normal(k_m, (B, S, D), jnp.float32)
    tgt_mask = jnp.tril(jnp.ones((T, T), jnp.float32))[None]               # (1, T, T) causal
    lengths = jnp.array([S, S - 2], jnp.int32)                             # src key padding
    src_mask = (jnp.arange(S)[None, :] < lengths[:, None]).astype(jnp.float32)[:, None, :]
    params = init_params(k_p, N, D, D_FF)

    ref = reference_forward(x, memory, src_mask, tgt_mask, params, H)

    # f32 run: tight correctness check against the pure-JAX reference.
    out32 = decoder_forward(x, memory, src_mask, tgt_mask, params, H,
                            q_tile=TQ, compute_dtype=jnp.float32)
    out32 = jax.block_until_ready(out32)
    assert out32.shape == (B, T, D)
    np.testing.assert_allclose(np.asarray(out32), np.asarray(ref), atol=2e-3, rtol=2e-3)

    # bf16 run: the perf configuration (bf16 matmul operands + cached K/V, f32
    # accumulation, f32 residual stream / LayerNorm / softmax stats).
    outbf = decoder_forward(x, memory, src_mask, tgt_mask, params, H,
                            q_tile=TQ, compute_dtype=jnp.bfloat16)
    outbf = jax.block_until_ready(outbf)
    np.testing.assert_allclose(np.asarray(outbf), np.asarray(ref), atol=5e-2, rtol=5e-2)

    print("KERNEL_OK")
</pallas_src>

<mosaic_0001>
module attributes {stable_mosaic.version = 11 : i64} {
  func.func @kernel(%arg0: i32, %arg1: i32, %arg2: memref<1x16x32xf32, #tpu.memory_space<vmem>>, %arg3: memref<1x8x32xf32, #tpu.memory_space<vmem>>, %arg4: memref<1x1x16xf32, #tpu.memory_space<vmem>>, %arg5: memref<1x1x8xf32, #tpu.memory_space<vmem>>, %arg6: memref<3x32xf32, #tpu.memory_space<vmem>>, %arg7: memref<3x32xf32, #tpu.memory_space<vmem>>, %arg8: memref<8x32x32xf32, #tpu.memory_space<vmem>>, %arg9: memref<8x1x32xf32, #tpu.memory_space<vmem>>, %arg10: memref<32x64xf32, #tpu.memory_space<vmem>>, %arg11: memref<1x64xf32, #tpu.memory_space<vmem>>, %arg12: memref<64x32xf32, #tpu.memory_space<vmem>>, %arg13: memref<1x32xf32, #tpu.memory_space<vmem>>, %arg14: memref<1x8x32xf32, #tpu.memory_space<vmem>>, %arg15: memref<4x16x8xf32, #tpu.memory_space<vmem>>, %arg16: memref<4x16x8xf32, #tpu.memory_space<vmem>>, %arg17: memref<4x8x8xf32, #tpu.memory_space<vmem>>, %arg18: memref<4x8x8xf32, #tpu.memory_space<vmem>>) attributes {dimension_semantics = [#tpu.dimension_semantics<parallel>, #tpu.dimension_semantics<arbitrary>], iteration_bounds = array<i64: 2, 2>, scalar_prefetch = 0 : i64, scratch_operands = 4 : i64, tpu.core_type = #tpu.core_type<tc>, window_params = [{transform_indices = @transform_0, window_bounds = array<i64: 1, 16, 32>}, {transform_indices = @transform_1, window_bounds = array<i64: 1, 8, 32>}, {transform_indices = @transform_2, window_bounds = array<i64: 1, 1, 16>}, {transform_indices = @transform_3, window_bounds = array<i64: 1, 1, 8>}, {pipeline_mode = #tpu.pipeline_mode<synchronous>, transform_indices = @transform_4, window_bounds = array<i64: 3, 32>}, {pipeline_mode = #tpu.pipeline_mode<synchronous>, transform_indices = @transform_5, window_bounds = array<i64: 3, 32>}, {pipeline_mode = #tpu.pipeline_mode<synchronous>, transform_indices = @transform_6, window_bounds = array<i64: 8, 32, 32>}, {pipeline_mode = #tpu.pipeline_mode<synchronous>, transform_indices = @transform_7, window_bounds = array<i64: 8, 1, 32>}, {pipeline_mode = #tpu.pipeline_mode<synchronous>, transform_indices = @transform_8, window_bounds = array<i64: 32, 64>}, {pipeline_mode = #tpu.pipeline_mode<synchronous>, transform_indices = @transform_9, window_bounds = array<i64: 1, 64>}, {pipeline_mode = #tpu.pipeline_mode<synchronous>, transform_indices = @transform_10, window_bounds = array<i64: 64, 32>}, {pipeline_mode = #tpu.pipeline_mode<synchronous>, transform_indices = @transform_11, window_bounds = array<i64: 1, 32>}, {transform_indices = @transform_12, window_bounds = array<i64: 1, 8, 32>}]} {
    %c8_i32 = arith.constant 8 : i32
    %0 = arith.muli %arg1, %c8_i32 : i32
    %1 = tpu.assume_multiple %0, 8 : i32
    %c0_i32 = arith.constant 0 : i32
    %2 = arith.cmpi eq, %arg1, %c0_i32 : i32
    %3 = arith.extui %2 : i1 to i32
    %c0_i32_0 = arith.constant 0 : i32
    %4 = arith.cmpi ne, %3, %c0_i32_0 : i32
    scf.if %4 {
      %c0_93 = arith.constant 0 : index
      %c0_94 = arith.constant 0 : index
      %c0_95 = arith.constant 0 : index
      %180 = vector.load %arg2[%c0_93, %c0_94, %c0_95] : memref<1x16x32xf32, #tpu.memory_space<vmem>>, vector<1x16x32xf32>
      %181 = vector.shape_cast %180 : vector<1x16x32xf32> to vector<16x32xf32>
      %c0_96 = arith.constant 0 : index
      %c0_97 = arith.constant 0 : index
      %182 = vector.load %arg6[%c0_96, %c0_97] : memref<3x32xf32, #tpu.memory_space<vmem>>, vector<1x32xf32>
      %c0_98 = arith.constant 0 : index
      %c0_99 = arith.constant 0 : index
      %183 = vector.load %arg7[%c0_98, %c0_99] : memref<3x32xf32, #tpu.memory_space<vmem>>, vector<1x32xf32>
      %cst_100 = arith.constant dense<0.000000e+00> : vector<16xf32>
      %184 = vector.multi_reduction <add>, %181, %cst_100 [1] : vector<16x32xf32> to vector<16xf32>
      %185 = vector.shape_cast %184 : vector<16xf32> to vector<16x1xf32>
      %cst_101 = arith.constant 3.200000e+01 : f32
      %186 = vector.broadcast %cst_101 : f32 to vector<16x1xf32>
      %187 = arith.divf %185, %186 : vector<16x1xf32>
      %188 = vector.broadcast %187 : vector<16x1xf32> to vector<16x32xf32>
      %189 = arith.subf %181, %188 : vector<16x32xf32>
      %190 = arith.mulf %189, %189 : vector<16x32xf32>
      %cst_102 = arith.constant dense<0.000000e+00> : vector<16xf32>
      %191 = vector.multi_reduction <add>, %190, %cst_102 [1] : vector<16x32xf32> to vector<16xf32>
      %192 = vector.shape_cast %191 : vector<16xf32> to vector<16x1xf32>
      %cst_103 = arith.constant 3.100000e+01 : f32
      %193 = vector.broadcast %cst_103 : f32 to vector<16x1xf32>
      %194 = arith.divf %192, %193 : vector<16x1xf32>
      %195 = vector.broadcast %187 : vector<16x1xf32> to vector<16x32xf32>
      %196 = arith.subf %181, %195 : vector<16x32xf32>
      %197 = vector.broadcast %182 : vector<1x32xf32> to vector<16x32xf32>
      %198 = arith.mulf %197, %196 : vector<16x32xf32>
      %199 = math.sqrt %194 : vector<16x1xf32>
      %cst_104 = arith.constant 9.99999997E-7 : f32
      %200 = vector.broadcast %cst_104 : f32 to vector<16x1xf32>
      %201 = arith.addf %199, %200 : vector<16x1xf32>
      %202 = vector.broadcast %201 : vector<16x1xf32> to vector<16x32xf32>
      %203 = arith.divf %198, %202 : vector<16x32xf32>
      %204 = vector.broadcast %183 : vector<1x32xf32> to vector<16x32xf32>
      %205 = arith.addf %203, %204 : vector<16x32xf32>
      %c1_105 = arith.constant 1 : index
      %c0_106 = arith.constant 0 : index
      %c0_107 = arith.constant 0 : index
      %206 = vector.load %arg8[%c1_105, %c0_106, %c0_107] : memref<8x32x32xf32, #tpu.memory_space<vmem>>, vector<1x32x32xf32>
      %207 = vector.shape_cast %206 : vector<1x32x32xf32> to vector<32x32xf32>
      %cst_108 = arith.constant dense<0.000000e+00> : vector<16x32xf32>
      %208 = tpu.matmul %205, %207, %cst_108 {dimension_numbers = #tpu.dot_dimension_numbers<[1], [0], [0], [1], [0, 0, 1, 1], [], []>} : vector<16x32xf32>, vector<32x32xf32>, vector<16x32xf32> -> vector<16x32xf32>
      %c1_109 = arith.constant 1 : index
      %c0_110 = arith.constant 0 : index
      %c0_111 = arith.constant 0 : index
      %209 = vector.load %arg9[%c1_109, %c0_110, %c0_111] : memref<8x1x32xf32, #tpu.memory_space<vmem>>, vector<1x1x32xf32>
      %210 = vector.shape_cast %209 : vector<1x1x32xf32> to vector<1x32xf32>
      %211 = vector.broadcast %210 : vector<1x32xf32> to vector<16x32xf32>
      %212 = arith.addf %208, %211 : vector<16x32xf32>
      %213 = vector.shape_cast %212 : vector<16x32xf32> to vector<16x4x8xf32>
      %214 = tpu.transpose %213, [1, 0, 2] : vector<16x4x8xf32> -> vector<4x16x8xf32>
      %c0_112 = arith.constant 0 : index
      %c0_113 = arith.constant 0 : index
      %c0_114 = arith.constant 0 : index
      %215 = vector.load %arg15[%c0_112, %c0_113, %c0_114] : memref<4x16x8xf32, #tpu.memory_space<vmem>>, vector<4x16x8xf32>
      tpu.vector_store %arg15[%c0_112, %c0_113, %c0_114], %214 {strides = array<i32>} : memref<4x16x8xf32, #tpu.memory_space<vmem>>, vector<4x16x8xf32>,
      %c2_115 = arith.constant 2 : index
      %c0_116 = arith.constant 0 : index
      %c0_117 = arith.constant 0 : index
      %216 = vector.load %arg8[%c2_115, %c0_116, %c0_117] : memref<8x32x32xf32, #tpu.memory_space<vmem>>, vector<1x32x32xf32>
      %217 = vector.shape_cast %216 : vector<1x32x32xf32> to vector<32x32xf32>
      %cst_118 = arith.constant dense<0.000000e+00> : vector<16x32xf32>
      %218 = tpu.matmul %205, %217, %cst_118 {dimension_numbers = #tpu.dot_dimension_numbers<[1], [0], [0], [1], [0, 0, 1, 1], [], []>} : vector<16x32xf32>, vector<32x32xf32>, vector<16x32xf32> -> vector<16x32xf32>
      %c2_119 = arith.constant 2 : index
      %c0_120 = arith.constant 0 : index
      %c0_121 = arith.constant 0 : index
      %219 = vector.load %arg9[%c2_119, %c0_120, %c0_121] : memref<8x1x32xf32, #tpu.memory_space<vmem>>, vector<1x1x32xf32>
      %220 = vector.shape_cast %219 : vector<1x1x32xf32> to vector<1x32xf32>
      %221 = vector.broadcast %220 : vector<1x32xf32> to vector<16x32xf32>
      %222 = arith.addf %218, %221 : vector<16x32xf32>
      %223 = vector.shape_cast %222 : vector<16x32xf32> to vector<16x4x8xf32>
      %224 = tpu.transpose %223, [1, 0, 2] : vector<16x4x8xf32> -> vector<4x16x8xf32>
      %c0_122 = arith.constant 0 : index
      %c0_123 = arith.constant 0 : index
      %c0_124 = arith.constant 0 : index
      %225 = vector.load %arg16[%c0_122, %c0_123, %c0_124] : memref<4x16x8xf32, #tpu.memory_space<vmem>>, vector<4x16x8xf32>
      tpu.vector_store %arg16[%c0_122, %c0_123, %c0_124], %224 {strides = array<i32>} : memref<4x16x8xf32, #tpu.memory_space<vmem>>, vector<4x16x8xf32>,
      %c0_125 = arith.constant 0 : index
      %c0_126 = arith.constant 0 : index
      %c0_127 = arith.constant 0 : index
      %226 = vector.load %arg3[%c0_125, %c0_126, %c0_127] : memref<1x8x32xf32, #tpu.memory_space<vmem>>, vector<1x8x32xf32>
      %227 = vector.shape_cast %226 : vector<1x8x32xf32> to vector<8x32xf32>
      %c5 = arith.constant 5 : index
      %c0_128 = arith.constant 0 : index
      %c0_129 = arith.constant 0 : index
      %228 = vector.load %arg8[%c5, %c0_128, %c0_129] : memref<8x32x32xf32, #tpu.memory_space<vmem>>, vector<1x32x32xf32>
      %229 = vector.shape_cast %228 : vector<1x32x32xf32> to vector<32x32xf32>
      %cst_130 = arith.constant dense<0.000000e+00> : vector<8x32xf32>
      %230 = tpu.matmul %227, %229, %cst_130 {dimension_numbers = #tpu.dot_dimension_numbers<[1], [0], [0], [1], [0, 0, 1, 1], [], []>} : vector<8x32xf32>, vector<32x32xf32>, vector<8x32xf32> -> vector<8x32xf32>
      %c5_131 = arith.constant 5 : index
      %c0_132 = arith.constant 0 : index
      %c0_133 = arith.constant 0 : index
      %231 = vector.load %arg9[%c5_131, %c0_132, %c0_133] : memref<8x1x32xf32, #tpu.memory_space<vmem>>, vector<1x1x32xf32>
      %232 = vector.shape_cast %231 : vector<1x1x32xf32> to vector<1x32xf32>
      %233 = vector.broadcast %232 : vector<1x32xf32> to vector<8x32xf32>
      %234 = arith.addf %230, %233 : vector<8x32xf32>
      %235 = vector.shape_cast %234 : vector<8x32xf32> to vector<8x4x8xf32>
      %236 = tpu.transpose %235, [1, 0, 2] : vector<8x4x8xf32> -> vector<4x8x8xf32>
      %c0_134 = arith.constant 0 : index
      %c0_135 = arith.constant 0 : index
      %c0_136 = arith.constant 0 : index
      %237 = vector.load %arg17[%c0_134, %c0_135, %c0_136] : memref<4x8x8xf32, #tpu.memory_space<vmem>>, vector<4x8x8xf32>
      tpu.vector_store %arg17[%c0_134, %c0_135, %c0_136], %236 {strides = array<i32>} : memref<4x8x8xf32, #tpu.memory_space<vmem>>, vector<4x8x8xf32>,
      %c6 = arith.constant 6 : index
      %c0_137 = arith.constant 0 : index
      %c0_138 = arith.constant 0 : index
      %238 = vector.load %arg8[%c6, %c0_137, %c0_138] : memref<8x32x32xf32, #tpu.memory_space<vmem>>, vector<1x32x32xf32>
      %239 = vector.shape_cast %238 : vector<1x32x32xf32> to vector<32x32xf32>
      %cst_139 = arith.constant dense<0.000000e+00> : vector<8x32xf32>
      %240 = tpu.matmul %227, %239, %cst_139 {dimension_numbers = #tpu.dot_dimension_numbers<[1], [0], [0], [1], [0, 0, 1, 1], [], []>} : vector<8x32xf32>, vector<32x32xf32>, vector<8x32xf32> -> vector<8x32xf32>
      %c6_140 = arith.constant 6 : index
      %c0_141 = arith.constant 0 : index
      %c0_142 = arith.constant 0 : index
      %241 = vector.load %arg9[%c6_140, %c0_141, %c0_142] : memref<8x1x32xf32, #tpu.memory_space<vmem>>, vector<1x1x32xf32>
      %242 = vector.shape_cast %241 : vector<1x1x32xf32> to vector<1x32xf32>
      %243 = vector.broadcast %242 : vector<1x32xf32> to vector<8x32xf32>
      %244 = arith.addf %240, %243 : vector<8x32xf32>
      %245 = vector.shape_cast %244 : vector<8x32xf32> to vector<8x4x8xf32>
      %246 = tpu.transpose %245, [1, 0, 2] : vector<8x4x8xf32> -> vector<4x8x8xf32>
      %c0_143 = arith.constant 0 : index
      %c0_144 = arith.constant 0 : index
      %c0_145 = arith.constant 0 : index
      %247 = vector.load %arg18[%c0_143, %c0_144, %c0_145] : memref<4x8x8xf32, #tpu.memory_space<vmem>>, vector<4x8x8xf32>
      tpu.vector_store %arg18[%c0_143, %c0_144, %c0_145], %246 {strides = array<i32>} : memref<4x8x8xf32, #tpu.memory_space<vmem>>, vector<4x8x8xf32>,
    } else {
    }
    %5 = tpu.iota {dimensions = array<i32: 0>} : vector<8x16xi32>
    %6 = vector.broadcast %1 : i32 to vector<8x16xi32>
    %7 = arith.addi %5, %6 : vector<8x16xi32>
    %8 = tpu.iota {dimensions = array<i32: 1>} : vector<8x16xi32>
    %9 = arith.cmpi sge, %7, %8 : vector<8x16xi32>
    %cst = arith.constant 0.000000e+00 : f32
    %cst_1 = arith.constant -1.000000e+09 : f32
    %10 = vector.broadcast %cst : f32 to vector<8x16xf32>
    %11 = vector.broadcast %cst_1 : f32 to vector<8x16xf32>
    %12 = arith.select %9, %10, %11 : vector<8x16xi1>, vector<8x16xf32>
    %c0 = arith.constant 0 : index
    %c0_2 = arith.constant 0 : index
    %c0_3 = arith.constant 0 : index
    %13 = vector.load %arg4[%c0, %c0_2, %c0_3] : memref<1x1x16xf32, #tpu.memory_space<vmem>>, vector<1x1x16xf32>
    %14 = vector.shape_cast %13 : vector<1x1x16xf32> to vector<1x16xf32>
    %15 = vector.broadcast %14 : vector<1x16xf32> to vector<8x16xf32>
    %16 = arith.addf %12, %15 : vector<8x16xf32>
    %c0_4 = arith.constant 0 : index
    %c0_5 = arith.constant 0 : index
    %c0_6 = arith.constant 0 : index
    %17 = vector.load %arg5[%c0_4, %c0_5, %c0_6] : memref<1x1x8xf32, #tpu.memory_space<vmem>>, vector<1x1x8xf32>
    %18 = vector.shape_cast %17 : vector<1x1x8xf32> to vector<1x8xf32>
    %c0_7 = arith.constant 0 : index
    %19 = arith.index_cast %1 : i32 to index
    %c0_8 = arith.constant 0 : index
    %20 = vector.load %arg2[%c0_7, %19, %c0_8] : memref<1x16x32xf32, #tpu.memory_space<vmem>>, vector<1x8x32xf32>
    %21 = vector.shape_cast %20 : vector<1x8x32xf32> to vector<8x32xf32>
    %c0_9 = arith.constant 0 : index
    %c0_10 = arith.constant 0 : index
    %22 = vector.load %arg6[%c0_9, %c0_10] : memref<3x32xf32, #tpu.memory_space<vmem>>, vector<1x32xf32>
    %c0_11 = arith.constant 0 : index
    %c0_12 = arith.constant 0 : index
    %23 = vector.load %arg7[%c0_11, %c0_12] : memref<3x32xf32, #tpu.memory_space<vmem>>, vector<1x32xf32>
    %cst_13 = arith.constant dense<0.000000e+00> : vector<8xf32>
    %24 = vector.multi_reduction <add>, %21, %cst_13 [1] : vector<8x32xf32> to vector<8xf32>
    %25 = vector.shape_cast %24 : vector<8xf32> to vector<8x1xf32>
    %cst_14 = arith.constant 3.200000e+01 : f32
    %26 = vector.broadcast %cst_14 : f32 to vector<8x1xf32>
    %27 = arith.divf %25, %26 : vector<8x1xf32>
    %28 = vector.broadcast %27 : vector<8x1xf32> to vector<8x32xf32>
    %29 = arith.subf %21, %28 : vector<8x32xf32>
    %30 = arith.mulf %29, %29 : vector<8x32xf32>
    %cst_15 = arith.constant dense<0.000000e+00> : vector<8xf32>
    %31 = vector.multi_reduction <add>, %30, %cst_15 [1] : vector<8x32xf32> to vector<8xf32>
    %32 = vector.shape_cast %31 : vector<8xf32> to vector<8x1xf32>
    %cst_16 = arith.constant 3.100000e+01 : f32
    %33 = vector.broadcast %cst_16 : f32 to vector<8x1xf32>
    %34 = arith.divf %32, %33 : vector<8x1xf32>
    %35 = vector.broadcast %27 : vector<8x1xf32> to vector<8x32xf32>
    %36 = arith.subf %21, %35 : vector<8x32xf32>
    %37 = vector.broadcast %22 : vector<1x32xf32> to vector<8x32xf32>
    %38 = arith.mulf %37, %36 : vector<8x32xf32>
    %39 = math.sqrt %34 : vector<8x1xf32>
    %cst_17 = arith.constant 9.99999997E-7 : f32
    %40 = vector.broadcast %cst_17 : f32 to vector<8x1xf32>
    %41 = arith.addf %39, %40 : vector<8x1xf32>
    %42 = vector.broadcast %41 : vector<8x1xf32> to vector<8x32xf32>
    %43 = arith.divf %38, %42 : vector<8x32xf32>
    %44 = vector.broadcast %23 : vector<1x32xf32> to vector<8x32xf32>
    %45 = arith.addf %43, %44 : vector<8x32xf32>
    %c0_18 = arith.constant 0 : index
    %c0_19 = arith.constant 0 : index
    %c0_20 = arith.constant 0 : index
    %46 = vector.load %arg8[%c0_18, %c0_19, %c0_20] : memref<8x32x32xf32, #tpu.memory_space<vmem>>, vector<1x32x32xf32>
    %47 = vector.shape_cast %46 : vector<1x32x32xf32> to vector<32x32xf32>
    %cst_21 = arith.constant dense<0.000000e+00> : vector<8x32xf32>
    %48 = tpu.matmul %45, %47, %cst_21 {dimension_numbers = #tpu.dot_dimension_numbers<[1], [0], [0], [1], [0, 0, 1, 1], [], []>} : vector<8x32xf32>, vector<32x32xf32>, vector<8x32xf32> -> vector<8x32xf32>
    %c0_22 = arith.constant 0 : index
    %c0_23 = arith.constant 0 : index
    %c0_24 = arith.constant 0 : index
    %49 = vector.load %arg9[%c0_22, %c0_23, %c0_24] : memref<8x1x32xf32, #tpu.memory_space<vmem>>, vector<1x1x32xf32>
    %50 = vector.shape_cast %49 : vector<1x1x32xf32> to vector<1x32xf32>
    %51 = vector.broadcast %50 : vector<1x32xf32> to vector<8x32xf32>
    %52 = arith.addf %48, %51 : vector<8x32xf32>
    %53 = vector.shape_cast %52 : vector<8x32xf32> to vector<8x4x8xf32>
    %54 = tpu.transpose %53, [1, 0, 2] : vector<8x4x8xf32> -> vector<4x8x8xf32>
    %c0_25 = arith.constant 0 : index
    %c0_26 = arith.constant 0 : index
    %c0_27 = arith.constant 0 : index
    %55 = vector.load %arg15[%c0_25, %c0_26, %c0_27] : memref<4x16x8xf32, #tpu.memory_space<vmem>>, vector<4x16x8xf32>
    %c0_28 = arith.constant 0 : index
    %c0_29 = arith.constant 0 : index
    %c0_30 = arith.constant 0 : index
    %56 = vector.load %arg16[%c0_28, %c0_29, %c0_30] : memref<4x16x8xf32, #tpu.memory_space<vmem>>, vector<4x16x8xf32>
    "tpu.trace_start"() <{level = 10 : i32, message = "hqk,hsk->hqs"}> : () -> ()
    %cst_31 = arith.constant dense<0.000000e+00> : vector<4x8x16xf32>
    %57 = tpu.matmul %54, %55, %cst_31 {dimension_numbers = #tpu.dot_dimension_numbers<[2], [2], [1], [1], [0, 0, 0, 1, 1, 1], [0], [0]>} : vector<4x8x8xf32>, vector<4x16x8xf32>, vector<4x8x16xf32> -> vector<4x8x16xf32>
    "tpu.trace_stop"() : () -> ()
    %58 = vector.shape_cast %16 : vector<8x16xf32> to vector<1x8x16xf32>
    %59 = vector.broadcast %58 : vector<1x8x16xf32> to vector<4x8x16xf32>
    %60 = arith.addf %57, %59 : vector<4x8x16xf32>
    %cst_32 = arith.constant dense<0xFF800000> : vector<4x8xf32>
    %61 = vector.multi_reduction <maximumf>, %60, %cst_32 [2] : vector<4x8x16xf32> to vector<4x8xf32>
    %62 = vector.shape_cast %61 : vector<4x8xf32> to vector<4x8x1xf32>
    %63 = vector.broadcast %62 : vector<4x8x1xf32> to vector<4x8x16xf32>
    %64 = arith.subf %60, %63 : vector<4x8x16xf32>
    %65 = math.exp %64 : vector<4x8x16xf32>
    %cst_33 = arith.constant dense<0.000000e+00> : vector<4x8xf32>
    %66 = vector.multi_reduction <add>, %65, %cst_33 [2] : vector<4x8x16xf32> to vector<4x8xf32>
    %67 = vector.shape_cast %66 : vector<4x8xf32> to vector<4x8x1xf32>
    %68 = vector.broadcast %67 : vector<4x8x1xf32> to vector<4x8x16xf32>
    %69 = arith.divf %65, %68 : vector<4x8x16xf32>
    "tpu.trace_start"() <{level = 10 : i32, message = "hqs,hsk->hqk"}> : () -> ()
    %cst_34 = arith.constant dense<0.000000e+00> : vector<4x8x8xf32>
    %70 = tpu.matmul %69, %56, %cst_34 {dimension_numbers = #tpu.dot_dimension_numbers<[2], [1], [1], [2], [0, 0, 0, 1, 1, 2], [0], [0]>} : vector<4x8x16xf32>, vector<4x16x8xf32>, vector<4x8x8xf32> -> vector<4x8x8xf32>
    "tpu.trace_stop"() : () -> ()
    %71 = tpu.transpose %70, [1, 0, 2] : vector<4x8x8xf32> -> vector<8x4x8xf32>
    %72 = vector.shape_cast %71 : vector<8x4x8xf32> to vector<8x32xf32>
    %c3 = arith.constant 3 : index
    %c0_35 = arith.constant 0 : index
    %c0_36 = arith.constant 0 : index
    %73 = vector.load %arg8[%c3, %c0_35, %c0_36] : memref<8x32x32xf32, #tpu.memory_space<vmem>>, vector<1x32x32xf32>
    %74 = vector.shape_cast %73 : vector<1x32x32xf32> to vector<32x32xf32>
    %cst_37 = arith.constant dense<0.000000e+00> : vector<8x32xf32>
    %75 = tpu.matmul %72, %74, %cst_37 {dimension_numbers = #tpu.dot_dimension_numbers<[1], [0], [0], [1], [0, 0, 1, 1], [], []>} : vector<8x32xf32>, vector<32x32xf32>, vector<8x32xf32> -> vector<8x32xf32>
    %c3_38 = arith.constant 3 : index
    %c0_39 = arith.constant 0 : index
    %c0_40 = arith.constant 0 : index
    %76 = vector.load %arg9[%c3_38, %c0_39, %c0_40] : memref<8x1x32xf32, #tpu.memory_space<vmem>>, vector<1x1x32xf32>
    %77 = vector.shape_cast %76 : vector<1x1x32xf32> to vector<1x32xf32>
    %78 = vector.broadcast %77 : vector<1x32xf32> to vector<8x32xf32>
    %79 = arith.addf %75, %78 : vector<8x32xf32>
    %80 = arith.addf %21, %79 : vector<8x32xf32>
    %c1 = arith.constant 1 : index
    %c0_41 = arith.constant 0 : index
    %81 = vector.load %arg6[%c1, %c0_41] : memref<3x32xf32, #tpu.memory_space<vmem>>, vector<1x32xf32>
    %c1_42 = arith.constant 1 : index
    %c0_43 = arith.constant 0 : index
    %82 = vector.load %arg7[%c1_42, %c0_43] : memref<3x32xf32, #tpu.memory_space<vmem>>, vector<1x32xf32>
    %cst_44 = arith.constant dense<0.000000e+00> : vector<8xf32>
    %83 = vector.multi_reduction <add>, %80, %cst_44 [1] : vector<8x32xf32> to vector<8xf32>
    %84 = vector.shape_cast %83 : vector<8xf32> to vector<8x1xf32>
    %cst_45 = arith.constant 3.200000e+01 : f32
    %85 = vector.broadcast %cst_45 : f32 to vector<8x1xf32>
    %86 = arith.divf %84, %85 : vector<8x1xf32>
    %87 = vector.broadcast %86 : vector<8x1xf32> to vector<8x32xf32>
    %88 = arith.subf %80, %87 : vector<8x32xf32>
    %89 = arith.mulf %88, %88 : vector<8x32xf32>
    %cst_46 = arith.constant dense<0.000000e+00> : vector<8xf32>
    %90 = vector.multi_reduction <add>, %89, %cst_46 [1] : vector<8x32xf32> to vector<8xf32>
    %91 = vector.shape_cast %90 : vector<8xf32> to vector<8x1xf32>
    %cst_47 = arith.constant 3.100000e+01 : f32
    %92 = vector.broadcast %cst_47 : f32 to vector<8x1xf32>
    %93 = arith.divf %91, %92 : vector<8x1xf32>
    %94 = vector.broadcast %86 : vector<8x1xf32> to vector<8x32xf32>
    %95 = arith.subf %80, %94 : vector<8x32xf32>
    %96 = vector.broadcast %81 : vector<1x32xf32> to vector<8x32xf32>
    %97 = arith.mulf %96, %95 : vector<8x32xf32>
    %98 = math.sqrt %93 : vector<8x1xf32>
    %cst_48 = arith.constant 9.99999997E-7 : f32
    %99 = vector.broadcast %cst_48 : f32 to vector<8x1xf32>
    %100 = arith.addf %98, %99 : vector<8x1xf32>
    %101 = vector.broadcast %100 : vector<8x1xf32> to vector<8x32xf32>
    %102 = arith.divf %97, %101 : vector<8x32xf32>
    %103 = vector.broadcast %82 : vector<1x32xf32> to vector<8x32xf32>
    %104 = arith.addf %102, %103 : vector<8x32xf32>
    %c4 = arith.constant 4 : index
    %c0_49 = arith.constant 0 : index
    %c0_50 = arith.constant 0 : index
    %105 = vector.load %arg8[%c4, %c0_49, %c0_50] : memref<8x32x32xf32, #tpu.memory_space<vmem>>, vector<1x32x32xf32>
    %106 = vector.shape_cast %105 : vector<1x32x32xf32> to vector<32x32xf32>
    %cst_51 = arith.constant dense<0.000000e+00> : vector<8x32xf32>
    %107 = tpu.matmul %104, %106, %cst_51 {dimension_numbers = #tpu.dot_dimension_numbers<[1], [0], [0], [1], [0, 0, 1, 1], [], []>} : vector<8x32xf32>, vector<32x32xf32>, vector<8x32xf32> -> vector<8x32xf32>
    %c4_52 = arith.constant 4 : index
    %c0_53 = arith.constant 0 : index
    %c0_54 = arith.constant 0 : index
    %108 = vector.load %arg9[%c4_52, %c0_53, %c0_54] : memref<8x1x32xf32, #tpu.memory_space<vmem>>, vector<1x1x32xf32>
    %109 = vector.shape_cast %108 : vector<1x1x32xf32> to vector<1x32xf32>
    %110 = vector.broadcast %109 : vector<1x32xf32> to vector<8x32xf32>
    %111 = arith.addf %107, %110 : vector<8x32xf32>
    %112 = vector.shape_cast %111 : vector<8x32xf32> to vector<8x4x8xf32>
    %113 = tpu.transpose %112, [1, 0, 2] : vector<8x4x8xf32> -> vector<4x8x8xf32>
    %c0_55 = arith.constant 0 : index
    %c0_56 = arith.constant 0 : index
    %c0_57 = arith.constant 0 : index
    %114 = vector.load %arg17[%c0_55, %c0_56, %c0_57] : memref<4x8x8xf32, #tpu.memory_space<vmem>>, vector<4x8x8xf32>
    %c0_58 = arith.constant 0 : index
    %c0_59 = arith.constant 0 : index
    %c0_60 = arith.constant 0 : index
    %115 = vector.load %arg18[%c0_58, %c0_59, %c0_60] : memref<4x8x8xf32, #tpu.memory_space<vmem>>, vector<4x8x8xf32>
    "tpu.trace_start"() <{level = 10 : i32, message = "hqk,hsk->hqs"}> : () -> ()
    %cst_61 = arith.constant dense<0.000000e+00> : vector<4x8x8xf32>
    %116 = tpu.matmul %113, %114, %cst_61 {dimension_numbers = #tpu.dot_dimension_numbers<[2], [2], [1], [1], [0, 0, 0, 1, 1, 1], [0], [0]>} : vector<4x8x8xf32>, vector<4x8x8xf32>, vector<4x8x8xf32> -> vector<4x8x8xf32>
    "tpu.trace_stop"() : () -> ()
    %117 = vector.shape_cast %18 : vector<1x8xf32> to vector<1x1x8xf32>
    %118 = vector.broadcast %117 : vector<1x1x8xf32> to vector<4x8x8xf32>
    %119 = arith.addf %116, %118 : vector<4x8x8xf32>
    %cst_62 = arith.constant dense<0xFF800000> : vector<4x8xf32>
    %120 = vector.multi_reduction <maximumf>, %119, %cst_62 [2] : vector<4x8x8xf32> to vector<4x8xf32>
    %121 = vector.shape_cast %120 : vector<4x8xf32> to vector<4x8x1xf32>
    %122 = vector.broadcast %121 : vector<4x8x1xf32> to vector<4x8x8xf32>
    %123 = arith.subf %119, %122 : vector<4x8x8xf32>
    %124 = math.exp %123 : vector<4x8x8xf32>
    %cst_63 = arith.constant dense<0.000000e+00> : vector<4x8xf32>
    %125 = vector.multi_reduction <add>, %124, %cst_63 [2] : vector<4x8x8xf32> to vector<4x8xf32>
    %126 = vector.shape_cast %125 : vector<4x8xf32> to vector<4x8x1xf32>
    %127 = vector.broadcast %126 : vector<4x8x1xf32> to vector<4x8x8xf32>
    %128 = arith.divf %124, %127 : vector<4x8x8xf32>
    "tpu.trace_start"() <{level = 10 : i32, message = "hqs,hsk->hqk"}> : () -> ()
    %cst_64 = arith.constant dense<0.000000e+00> : vector<4x8x8xf32>
    %129 = tpu.matmul %128, %115, %cst_64 {dimension_numbers = #tpu.dot_dimension_numbers<[2], [1], [1], [2], [0, 0, 0, 1, 1, 2], [0], [0]>} : vector<4x8x8xf32>, vector<4x8x8xf32>, vector<4x8x8xf32> -> vector<4x8x8xf32>
    "tpu.trace_stop"() : () -> ()
    %130 = tpu.transpose %129, [1, 0, 2] : vector<4x8x8xf32> -> vector<8x4x8xf32>
    %131 = vector.shape_cast %130 : vector<8x4x8xf32> to vector<8x32xf32>
    %c7 = arith.constant 7 : index
    %c0_65 = arith.constant 0 : index
    %c0_66 = arith.constant 0 : index
    %132 = vector.load %arg8[%c7, %c0_65, %c0_66] : memref<8x32x32xf32, #tpu.memory_space<vmem>>, vector<1x32x32xf32>
    %133 = vector.shape_cast %132 : vector<1x32x32xf32> to vector<32x32xf32>
    %cst_67 = arith.constant dense<0.000000e+00> : vector<8x32xf32>
    %134 = tpu.matmul %131, %133, %cst_67 {dimension_numbers = #tpu.dot_dimension_numbers<[1], [0], [0], [1], [0, 0, 1, 1], [], []>} : vector<8x32xf32>, vector<32x32xf32>, vector<8x32xf32> -> vector<8x32xf32>
    %c7_68 = arith.constant 7 : index
    %c0_69 = arith.constant 0 : index
    %c0_70 = arith.constant 0 : index
    %135 = vector.load %arg9[%c7_68, %c0_69, %c0_70] : memref<8x1x32xf32, #tpu.memory_space<vmem>>, vector<1x1x32xf32>
    %136 = vector.shape_cast %135 : vector<1x1x32xf32> to vector<1x32xf32>
    %137 = vector.broadcast %136 : vector<1x32xf32> to vector<8x32xf32>
    %138 = arith.addf %134, %137 : vector<8x32xf32>
    %139 = arith.addf %80, %138 : vector<8x32xf32>
    %c2 = arith.constant 2 : index
    %c0_71 = arith.constant 0 : index
    %140 = vector.load %arg6[%c2, %c0_71] : memref<3x32xf32, #tpu.memory_space<vmem>>, vector<1x32xf32>
    %c2_72 = arith.constant 2 : index
    %c0_73 = arith.constant 0 : index
    %141 = vector.load %arg7[%c2_72, %c0_73] : memref<3x32xf32, #tpu.memory_space<vmem>>, vector<1x32xf32>
    %cst_74 = arith.constant dense<0.000000e+00> : vector<8xf32>
    %142 = vector.multi_reduction <add>, %139, %cst_74 [1] : vector<8x32xf32> to vector<8xf32>
    %143 = vector.shape_cast %142 : vector<8xf32> to vector<8x1xf32>
    %cst_75 = arith.constant 3.200000e+01 : f32
    %144 = vector.broadcast %cst_75 : f32 to vector<8x1xf32>
    %145 = arith.divf %143, %144 : vector<8x1xf32>
    %146 = vector.broadcast %145 : vector<8x1xf32> to vector<8x32xf32>
    %147 = arith.subf %139, %146 : vector<8x32xf32>
    %148 = arith.mulf %147, %147 : vector<8x32xf32>
    %cst_76 = arith.constant dense<0.000000e+00> : vector<8xf32>
    %149 = vector.multi_reduction <add>, %148, %cst_76 [1] : vector<8x32xf32> to vector<8xf32>
    %150 = vector.shape_cast %149 : vector<8xf32> to vector<8x1xf32>
    %cst_77 = arith.constant 3.100000e+01 : f32
    %151 = vector.broadcast %cst_77 : f32 to vector<8x1xf32>
    %152 = arith.divf %150, %151 : vector<8x1xf32>
    %153 = vector.broadcast %145 : vector<8x1xf32> to vector<8x32xf32>
    %154 = arith.subf %139, %153 : vector<8x32xf32>
    %155 = vector.broadcast %140 : vector<1x32xf32> to vector<8x32xf32>
    %156 = arith.mulf %155, %154 : vector<8x32xf32>
    %157 = math.sqrt %152 : vector<8x1xf32>
    %cst_78 = arith.constant 9.99999997E-7 : f32
    %158 = vector.broadcast %cst_78 : f32 to vector<8x1xf32>
    %159 = arith.addf %157, %158 : vector<8x1xf32>
    %160 = vector.broadcast %159 : vector<8x1xf32> to vector<8x32xf32>
    %161 = arith.divf %156, %160 : vector<8x32xf32>
    %162 = vector.broadcast %141 : vector<1x32xf32> to vector<8x32xf32>
    %163 = arith.addf %161, %162 : vector<8x32xf32>
    %c0_79 = arith.constant 0 : index
    %c0_80 = arith.constant 0 : index
    %164 = vector.load %arg10[%c0_79, %c0_80] : memref<32x64xf32, #tpu.memory_space<vmem>>, vector<32x64xf32>
    %cst_81 = arith.constant dense<0.000000e+00> : vector<8x64xf32>
    %165 = tpu.matmul %163, %164, %cst_81 {dimension_numbers = #tpu.dot_dimension_numbers<[1], [0], [0], [1], [0, 0, 1, 1], [], []>} : vector<8x32xf32>, vector<32x64xf32>, vector<8x64xf32> -> vector<8x64xf32>
    %c0_82 = arith.constant 0 : index
    %c0_83 = arith.constant 0 : index
    %166 = vector.load %arg11[%c0_82, %c0_83] : memref<1x64xf32, #tpu.memory_space<vmem>>, vector<1x64xf32>
    %167 = vector.broadcast %166 : vector<1x64xf32> to vector<8x64xf32>
    %168 = arith.addf %165, %167 : vector<8x64xf32>
    %cst_84 = arith.constant 0.000000e+00 : f32
    %169 = vector.broadcast %cst_84 : f32 to vector<8x64xf32>
    %170 = arith.maximumf %168, %169 : vector<8x64xf32>
    %c0_85 = arith.constant 0 : index
    %c0_86 = arith.constant 0 : index
    %171 = vector.load %arg12[%c0_85, %c0_86] : memref<64x32xf32, #tpu.memory_space<vmem>>, vector<64x32xf32>
    %cst_87 = arith.constant dense<0.000000e+00> : vector<8x32xf32>
    %172 = tpu.matmul %170, %171, %cst_87 {dimension_numbers = #tpu.dot_dimension_numbers<[1], [0], [0], [1], [0, 0, 1, 1], [], []>} : vector<8x64xf32>, vector<64x32xf32>, vector<8x32xf32> -> vector<8x32xf32>
    %173 = arith.addf %139, %172 : vector<8x32xf32>
    %c0_88 = arith.constant 0 : index
    %c0_89 = arith.constant 0 : index
    %174 = vector.load %arg13[%c0_88, %c0_89] : memref<1x32xf32, #tpu.memory_space<vmem>>, vector<1x32xf32>
    %175 = vector.broadcast %174 : vector<1x32xf32> to vector<8x32xf32>
    %176 = arith.addf %173, %175 : vector<8x32xf32>
    %c0_90 = arith.constant 0 : index
    %c0_91 = arith.constant 0 : index
    %c0_92 = arith.constant 0 : index
    %177 = vector.load %arg14[%c0_90, %c0_91, %c0_92] : memref<1x8x32xf32, #tpu.memory_space<vmem>>, vector<1x8x32xf32>
    %178 = vector.shape_cast %177 : vector<1x8x32xf32> to vector<8x32xf32>
    %179 = vector.shape_cast %176 : vector<8x32xf32> to vector<1x8x32xf32>
    tpu.vector_store %arg14[%c0_90, %c0_91, %c0_92], %179 {strides = array<i32>} : memref<1x8x32xf32, #tpu.memory_space<vmem>>, vector<1x8x32xf32>,
    return
  }
  func.func @transform_0(%arg0: i32, %arg1: i32) -> (i32, i32, i32) {
    %c0_i32 = arith.constant 0 : i32
    %c0_i32_0 = arith.constant 0 : i32
    %c0_i32_1 = arith.constant 0 : i32
    return %arg0, %c0_i32, %c0_i32_0 : i32, i32, i32
  }
  func.func @transform_1(%arg0: i32, %arg1: i32) -> (i32, i32, i32) {
    %c0_i32 = arith.constant 0 : i32
    %c0_i32_0 = arith.constant 0 : i32
    %c0_i32_1 = arith.constant 0 : i32
    return %arg0, %c0_i32, %c0_i32_0 : i32, i32, i32
  }
  func.func @transform_2(%arg0: i32, %arg1: i32) -> (i32, i32, i32) {
    %c0_i32 = arith.constant 0 : i32
    %c0_i32_0 = arith.constant 0 : i32
    %c0_i32_1 = arith.constant 0 : i32
    return %arg0, %c0_i32, %c0_i32_0 : i32, i32, i32
  }
  func.func @transform_3(%arg0: i32, %arg1: i32) -> (i32, i32, i32) {
    %c0_i32 = arith.constant 0 : i32
    %c0_i32_0 = arith.constant 0 : i32
    %c0_i32_1 = arith.constant 0 : i32
    return %arg0, %c0_i32, %c0_i32_0 : i32, i32, i32
  }
  func.func @transform_4(%arg0: i32, %arg1: i32) -> (i32, i32) {
    %c0_i32 = arith.constant 0 : i32
    %c0_i32_0 = arith.constant 0 : i32
    %c0_i32_1 = arith.constant 0 : i32
    return %c0_i32, %c0_i32_0 : i32, i32
  }
  func.func @transform_5(%arg0: i32, %arg1: i32) -> (i32, i32) {
    %c0_i32 = arith.constant 0 : i32
    %c0_i32_0 = arith.constant 0 : i32
    %c0_i32_1 = arith.constant 0 : i32
    return %c0_i32, %c0_i32_0 : i32, i32
  }
  func.func @transform_6(%arg0: i32, %arg1: i32) -> (i32, i32, i32) {
    %c0_i32 = arith.constant 0 : i32
    %c0_i32_0 = arith.constant 0 : i32
    %c0_i32_1 = arith.constant 0 : i32
    %c0_i32_2 = arith.constant 0 : i32
    return %c0_i32, %c0_i32_0, %c0_i32_1 : i32, i32, i32
  }
  func.func @transform_7(%arg0: i32, %arg1: i32) -> (i32, i32, i32) {
    %c0_i32 = arith.constant 0 : i32
    %c0_i32_0 = arith.constant 0 : i32
    %c0_i32_1 = arith.constant 0 : i32
    %c0_i32_2 = arith.constant 0 : i32
    return %c0_i32, %c0_i32_0, %c0_i32_1 : i32, i32, i32
  }
  func.func @transform_8(%arg0: i32, %arg1: i32) -> (i32, i32) {
    %c0_i32 = arith.constant 0 : i32
    %c0_i32_0 = arith.constant 0 : i32
    %c0_i32_1 = arith.constant 0 : i32
    return %c0_i32, %c0_i32_0 : i32, i32
  }
  func.func @transform_9(%arg0: i32, %arg1: i32) -> (i32, i32) {
    %c0_i32 = arith.constant 0 : i32
    %c0_i32_0 = arith.constant 0 : i32
    %c0_i32_1 = arith.constant 0 : i32
    return %c0_i32, %c0_i32_0 : i32, i32
  }
  func.func @transform_10(%arg0: i32, %arg1: i32) -> (i32, i32) {
    %c0_i32 = arith.constant 0 : i32
    %c0_i32_0 = arith.constant 0 : i32
    %c0_i32_1 = arith.constant 0 : i32
    return %c0_i32, %c0_i32_0 : i32, i32
  }
  func.func @transform_11(%arg0: i32, %arg1: i32) -> (i32, i32) {
    %c0_i32 = arith.constant 0 : i32
    %c0_i32_0 = arith.constant 0 : i32
    %c0_i32_1 = arith.constant 0 : i32
    return %c0_i32, %c0_i32_0 : i32, i32
  }
  func.func @transform_12(%arg0: i32, %arg1: i32) -> (i32, i32, i32) {
    %c0_i32 = arith.constant 0 : i32
    %c0_i32_0 = arith.constant 0 : i32
    return %arg0, %arg1, %c0_i32 : i32, i32, i32
  }
}

</mosaic_0001>

<llo_original>
// kernel: tpu_custom_call.1
$region0: #{tpu_custom_call.1}
  #allocation0 [shape = 'u32[]', space=smem, size = 0x4, offset = 0x4, fixed_abs, tag = 'smem constant byte address 0x4 - core index']
  #allocation1 [shape = 'u32[144,128]{1,0:T(1,128)}', space=vmem, size = 0x12000, scoped, tag = 'internal scratch']
  #allocation2 [shape = 'f32[4,16,8]{2,1,0:T(8,128)}', space=vmem, size = 0x8000, scoped, tag = 'scratch operand']
  #allocation3 [shape = 'f32[4,16,8]{2,1,0:T(8,128)}', space=vmem, size = 0x8000, scoped, tag = 'scratch operand']
  #allocation4 [shape = 'f32[4,8,8]{2,1,0:T(8,128)}', space=vmem, size = 0x4000, scoped, tag = 'scratch operand']
  #allocation5 [shape = 'f32[4,8,8]{2,1,0:T(8,128)}', space=vmem, size = 0x4000, scoped, tag = 'scratch operand']
  %s0 = inlined_call_operand.vmem [shape: f32[2,16,32], index: 0, kind: input, shape index: {}]
  %s1 = inlined_call_operand.vmem [shape: f32[2,8,32], index: 1, kind: input, shape index: {}]
  %s2 = inlined_call_operand.vmem [shape: f32[2,1,16], index: 2, kind: input, shape index: {}]
  %s3 = inlined_call_operand.vmem [shape: f32[2,1,8], index: 3, kind: input, shape index: {}]
  %s4 = inlined_call_operand.vmem [shape: f32[3,32], index: 4, kind: input, shape index: {}]
  %s5 = inlined_call_operand.vmem [shape: f32[3,32], index: 5, kind: input, shape index: {}]
  %s6 = inlined_call_operand.hbm [shape: f32[8,32,32], index: 6, kind: input, shape index: {}]
  %s7 = inlined_call_operand.vmem [shape: f32[8,1,32], index: 7, kind: input, shape index: {}]
  %s8 = inlined_call_operand.vmem [shape: f32[32,64], index: 8, kind: input, shape index: {}]
  %s9 = inlined_call_operand.vmem [shape: f32[1,64], index: 9, kind: input, shape index: {}]
  %s10 = inlined_call_operand.vmem [shape: f32[64,32], index: 10, kind: input, shape index: {}]
  %s11 = inlined_call_operand.vmem [shape: f32[1,32], index: 11, kind: input, shape index: {}]
  %s12 = inlined_call_operand.hbm [shape: f32[2,16,32], index: 12, kind: output, shape index: {}]
  %s13 = sld [smem:[#allocation0]]
  $region89: #{tpu_custom_call.1} parent=0
    _
  %s15 = ssub.s32 1, %s13
  %s16 = scalar_select 0, %s15, %s13
  $region1: #{tpu_custom_call.1} parent=0
    #allocation6 [shape = 'u8[131072]{0}', space=vmem, size = 0x20000, scoped, tag = 'input window, operand 6, single buffered']
    #allocation7 [shape = 's32[2]{0}', space=sflag, size = 0x8, scoped, tag = 'scoped memory for tpu_custom_call.1']
    #allocation8 [shape = 's32[2]{0}', space=sflag, size = 0x8, scoped, tag = 'scoped memory for tpu_custom_call.1']
    #allocation9 [shape = 'u8[8192]{0}', space=vmem, size = 0x2000, scoped, tag = 'output window, operand 0']
    %17 = vsyncpa [#allocation7], 0
    %18 = vsyncpa [#allocation8], 0
    %s19 = scalar_lea.sflag [#allocation8], 1
    %20 = vsyncpa %s19, 0
    loop: start=0, step=1, limit=6
    $region2: #{tpu_custom_call.1} parent=1 // loop_pre_header
      _
    $region3: #{tpu_custom_call.1} parent=1 // loop_header
      %s22 = sphi 0, %s26
      %p23 = scmp.ge.s32.totalorder %s22, 6
      %s29 = sphi 0, %s41
      %s30 = sphi 0, %s37
      %s31 = sphi 0, %s29
      %s32 = sphi 0, %s30
      %s33 = sphi 0, %s31
      %s34 = sphi 0, %s32
      %s44 = sphi 0, %s46
      %s47 = sphi 0, %s44
      %s48 = sphi 0, %s47
      %s64 = sphi 0, %s48
      %s70 = sphi 0, %s72
      %s73 = sphi 0, %s70
      %s74 = sphi 0, %s73
      %s90 = sphi 0, %s74
      %s96 = sphi 0, %s98
      %s99 = sphi 0, %s96
      %s100 = sphi 0, %s99
      %s116 = sphi 0, %s100
      %s122 = sphi 0, %s124
      %s125 = sphi 0, %s122
      %s126 = sphi 0, %s125
      %s142 = sphi 0, %s126
      %s146 = sphi 0, %s146
      %s148 = sphi 0, %s146
      %s149 = sphi 0, %s148
      %s163 = sphi 0, %s149
      %s167 = sphi 0, %s167
      %s169 = sphi 0, %s167
      %s170 = sphi 0, %s169
      %s184 = sphi 0, %s170
      %s188 = sphi 0, %s188
      %s190 = sphi 0, %s188
      %s191 = sphi 0, %s190
      %s205 = sphi 0, %s191
      %s209 = sphi 0, %s209
      %s211 = sphi 0, %s209
      %s212 = sphi 0, %s211
      %s226 = sphi 0, %s212
      %s230 = sphi 0, %s230
      %s232 = sphi 0, %s230
      %s233 = sphi 0, %s232
      %s247 = sphi 0, %s233
      %s251 = sphi 0, %s251
      %s253 = sphi 0, %s251
      %s254 = sphi 0, %s253
      %s268 = sphi 0, %s254
      %s272 = sphi 0, %s272
      %s274 = sphi 0, %s272
      %s275 = sphi 0, %s274
      %s289 = sphi 0, %s275
      %s293 = sphi 0, %s293
      %s295 = sphi 0, %s293
      %s296 = sphi 0, %s295
      %s310 = sphi 0, %s296
      %s318 = sphi 0, %s320
      %s321 = sphi 0, %s318
      %s322 = sphi 0, %s321
      %s338 = sphi 0, %s322
    $region4: #{tpu_custom_call.1} parent=1 // loop_header_branch
      %25 = sbr.rel (%p23) target = $region8
    $region5: #{tpu_custom_call.1} parent=1 // loop_body
      %s27 = ssub.s32 %s22, 1
      %s28 = ssub.s32 %s22, 2
      %s35 = sadd.s32 1, %s30
      %p36 = scmp.ge.s32.totalorder %s35, 2
      %s37 = scalar_select %p36, 0, %s35
      %s38 = sadd.s32 1, %s29
      %s39 = scalar_select %p36, %s38, %s29
      %p40 = scmp.ge.s32.totalorder %s39, 2
      %s41 = scalar_select %p40, 0, %s39
      %s42 = ssub.s32 %s29, %s41
      %p43 = scmp.eq.s32.totalorder %s42, 0
      %s45 = sadd.s32 %s44, 1
      %s46 = scalar_select %p43, %s44, %s45
      %p49 = pneg %p43
      %p50 = scmp.eq.s32.totalorder %s22, 3
      %p51 = por %p49, %p50
      %p52 = scmp.ne.s32.totalorder %s44, %s47
      %p53 = scmp.eq.s32.totalorder %s22, 0
      %p54 = por %p52, %p53
      %p55 = scmp.ne.s32.totalorder %s44, %s47
      %p56 = scmp.eq.s32.totalorder %s27, 3
      %p57 = por %p55, %p56
      %p58 = scmp.ne.s32.totalorder %s47, %s48
      %p59 = scmp.eq.s32.totalorder %s27, 0
      %p60 = por %p58, %p59
      %p61 = scmp.ne.s32.totalorder %s47, %s48
      %p62 = scmp.eq.s32.totalorder %s28, 3
      %p63 = por %p61, %p62
      %p65 = scmp.ne.s32.totalorder %s48, %s64
      %p66 = scmp.eq.s32.totalorder %s28, 0
      %p67 = por %p65, %p66
      %s68 = ssub.s32 %s29, %s41
      %p69 = scmp.eq.s32.totalorder %s68, 0
      %s71 = sadd.s32 %s70, 1
      %s72 = scalar_select %p69, %s70, %s71
      %p75 = pneg %p69
      %p76 = scmp.eq.s32.totalorder %s22, 3
      %p77 = por %p75, %p76
      %p78 = scmp.ne.s32.totalorder %s70, %s73
      %p79 = scmp.eq.s32.totalorder %s22, 0
      %p80 = por %p78, %p79
      %p81 = scmp.ne.s32.totalorder %s70, %s73
      %p82 = scmp.eq.s32.totalorder %s27, 3
      %p83 = por %p81, %p82
      %p84 = scmp.ne.s32.totalorder %s73, %s74
      %p85 = scmp.eq.s32.totalorder %s27, 0
      %p86 = por %p84, %p85
      %p87 = scmp.ne.s32.totalorder %s73, %s74
      %p88 = scmp.eq.s32.totalorder %s28, 3
      %p89 = por %p87, %p88
      %p91 = scmp.ne.s32.totalorder %s74, %s90
      %p92 = scmp.eq.s32.totalorder %s28, 0
      %p93 = por %p91, %p92
      %s94 = ssub.s32 %s29, %s41
      %p95 = scmp.eq.s32.totalorder %s94, 0
      %s97 = sadd.s32 %s96, 1
      %s98 = scalar_select %p95, %s96, %s97
      %p101 = pneg %p95
      %p102 = scmp.eq.s32.totalorder %s22, 3
      %p103 = por %p101, %p102
      %p104 = scmp.ne.s32.totalorder %s96, %s99
      %p105 = scmp.eq.s32.totalorder %s22, 0
      %p106 = por %p104, %p105
      %p107 = scmp.ne.s32.totalorder %s96, %s99
      %p108 = scmp.eq.s32.totalorder %s27, 3
      %p109 = por %p107, %p108
      %p110 = scmp.ne.s32.totalorder %s99, %s100
      %p111 = scmp.eq.s32.totalorder %s27, 0
      %p112 = por %p110, %p111
      %p113 = scmp.ne.s32.totalorder %s99, %s100
      %p114 = scmp.eq.s32.totalorder %s28, 3
      %p115 = por %p113, %p114
      %p117 = scmp.ne.s32.totalorder %s100, %s116
      %p118 = scmp.eq.s32.totalorder %s28, 0
      %p119 = por %p117, %p118
      %s120 = ssub.s32 %s29, %s41
      %p121 = scmp.eq.s32.totalorder %s120, 0
      %s123 = sadd.s32 %s122, 1
      %s124 = scalar_select %p121, %s122, %s123
      %p127 = pneg %p121
      %p128 = scmp.eq.s32.totalorder %s22, 3
      %p129 = por %p127, %p128
      %p130 = scmp.ne.s32.totalorder %s122, %s125
      %p131 = scmp.eq.s32.totalorder %s22, 0
      %p132 = por %p130, %p131
      %p133 = scmp.ne.s32.totalorder %s122, %s125
      %p134 = scmp.eq.s32.totalorder %s27, 3
      %p135 = por %p133, %p134
      %p136 = scmp.ne.s32.totalorder %s125, %s126
      %p137 = scmp.eq.s32.totalorder %s27, 0
      %p138 = por %p136, %p137
      %p139 = scmp.ne.s32.totalorder %s125, %s126
      %p140 = scmp.eq.s32.totalorder %s28, 3
      %p141 = por %p139, %p140
      %p143 = scmp.ne.s32.totalorder %s126, %s142
      %p144 = scmp.eq.s32.totalorder %s28, 0
      %p145 = por %p143, %p144
      %s147 = sadd.s32 %s146, 1
      %p150 = scmp.eq.s32.totalorder %s22, 3
      %p151 = scmp.ne.s32.totalorder %s146, %s148
      %p152 = scmp.eq.s32.totalorder %s22, 0
      %p153 = por %p151, %p152
      %p154 = scmp.ne.s32.totalorder %s146, %s148
      %p155 = scmp.eq.s32.totalorder %s27, 3
      %p156 = por %p154, %p155
      %p157 = scmp.ne.s32.totalorder %s148, %s149
      %p158 = scmp.eq.s32.totalorder %s27, 0
      %p159 = por %p157, %p158
      %p160 = scmp.ne.s32.totalorder %s148, %s149
      %p161 = scmp.eq.s32.totalorder %s28, 3
      %p162 = por %p160, %p161
      %p164 = scmp.ne.s32.totalorder %s149, %s163
      %p165 = scmp.eq.s32.totalorder %s28, 0
      %p166 = por %p164, %p165
      %s168 = sadd.s32 %s167, 1
      %p171 = scmp.eq.s32.totalorder %s22, 3
      %p172 = scmp.ne.s32.totalorder %s167, %s169
      %p173 = scmp.eq.s32.totalorder %s22, 0
      %p174 = por %p172, %p173
      %p175 = scmp.ne.s32.totalorder %s167, %s169
      %p176 = scmp.eq.s32.totalorder %s27, 3
      %p177 = por %p175, %p176
      %p178 = scmp.ne.s32.totalorder %s169, %s170
      %p179 = scmp.eq.s32.totalorder %s27, 0
      %p180 = por %p178, %p179
      %p181 = scmp.ne.s32.totalorder %s169, %s170
      %p182 = scmp.eq.s32.totalorder %s28, 3
      %p183 = por %p181, %p182
      %p185 = scmp.ne.s32.totalorder %s170, %s184
      %p186 = scmp.eq.s32.totalorder %s28, 0
      %p187 = por %p185, %p186
      %s189 = sadd.s32 %s188, 1
      %p192 = scmp.eq.s32.totalorder %s22, 3
      %p193 = scmp.ne.s32.totalorder %s188, %s190
      %p194 = scmp.eq.s32.totalorder %s22, 0
      %p195 = por %p193, %p194
      %p196 = scmp.ne.s32.totalorder %s188, %s190
      %p197 = scmp.eq.s32.totalorder %s27, 3
      %p198 = por %p196, %p197
      %p199 = scmp.ne.s32.totalorder %s190, %s191
      %p200 = scmp.eq.s32.totalorder %s27, 0
      %p201 = por %p199, %p200
      %p202 = scmp.ne.s32.totalorder %s190, %s191
      %p203 = scmp.eq.s32.totalorder %s28, 3
      %p204 = por %p202, %p203
      %p206 = scmp.ne.s32.totalorder %s191, %s205
      %p207 = scmp.eq.s32.totalorder %s28, 0
      %p208 = por %p206, %p207
      %s210 = sadd.s32 %s209, 1
      %p213 = scmp.eq.s32.totalorder %s22, 3
      %p214 = scmp.ne.s32.totalorder %s209, %s211
      %p215 = scmp.eq.s32.totalorder %s22, 0
      %p216 = por %p214, %p215
      %p217 = scmp.ne.s32.totalorder %s209, %s211
      %p218 = scmp.eq.s32.totalorder %s27, 3
      %p219 = por %p217, %p218
      %p220 = scmp.ne.s32.totalorder %s211, %s212
      %p221 = scmp.eq.s32.totalorder %s27, 0
      %p222 = por %p220, %p221
      %p223 = scmp.ne.s32.totalorder %s211, %s212
      %p224 = scmp.eq.s32.totalorder %s28, 3
      %p225 = por %p223, %p224
      %p227 = scmp.ne.s32.totalorder %s212, %s226
      %p228 = scmp.eq.s32.totalorder %s28, 0
      %p229 = por %p227, %p228
      %s231 = sadd.s32 %s230, 1
      %p234 = scmp.eq.s32.totalorder %s22, 3
      %p235 = scmp.ne.s32.totalorder %s230, %s232
      %p236 = scmp.eq.s32.totalorder %s22, 0
      %p237 = por %p235, %p236
      %p238 = scmp.ne.s32.totalorder %s230, %s232
      %p239 = scmp.eq.s32.totalorder %s27, 3
      %p240 = por %p238, %p239
      %p241 = scmp.ne.s32.totalorder %s232, %s233
      %p242 = scmp.eq.s32.totalorder %s27, 0
      %p243 = por %p241, %p242
      %p244 = scmp.ne.s32.totalorder %s232, %s233
      %p245 = scmp.eq.s32.totalorder %s28, 3
      %p246 = por %p244, %p245
      %p248 = scmp.ne.s32.totalorder %s233, %s247
      %p249 = scmp.eq.s32.totalorder %s28, 0
      %p250 = por %p248, %p249
      %s252 = sadd.s32 %s251, 1
      %p255 = scmp.eq.s32.totalorder %s22, 3
      %p256 = scmp.ne.s32.totalorder %s251, %s253
      %p257 = scmp.eq.s32.totalorder %s22, 0
      %p258 = por %p256, %p257
      %p259 = scmp.ne.s32.totalorder %s251, %s253
      %p260 = scmp.eq.s32.totalorder %s27, 3
      %p261 = por %p259, %p260
      %p262 = scmp.ne.s32.totalorder %s253, %s254
      %p263 = scmp.eq.s32.totalorder %s27, 0
      %p264 = por %p262, %p263
      %p265 = scmp.ne.s32.totalorder %s253, %s254
      %p266 = scmp.eq.s32.totalorder %s28, 3
      %p267 = por %p265, %p266
      %p269 = scmp.ne.s32.totalorder %s254, %s268
      %p270 = scmp.eq.s32.totalorder %s28, 0
      %p271 = por %p269, %p270
      %s273 = sadd.s32 %s272, 1
      %p276 = scmp.eq.s32.totalorder %s22, 3
      %p277 = scmp.ne.s32.totalorder %s272, %s274
      %p278 = scmp.eq.s32.totalorder %s22, 0
      %p279 = por %p277, %p278
      %p280 = scmp.ne.s32.totalorder %s272, %s274
      %p281 = scmp.eq.s32.totalorder %s27, 3
      %p282 = por %p280, %p281
      %p283 = scmp.ne.s32.totalorder %s274, %s275
      %p284 = scmp.eq.s32.totalorder %s27, 0
      %p285 = por %p283, %p284
      %p286 = scmp.ne.s32.totalorder %s274, %s275
      %p287 = scmp.eq.s32.totalorder %s28, 3
      %p288 = por %p286, %p287
      %p290 = scmp.ne.s32.totalorder %s275, %s289
      %p291 = scmp.eq.s32.totalorder %s28, 0
      %p292 = por %p290, %p291
      %s294 = sadd.s32 %s293, 1
      %p297 = scmp.eq.s32.totalorder %s22, 3
      %p298 = scmp.ne.s32.totalorder %s293, %s295
      %p299 = scmp.eq.s32.totalorder %s22, 0
      %p300 = por %p298, %p299
      %p301 = scmp.ne.s32.totalorder %s293, %s295
      %p302 = scmp.eq.s32.totalorder %s27, 3
      %p303 = por %p301, %p302
      %p304 = scmp.ne.s32.totalorder %s295, %s296
      %p305 = scmp.eq.s32.totalorder %s27, 0
      %p306 = por %p304, %p305
      %p307 = scmp.ne.s32.totalorder %s295, %s296
      %p308 = scmp.eq.s32.totalorder %s28, 3
      %p309 = por %p307, %p308
      %p311 = scmp.ne.s32.totalorder %s296, %s310
      %p312 = scmp.eq.s32.totalorder %s28, 0
      %p313 = por %p311, %p312
      %s314 = ssub.s32 %s29, %s41
      %s315 = ssub.s32 %s30, %s37
      %s316 = sor.u32 %s314, %s315
      %p317 = scmp.eq.s32.totalorder %s316, 0
      %s319 = sadd.s32 %s318, 1
      %s320 = scalar_select %p317, %s318, %s319
      %p323 = pneg %p317
      %p324 = scmp.eq.s32.totalorder %s22, 3
      %p325 = por %p323, %p324
      %p326 = scmp.ne.s32.totalorder %s318, %s321
      %p327 = scmp.eq.s32.totalorder %s22, 0
      %p328 = por %p326, %p327
      %p329 = scmp.ne.s32.totalorder %s318, %s321
      %p330 = scmp.eq.s32.totalorder %s27, 3
      %p331 = por %p329, %p330
      %p332 = scmp.ne.s32.totalorder %s321, %s322
      %p333 = scmp.eq.s32.totalorder %s27, 0
      %p334 = por %p332, %p333
      %p335 = scmp.ne.s32.totalorder %s321, %s322
      %p336 = scmp.eq.s32.totalorder %s28, 3
      %p337 = por %p335, %p336
      %p339 = scmp.ne.s32.totalorder %s322, %s338
      %p340 = scmp.eq.s32.totalorder %s28, 0
      %p341 = por %p339, %p340
      %p342 = scmp.le.s32.totalorder 1, %s22
      %p343 = scmp.lt.s32.totalorder %s22, 5
      %p344 = pnand %p342, %p343
      %p345 = pneg %p344
      // Predicated region
      $region9: #{tpu_custom_call.1} parent=5 // pred_check
        _
      $region10: #{tpu_custom_call.1} parent=5 // pred_check_branch
        %347 = sbr.rel (%p344) target = $region12
      $region11: #{tpu_custom_call.1} parent=5 // pred_region
        %s348 = ssub.s32 %s22, 1
        // Predicated region
        $region13: #{tpu_custom_call.1} parent=11 // pred_check
          %p349 = pneg %p159
        $region14: #{tpu_custom_call.1} parent=11 // pred_check_branch
          %351 = sbr.rel (%p349) target = $region16
        $region15: #{tpu_custom_call.1} parent=11 // pred_region
          _
        $region16: #{tpu_custom_call.1} parent=11 // pred_fallthru
          _
        // Predicated region
        $region17: #{tpu_custom_call.1} parent=11 // pred_check
          %p352 = pneg %p180
        $region18: #{tpu_custom_call.1} parent=11 // pred_check_branch
          %354 = sbr.rel (%p352) target = $region20
        $region19: #{tpu_custom_call.1} parent=11 // pred_region
          _
        $region20: #{tpu_custom_call.1} parent=11 // pred_fallthru
          _
        // Predicated region
        $region21: #{tpu_custom_call.1} parent=11 // pred_check
          %p355 = pneg %p201
        $region22: #{tpu_custom_call.1} parent=11 // pred_check_branch
          %357 = sbr.rel (%p355) target = $region24
        $region23: #{tpu_custom_call.1} parent=11 // pred_region
          %s359 = ssub.s32 4096, 4096
          %360 = vsyncadd [#allocation7], %s359
          %s361 = sshll.u32 [#allocation6], 4
          %s362 = int_to_ptr.vmem [resolvable:$true] %s361
          %367 = dma.hbm_to_vmem [thread:$0]  %s6, 4096, %s362, [#allocation7], 128, 128, 8
        $region24: #{tpu_custom_call.1} parent=11 // pred_fallthru
          _
        // Predicated region
        $region25: #{tpu_custom_call.1} parent=11 // pred_check
          %p368 = pneg %p222
        $region26: #{tpu_custom_call.1} parent=11 // pred_check_branch
          %370 = sbr.rel (%p368) target = $region28
        $region27: #{tpu_custom_call.1} parent=11 // pred_region
          _
        $region28: #{tpu_custom_call.1} parent=11 // pred_fallthru
          _
        // Predicated region
        $region29: #{tpu_custom_call.1} parent=11 // pred_check
          %p371 = pneg %p243
        $region30: #{tpu_custom_call.1} parent=11 // pred_check_branch
          %373 = sbr.rel (%p371) target = $region32
        $region31: #{tpu_custom_call.1} parent=11 // pred_region
          _
        $region32: #{tpu_custom_call.1} parent=11 // pred_fallthru
          _
        // Predicated region
        $region33: #{tpu_custom_call.1} parent=11 // pred_check
          %p374 = pneg %p264
        $region34: #{tpu_custom_call.1} parent=11 // pred_check_branch
          %376 = sbr.rel (%p374) target = $region36
        $region35: #{tpu_custom_call.1} parent=11 // pred_region
          _
        $region36: #{tpu_custom_call.1} parent=11 // pred_fallthru
          _
        // Predicated region
        $region37: #{tpu_custom_call.1} parent=11 // pred_check
          %p377 = pneg %p285
        $region38: #{tpu_custom_call.1} parent=11 // pred_check_branch
          %379 = sbr.rel (%p377) target = $region40
        $region39: #{tpu_custom_call.1} parent=11 // pred_region
          _
        $region40: #{tpu_custom_call.1} parent=11 // pred_fallthru
          _
        // Predicated region
        $region41: #{tpu_custom_call.1} parent=11 // pred_check
          %p380 = pneg %p306
        $region42: #{tpu_custom_call.1} parent=11 // pred_check_branch
          %382 = sbr.rel (%p380) target = $region44
        $region43: #{tpu_custom_call.1} parent=11 // pred_region
          _
        $region44: #{tpu_custom_call.1} parent=11 // pred_fallthru
          _
      $region12: #{tpu_custom_call.1} parent=5 // pred_fallthru
        _
      %p383 = scmp.lt.s32.totalorder %s22, 4
      // Predicated region
      $region45: #{tpu_custom_call.1} parent=5 // pred_check
        %p384 = pneg %p383
      $region46: #{tpu_custom_call.1} parent=5 // pred_check_branch
        %386 = sbr.rel (%p384) target = $region48
      $region47: #{tpu_custom_call.1} parent=5 // pred_region
        // Predicated region
        $region49: #{tpu_custom_call.1} parent=47 // pred_check
          %p387 = pneg %p54
        $region50: #{tpu_custom_call.1} parent=47 // pred_check_branch
          %389 = sbr.rel (%p387) target = $region52
        $region51: #{tpu_custom_call.1} parent=47 // pred_region
          %p390 = scmp.lt.s32.totalorder %s29, 1
          %s391 = scalar_select %p390, %s29, 1
          %s392 = smul.addr %s391, 2
          %s393 = smul.addr %s392, 8
          %s394 = scalar_lea.vmem %s0, %s393
        $region52: #{tpu_custom_call.1} parent=47 // pred_fallthru
          _
        // Predicated region
        $region53: #{tpu_custom_call.1} parent=47 // pred_check
          %p395 = pneg %p80
        $region54: #{tpu_custom_call.1} parent=47 // pred_check_branch
          %397 = sbr.rel (%p395) target = $region56
        $region55: #{tpu_custom_call.1} parent=47 // pred_region
          %p398 = scmp.lt.s32.totalorder %s29, 1
          %s399 = scalar_select %p398, %s29, 1
          %s400 = smul.addr %s399, 8
          %s401 = scalar_lea.vmem %s1, %s400
        $region56: #{tpu_custom_call.1} parent=47 // pred_fallthru
          _
        // Predicated region
        $region57: #{tpu_custom_call.1} parent=47 // pred_check
          %p402 = pneg %p106
        $region58: #{tpu_custom_call.1} parent=47 // pred_check_branch
          %404 = sbr.rel (%p402) target = $region60
        $region59: #{tpu_custom_call.1} parent=47 // pred_region
          %p405 = scmp.lt.s32.totalorder %s29, 1
          %s406 = scalar_select %p405, %s29, 1
          %s407 = scalar_lea.vmem %s2, %s406
        $region60: #{tpu_custom_call.1} parent=47 // pred_fallthru
          _
        // Predicated region
        $region61: #{tpu_custom_call.1} parent=47 // pred_check
          %p408 = pneg %p132
        $region62: #{tpu_custom_call.1} parent=47 // pred_check_branch
          %410 = sbr.rel (%p408) target = $region64
        $region63: #{tpu_custom_call.1} parent=47 // pred_region
          %p411 = scmp.lt.s32.totalorder %s29, 1
          %s412 = scalar_select %p411, %s29, 1
          %s413 = scalar_lea.vmem %s3, %s412
        $region64: #{tpu_custom_call.1} parent=47 // pred_fallthru
          _
      $region48: #{tpu_custom_call.1} parent=5 // pred_fallthru
        _
      %p414 = scmp.le.s32.totalorder 1, %s22
      %p415 = scmp.lt.s32.totalorder %s22, 5
      %p416 = pnand %p414, %p415
      %p417 = pneg %p416
      // Predicated region
      $region65: #{tpu_custom_call.1} parent=5 // pred_check
        _
      $region66: #{tpu_custom_call.1} parent=5 // pred_check_branch
        %419 = sbr.rel (%p416) target = $region68
      $region67: #{tpu_custom_call.1} parent=5 // pred_region
        %s420 = ssub.s32 %s22, 1
        // Predicated region
        $region69: #{tpu_custom_call.1} parent=67 // pred_check
          %p421 = pneg %p201
        $region70: #{tpu_custom_call.1} parent=67 // pred_check_branch
          %423 = sbr.rel (%p421) target = $region72
        $region71: #{tpu_custom_call.1} parent=67 // pred_region
          %424 = dma.done [#allocation7], 4096
        $region72: #{tpu_custom_call.1} parent=67 // pred_fallthru
          _
        %p425 = scmp.lt.s32.totalorder %s31, 1
        %s426 = scalar_select %p425, %s31, 1
        %s427 = smul.addr %s426, 2
        %s428 = smul.addr %s427, 8
        %s429 = scalar_lea.vmem %s0, %s428
        %p430 = pneg %p60
        %p431 = pneg %p57
        %p432 = scmp.lt.s32.totalorder %s31, 1
        %s433 = scalar_select %p432, %s31, 1
        %s434 = smul.addr %s433, 8
        %s435 = scalar_lea.vmem %s1, %s434
        %p436 = pneg %p86
        %p437 = pneg %p83
        %p438 = scmp.lt.s32.totalorder %s31, 1
        %s439 = scalar_select %p438, %s31, 1
        %s440 = scalar_lea.vmem %s2, %s439
        %p441 = pneg %p112
        %p442 = pneg %p109
        %p443 = scmp.lt.s32.totalorder %s31, 1
        %s444 = scalar_select %p443, %s31, 1
        %s445 = scalar_lea.vmem %s3, %s444
        %p446 = pneg %p138
        %p447 = pneg %p135
        %p448 = pneg %p159
        %p449 = pneg %p156
        %p450 = pneg %p180
        %p451 = pneg %p177
        %p452 = pneg %p201
        %p453 = pneg %p198
        %p454 = pneg %p222
        %p455 = pneg %p219
        %p456 = pneg %p243
        %p457 = pneg %p240
        %p458 = pneg %p264
        %p459 = pneg %p261
        %p460 = pneg %p285
        %p461 = pneg %p282
        %p462 = pneg %p306
        %p463 = pneg %p303
        %p464 = pneg %p334
        %p465 = pneg %p331
        %s466 = sand.u32 %s321, 1
        %s467 = scalar_lea.sflag [#allocation8], %s466
        %s468 = sand.u32 %s321, 1
        %s469 = smul.addr %s468, 8
        %s470 = scalar_lea.vmem [#allocation9], %s469
        %p471 = scmp.lt.s32.totalorder %s31, 1
        %s472 = scalar_select %p471, %s31, 1
        %s473 = smul.addr %s472, 2
        %s474 = smul.addr %s473, 8
        %s475 = scalar_lea.vmem %s0, %s474
        %p476 = scmp.lt.s32.totalorder %s31, 1
        %s477 = scalar_select %p476, %s31, 1
        %s478 = smul.addr %s477, 8
        %s479 = scalar_lea.vmem %s1, %s478
        %p480 = scmp.lt.s32.totalorder %s31, 1
        %s481 = scalar_select %p480, %s31, 1
        %s482 = scalar_lea.vmem %s2, %s481
        %p483 = scmp.lt.s32.totalorder %s31, 1
        %s484 = scalar_select %p483, %s31, 1
        %s485 = scalar_lea.vmem %s3, %s484
        %s486 = smul.u32 %s32, 8
        %p487 = scmp.eq.s32.totalorder %s32, 0
        // Predicated region
        $region73: #{tpu_custom_call.1} parent=67 // pred_check
          %p488 = pneg %p487
        $region74: #{tpu_custom_call.1} parent=67 // pred_check_branch
          %490 = sbr.rel (%p488) target = $region76
        $region75: #{tpu_custom_call.1} parent=67 // pred_region
          %v491 = vld [vmem:[%s475] sm:$0xff]
          %v492 = vld [vmem:[%s475 + $0x8] sm:$0xff]
          %v493 = vld [vmem:[%s4] sm:$0x1]
          %v494 = vld [vmem:[%s5] sm:$0x1]
          %vm495 = vcmask 261120
          %v496 = vsel %vm495, %v491, 0.0
          %497 = vadd.xlane.f32.xlu0 %v496
          %v498 = vpop.xlane.xlu0 %497
          %v499 = vsel %vm495, %v492, 0.0
          %500 = vadd.xlane.f32.xlu0 %v499
          %v501 = vpop.xlane.xlu0 %500
          %v502 = vrcp.pop 32.0
          %v503 = vmul.f32 %v498, %v502
          %v504 = vmul.f32 %v501, %v502
          %v505 = vsub.f32 %v491, %v503
          %v506 = vsub.f32 %v492, %v504
          %v507 = vmul.f32 %v505, %v505
          %v508 = vmul.f32 %v506, %v506
          %v509 = vsel %vm495, %v507, 0.0
          %510 = vadd.xlane.f32.xlu0 %v509
          %v511 = vpop.xlane.xlu0 %510
          %v512 = vsel %vm495, %v508, 0.0
          %513 = vadd.xlane.f32.xlu0 %v512
          %v514 = vpop.xlane.xlu0 %513
          %v515 = vrcp.pop 31.0
          %v516 = vmul.f32 %v511, %v515
          %v517 = vmul.f32 %v514, %v515
          %v518 = vlaneseq
          %v519 = vshrl.u32 %v518, 7
          %v520 = vsub.s32 0, %v519
          %v521 = vrot.slane %v493, %v520
          %v522 = vmul.f32 %v521, %v505
          %v523 = vmul.f32 %v521, %v506
          %v524 = vrsqrt.pop %v516
          %v525 = vmul.f32 %v516, %v524
          %vm526 = vcmp.eq.f32.partialorder %v516, inf
          %v527 = vsel %vm526, %v516, %v525
          %vm528 = vcmp.eq.f32.partialorder %v516, 0.0
          %v529 = vand.u32 %v516, 2147483648
          %v530 = vsel %vm528, %v529, %v527
          %v531 = vrsqrt.pop %v517
          %v532 = vmul.f32 %v517, %v531
          %vm533 = vcmp.eq.f32.partialorder %v517, inf
          %v534 = vsel %vm533, %v517, %v532
          %vm535 = vcmp.eq.f32.partialorder %v517, 0.0
          %v536 = vand.u32 %v517, 2147483648
          %v537 = vsel %vm535, %v536, %v534
          %v538 = vadd.f32 %v530, 1e-06
          %v539 = vadd.f32 %v537, 1e-06
          %v540 = vrcp.pop %v538
          %v541 = vmul.f32 %v522, %v540
          %v542 = vrcp.pop %v539
          %v543 = vmul.f32 %v523, %v542
          %v544 = vlaneseq
          %v545 = vshrl.u32 %v544, 7
          %v546 = vsub.s32 0, %v545
          %v547 = vrot.slane %v494, %v546
          %v548 = vadd.f32 %v541, %v547
          %v549 = vadd.f32 %v543, %v547
          %s550 = scalar_lea.vmem [#allocation6], 32
          %v551 = vld [vmem:[%s550] sm:$0xff]
          %v552 = vld [vmem:[%s550 + $0x8] sm:$0xff]
          %v553 = vld [vmem:[%s550 + $0x10] sm:$0xff]
          %v554 = vld [vmem:[%s550 + $0x18] sm:$0xff]
          %s555 = scalar_lea.vmem %s7, 1
          %v556 = vld [vmem:[%s555] sm:$0x1]
          %v558 = vlaneseq
          %v559 = vshrl.u32 %v558, 7
          %v560 = vsub.s32 0, %v559
          %v561 = vrot.slane %v556, %v560
          %v564 = vsel %vm495, %v548, 0
          %v567 = vsel %vm495, %v549, 0
          %569 = vmatprep.subr.mxu0 0.0
          %570 = vmatpush1.msra.mxu0 %v551
          %571 = vmatprep.subr.mxu0 0.0
          %572 = vmatpush1.msra.mxu0 %v552
          %573 = vmatprep.subr.mxu0 0.0
          %574 = vmatpush1.msra.mxu0 %v553
          %575 = vmatprep.subr.mxu0 0.0
          %576 = vmatpush1.msra.mxu0 %v554
          %577 = vmatprep.subr.mxu0 0.0
          %578 = vmatpush1.msra.mxu0 0.0
          %579 = vmatprep.subr.mxu0 0.0
          %580 = vmatpush1.msra.mxu0 0.0
          %581 = vmatprep.subr.mxu0 0.0
          %582 = vmatpush1.msra.mxu0 0.0
          %583 = vmatprep.subr.mxu0 0.0
          %584 = vmatpush1.msra.mxu0 0.0
          %585 = vmatprep.subr.mxu0 0.0
          %586 = vmatpush1.msra.mxu0 0.0
          %587 = vmatprep.subr.mxu0 0.0
          %588 = vmatpush1.msra.mxu0 0.0
          %589 = vmatprep.subr.mxu0 0.0
          %590 = vmatpush1.msra.mxu0 0.0
          %591 = vmatprep.subr.mxu0 0.0
          %592 = vmatpush1.msra.mxu0 0.0
          %593 = vmatprep.subr.mxu0 0.0
          %594 = vmatpush1.msra.mxu0 0.0
          %595 = vmatprep.subr.mxu0 0.0
          %596 = vmatpush1.msra.mxu0 0.0
          %597 = vmatprep.subr.mxu0 0.0
          %598 = vmatpush1.msra.mxu0 0.0
          %599 = vmatprep.subr.mxu0 0.0
          %600 = vmatpush1.msra.mxu0 0.0
          %601 = vmatprep.subr.mxu0 0.0
          %602 = vmatpush1.msra.mxu0 0.0
          %603 = vmatprep.subr.mxu0 0.0
          %604 = vmatpush1.msra.mxu0 0.0
          %605 = vmatprep.subr.mxu0 0.0
          %606 = vmatpush1.msra.mxu0 0.0
          %607 = vmatprep.subr.mxu0 0.0
          %608 = vmatpush1.msra.mxu0 0.0
          %609 = vmatprep.subr.mxu0 0.0
          %610 = vmatpush1.msra.mxu0 0.0
          %611 = vmatprep.subr.mxu0 0.0
          %612 = vmatpush1.msra.mxu0 0.0
          %613 = vmatprep.subr.mxu0 0.0
          %614 = vmatpush1.msra.mxu0 0.0
          %615 = vmatprep.subr.mxu0 0.0
          %616 = vmatpush1.msra.mxu0 0.0
          %617 = vmatprep.subr.mxu0 0.0
          %618 = vmatpush1.msra.mxu0 0.0
          %619 = vmatprep.subr.mxu0 0.0
          %620 = vmatpush1.msra.mxu0 0.0
          %621 = vmatprep.subr.mxu0 0.0
          %622 = vmatpush1.msra.mxu0 0.0
          %623 = vmatprep.subr.mxu0 0.0
          %624 = vmatpush1.msra.mxu0 0.0
          %625 = vmatprep.subr.mxu0 0.0
          %626 = vmatpush1.msra.mxu0 0.0
          %627 = vmatprep.subr.mxu0 0.0
          %628 = vmatpush1.msra.mxu0 0.0
          %629 = vmatprep.subr.mxu0 0.0
          %630 = vmatpush1.msra.mxu0 0.0
          %631 = vmatprep.subr.mxu0 0.0
          %632 = vmatpush1.msra.mxu0 0.0
          %633 = vmatprep.mubr.f32.mxu0 0.0
          %634 = vmatmul.mubr.f32.gmra.mrb[0].mxu0 %v564
          %v635 = vpop.f32.mrb[0].mxu0
          %v636 = vadd.f32 %v561, %v635
          %v637 = vpop.f32.mrb[0].mxu0
          %638 = vmatprep.mubr.f32.mxu0 0.0
          %639 = vmatmul.mubr.f32.gmra.mrb[0].mxu0 %v567
          %v640 = vpop.f32.mrb[0].mxu0
          %v641 = vadd.f32 %v561, %v640
          %v642 = vpop.f32.mrb[0].mxu0
          %643 = vdwg.mxu0
          %646 = vrot.lane.b32.xlu0 %v636, 120
          %v647 = vpop.permute.xlu0 %646
          %648 = vrot.lane.b32.xlu0 %v641, 120
          %v649 = vpop.permute.xlu0 %648
          %652 = vrot.lane.b32.xlu0 %v636, 112
          %v653 = vpop.permute.xlu0 %652
          %654 = vrot.lane.b32.xlu0 %v641, 112
          %v655 = vpop.permute.xlu0 %654
          %658 = vrot.lane.b32.xlu0 %v636, 104
          %v659 = vpop.permute.xlu0 %658
          %660 = vrot.lane.b32.xlu0 %v641, 104
          %v661 = vpop.permute.xlu0 %660
          %v664 = vcombine.low %v636, %v653
          %v665 = vcombine.high %v636, %v653
          %v667 = vunpack.c.l.s4 1983009808
          %v668 = vunpack.c.0.s8 %v667
          %v669 = vlaneseq
          %v670 = vshrl.u32 %v669, 7
          %v671 = vsub.s32 %v668, %v670
          %v672 = vrot.slane %v664, %v671
          %v674 = vunpack.c.l.s4 1983009808
          %v675 = vunpack.c.0.s8 %v674
          %v676 = vlaneseq
          %v677 = vshrl.u32 %v676, 7
          %v678 = vsub.s32 %v675, %v677
          %v679 = vrot.slane %v665, %v678
          %v680 = vcombine.low %v647, %v659
          %v681 = vcombine.high %v647, %v659
          %v683 = vunpack.c.l.s4 1983009808
          %v684 = vunpack.c.0.s8 %v683
          %v685 = vlaneseq
          %v686 = vshrl.u32 %v685, 7
          %v687 = vsub.s32 %v684, %v686
          %v688 = vrot.slane %v680, %v687
          %v690 = vunpack.c.l.s4 1983009808
          %v691 = vunpack.c.0.s8 %v690
          %v692 = vlaneseq
          %v693 = vshrl.u32 %v692, 7
          %v694 = vsub.s32 %v691, %v693
          %v695 = vrot.slane %v681, %v694
          %v696 = vcombine.low %v672, %v688
          %v697 = vcombine.high %v672, %v688
          %v699 = vunpack.c.l.s4 1934713408
          %v700 = vunpack.c.0.s8 %v699
          %v701 = vlaneseq
          %v702 = vshrl.u32 %v701, 7
          %v703 = vsub.s32 %v700, %v702
          %v704 = vrot.slane %v696, %v703
          %v706 = vunpack.c.l.s4 1934713408
          %v707 = vunpack.c.0.s8 %v706
          %v708 = vlaneseq
          %v709 = vshrl.u32 %v708, 7
          %v710 = vsub.s32 %v707, %v709
          %v711 = vrot.slane %v697, %v710
          %v712 = vcombine.low %v679, %v695
          %v713 = vcombine.high %v679, %v695
          %v715 = vunpack.c.l.s4 1934713408
          %v716 = vunpack.c.0.s8 %v715
          %v717 = vlaneseq
          %v718 = vshrl.u32 %v717, 7
          %v719 = vsub.s32 %v716, %v718
          %v720 = vrot.slane %v712, %v719
          %v722 = vunpack.c.l.s4 1934713408
          %v723 = vunpack.c.0.s8 %v722
          %v724 = vlaneseq
          %v725 = vshrl.u32 %v724, 7
          %v726 = vsub.s32 %v723, %v725
          %v727 = vrot.slane %v713, %v726
          %v728 = vcombine.high %v704, 0.0
          %v729 = vcombine.high %v711, 0.0
          %v730 = vcombine.high %v720, 0.0
          %v731 = vcombine.high %v727, 0.0
          %v732 = vcombine.low %v641, %v655
          %v733 = vcombine.high %v641, %v655
          %v735 = vunpack.c.l.s4 1983009808
          %v736 = vunpack.c.0.s8 %v735
          %v737 = vlaneseq
          %v738 = vshrl.u32 %v737, 7
          %v739 = vsub.s32 %v736, %v738
          %v740 = vrot.slane %v732, %v739
          %v742 = vunpack.c.l.s4 1983009808
          %v743 = vunpack.c.0.s8 %v742
          %v744 = vlaneseq
          %v745 = vshrl.u32 %v744, 7
          %v746 = vsub.s32 %v743, %v745
          %v747 = vrot.slane %v733, %v746
          %v748 = vcombine.low %v649, %v661
          %v749 = vcombine.high %v649, %v661
          %v751 = vunpack.c.l.s4 1983009808
          %v752 = vunpack.c.0.s8 %v751
          %v753 = vlaneseq
          %v754 = vshrl.u32 %v753, 7
          %v755 = vsub.s32 %v752, %v754
          %v756 = vrot.slane %v748, %v755
          %v758 = vunpack.c.l.s4 1983009808
          %v759 = vunpack.c.0.s8 %v758
          %v760 = vlaneseq
          %v761 = vshrl.u32 %v760, 7
          %v762 = vsub.s32 %v759, %v761
          %v763 = vrot.slane %v749, %v762
          %v764 = vcombine.low %v740, %v756
          %v765 = vcombine.high %v740, %v756
          %v767 = vunpack.c.l.s4 1934713408
          %v768 = vunpack.c.0.s8 %v767
          %v769 = vlaneseq
          %v770 = vshrl.u32 %v769, 7
          %v771 = vsub.s32 %v768, %v770
          %v772 = vrot.slane %v764, %v771
          %v774 = vunpack.c.l.s4 1934713408
          %v775 = vunpack.c.0.s8 %v774
          %v776 = vlaneseq
          %v777 = vshrl.u32 %v776, 7
          %v778 = vsub.s32 %v775, %v777
          %v779 = vrot.slane %v765, %v778
          %v780 = vcombine.low %v747, %v763
          %v781 = vcombine.high %v747, %v763
          %v783 = vunpack.c.l.s4 1934713408
          %v784 = vunpack.c.0.s8 %v783
          %v785 = vlaneseq
          %v786 = vshrl.u32 %v785, 7
          %v787 = vsub.s32 %v784, %v786
          %v788 = vrot.slane %v780, %v787
          %v790 = vunpack.c.l.s4 1934713408
          %v791 = vunpack.c.0.s8 %v790
          %v792 = vlaneseq
          %v793 = vshrl.u32 %v792, 7
          %v794 = vsub.s32 %v791, %v793
          %v795 = vrot.slane %v781, %v794
          %v796 = vcombine.high %v772, 0.0
          %v797 = vcombine.high %v779, 0.0
          %v798 = vcombine.high %v788, 0.0
          %v799 = vcombine.high %v795, 0.0
          %v800 = vcombine.low %v704, %v711
          %v802 = vunpack.c.l.s4 1983009808
          %v803 = vunpack.c.0.s8 %v802
          %v804 = vlaneseq
          %v805 = vshrl.u32 %v804, 7
          %v806 = vsub.s32 %v803, %v805
          %v807 = vrot.slane %v800, %v806
          %v808 = vcombine.low %v728, %v729
          %v810 = vunpack.c.l.s4 1983009808
          %v811 = vunpack.c.0.s8 %v810
          %v812 = vlaneseq
          %v813 = vshrl.u32 %v812, 7
          %v814 = vsub.s32 %v811, %v813
          %v815 = vrot.slane %v808, %v814
          %v816 = vcombine.low %v720, %v727
          %v818 = vunpack.c.l.s4 1983009808
          %v819 = vunpack.c.0.s8 %v818
          %v820 = vlaneseq
          %v821 = vshrl.u32 %v820, 7
          %v822 = vsub.s32 %v819, %v821
          %v823 = vrot.slane %v816, %v822
          %v824 = vcombine.low %v730, %v731
          %v826 = vunpack.c.l.s4 1983009808
          %v827 = vunpack.c.0.s8 %v826
          %v828 = vlaneseq
          %v829 = vshrl.u32 %v828, 7
          %v830 = vsub.s32 %v827, %v829
          %v831 = vrot.slane %v824, %v830
          %v832 = vcombine.low %v807, %v815
          %v833 = vcombine.high %v807, %v815
          %v835 = vunpack.c.l.s4 1934713408
          %v836 = vunpack.c.0.s8 %v835
          %v837 = vlaneseq
          %v838 = vshrl.u32 %v837, 7
          %v839 = vsub.s32 %v836, %v838
          %v840 = vrot.slane %v832, %v839
          %v842 = vunpack.c.l.s4 1934713408
          %v843 = vunpack.c.0.s8 %v842
          %v844 = vlaneseq
          %v845 = vshrl.u32 %v844, 7
          %v846 = vsub.s32 %v843, %v845
          %v847 = vrot.slane %v833, %v846
          %v848 = vcombine.low %v823, %v831
          %v849 = vcombine.high %v823, %v831
          %v851 = vunpack.c.l.s4 1934713408
          %v852 = vunpack.c.0.s8 %v851
          %v853 = vlaneseq
          %v854 = vshrl.u32 %v853, 7
          %v855 = vsub.s32 %v852, %v854
          %v856 = vrot.slane %v848, %v855
          %v858 = vunpack.c.l.s4 1934713408
          %v859 = vunpack.c.0.s8 %v858
          %v860 = vlaneseq
          %v861 = vshrl.u32 %v860, 7
          %v862 = vsub.s32 %v859, %v861
          %v863 = vrot.slane %v849, %v862
          %v864 = vcombine.low %v840, %v856
          %v865 = vcombine.high %v840, %v856
          %v866 = vcombine.low %v847, %v863
          %v867 = vcombine.high %v847, %v863
          %v868 = vcombine.low %v772, %v779
          %v870 = vunpack.c.l.s4 1983009808
          %v871 = vunpack.c.0.s8 %v870
          %v872 = vlaneseq
          %v873 = vshrl.u32 %v872, 7
          %v874 = vsub.s32 %v871, %v873
          %v875 = vrot.slane %v868, %v874
          %v876 = vcombine.low %v796, %v797
          %v878 = vunpack.c.l.s4 1983009808
          %v879 = vunpack.c.0.s8 %v878
          %v880 = vlaneseq
          %v881 = vshrl.u32 %v880, 7
          %v882 = vsub.s32 %v879, %v881
          %v883 = vrot.slane %v876, %v882
          %v884 = vcombine.low %v788, %v795
          %v886 = vunpack.c.l.s4 1983009808
          %v887 = vunpack.c.0.s8 %v886
          %v888 = vlaneseq
          %v889 = vshrl.u32 %v888, 7
          %v890 = vsub.s32 %v887, %v889
          %v891 = vrot.slane %v884, %v890
          %v892 = vcombine.low %v798, %v799
          %v894 = vunpack.c.l.s4 1983009808
          %v895 = vunpack.c.0.s8 %v894
          %v896 = vlaneseq
          %v897 = vshrl.u32 %v896, 7
          %v898 = vsub.s32 %v895, %v897
          %v899 = vrot.slane %v892, %v898
          %v900 = vcombine.low %v875, %v883
          %v901 = vcombine.high %v875, %v883
          %v903 = vunpack.c.l.s4 1934713408
          %v904 = vunpack.c.0.s8 %v903
          %v905 = vlaneseq
          %v906 = vshrl.u32 %v905, 7
          %v907 = vsub.s32 %v904, %v906
          %v908 = vrot.slane %v900, %v907
          %v910 = vunpack.c.l.s4 1934713408
          %v911 = vunpack.c.0.s8 %v910
          %v912 = vlaneseq
          %v913 = vshrl.u32 %v912, 7
          %v914 = vsub.s32 %v911, %v913
          %v915 = vrot.slane %v901, %v914
          %v916 = vcombine.low %v891, %v899
          %v917 = vcombine.high %v891, %v899
          %v919 = vunpack.c.l.s4 1934713408
          %v920 = vunpack.c.0.s8 %v919
          %v921 = vlaneseq
          %v922 = vshrl.u32 %v921, 7
          %v923 = vsub.s32 %v920, %v922
          %v924 = vrot.slane %v916, %v923
          %v926 = vunpack.c.l.s4 1934713408
          %v927 = vunpack.c.0.s8 %v926
          %v928 = vlaneseq
          %v929 = vshrl.u32 %v928, 7
          %v930 = vsub.s32 %v927, %v929
          %v931 = vrot.slane %v917, %v930
          %v932 = vcombine.low %v908, %v924
          %v933 = vcombine.high %v908, %v924
          %v934 = vcombine.low %v915, %v931
          %v935 = vcombine.high %v915, %v931
          %vm936 = vcmask 64512
          %937 = vst.msk [vmem:[#allocation2] sm:$0xff] %vm936, %v864
          %938 = vst.msk [vmem:[#allocation2 + $0x8] sm:$0xff] %vm936, %v932
          %939 = vst.msk [vmem:[#allocation2 + $0x10] sm:$0xff] %vm936, %v865
          %940 = vst.msk [vmem:[#allocation2 + $0x18] sm:$0xff] %vm936, %v933
          %941 = vst.msk [vmem:[#allocation2 + $0x20] sm:$0xff] %vm936, %v866
          %942 = vst.msk [vmem:[#allocation2 + $0x28] sm:$0xff] %vm936, %v934
          %943 = vst.msk [vmem:[#allocation2 + $0x30] sm:$0xff] %vm936, %v867
          %944 = vst.msk [vmem:[#allocation2 + $0x38] sm:$0xff] %vm936, %v935
          %s945 = scalar_lea.vmem [#allocation6], 64
          %v946 = vld [vmem:[%s945] sm:$0xff]
          %v947 = vld [vmem:[%s945 + $0x8] sm:$0xff]
          %v948 = vld [vmem:[%s945 + $0x10] sm:$0xff]
          %v949 = vld [vmem:[%s945 + $0x18] sm:$0xff]
          %s950 = scalar_lea.vmem %s7, 2
          %v951 = vld [vmem:[%s950] sm:$0x1]
          %v953 = vlaneseq
          %v954 = vshrl.u32 %v953, 7
          %v955 = vsub.s32 0, %v954
          %v956 = vrot.slane %v951, %v955
          %958 = vmatprep.subr.mxu0 0.0
          %959 = vmatpush1.msra.mxu0 %v946
          %960 = vmatprep.subr.mxu0 0.0
          %961 = vmatpush1.msra.mxu0 %v947
          %962 = vmatprep.subr.mxu0 0.0
          %963 = vmatpush1.msra.mxu0 %v948
          %964 = vmatprep.subr.mxu0 0.0
          %965 = vmatpush1.msra.mxu0 %v949
          %966 = vmatprep.subr.mxu0 0.0
          %967 = vmatpush1.msra.mxu0 0.0
          %968 = vmatprep.subr.mxu0 0.0
          %969 = vmatpush1.msra.mxu0 0.0
          %970 = vmatprep.subr.mxu0 0.0
          %971 = vmatpush1.msra.mxu0 0.0
          %972 = vmatprep.subr.mxu0 0.0
          %973 = vmatpush1.msra.mxu0 0.0
          %974 = vmatprep.subr.mxu0 0.0
          %975 = vmatpush1.msra.mxu0 0.0
          %976 = vmatprep.subr.mxu0 0.0
          %977 = vmatpush1.msra.mxu0 0.0
          %978 = vmatprep.subr.mxu0 0.0
          %979 = vmatpush1.msra.mxu0 0.0
          %980 = vmatprep.subr.mxu0 0.0
          %981 = vmatpush1.msra.mxu0 0.0
          %982 = vmatprep.subr.mxu0 0.0
          %983 = vmatpush1.msra.mxu0 0.0
          %984 = vmatprep.subr.mxu0 0.0
          %985 = vmatpush1.msra.mxu0 0.0
          %986 = vmatprep.subr.mxu0 0.0
          %987 = vmatpush1.msra.mxu0 0.0
          %988 = vmatprep.subr.mxu0 0.0
          %989 = vmatpush1.msra.mxu0 0.0
          %990 = vmatprep.subr.mxu0 0.0
          %991 = vmatpush1.msra.mxu0 0.0
          %992 = vmatprep.subr.mxu0 0.0
          %993 = vmatpush1.msra.mxu0 0.0
          %994 = vmatprep.subr.mxu0 0.0
          %995 = vmatpush1.msra.mxu0 0.0
          %996 = vmatprep.subr.mxu0 0.0
          %997 = vmatpush1.msra.mxu0 0.0
          %998 = vmatprep.subr.mxu0 0.0
          %999 = vmatpush1.msra.mxu0 0.0
          %1000 = vmatprep.subr.mxu0 0.0
          %1001 = vmatpush1.msra.mxu0 0.0
          %1002 = vmatprep.subr.mxu0 0.0
          %1003 = vmatpush1.msra.mxu0 0.0
          %1004 = vmatprep.subr.mxu0 0.0
          %1005 = vmatpush1.msra.mxu0 0.0
          %1006 = vmatprep.subr.mxu0 0.0
          %1007 = vmatpush1.msra.mxu0 0.0
          %1008 = vmatprep.subr.mxu0 0.0
          %1009 = vmatpush1.msra.mxu0 0.0
          %1010 = vmatprep.subr.mxu0 0.0
          %1011 = vmatpush1.msra.mxu0 0.0
          %1012 = vmatprep.subr.mxu0 0.0
          %1013 = vmatpush1.msra.mxu0 0.0
          %1014 = vmatprep.subr.mxu0 0.0
          %1015 = vmatpush1.msra.mxu0 0.0
          %1016 = vmatprep.subr.mxu0 0.0
          %1017 = vmatpush1.msra.mxu0 0.0
          %1018 = vmatprep.subr.mxu0 0.0
          %1019 = vmatpush1.msra.mxu0 0.0
          %1020 = vmatprep.subr.mxu0 0.0
          %1021 = vmatpush1.msra.mxu0 0.0
          %1022 = vmatprep.mubr.f32.mxu0 0.0
          %1023 = vmatmul.mubr.f32.gmra.mrb[0].mxu0 %v564
          %v1024 = vpop.f32.mrb[0].mxu0
          %v1025 = vadd.f32 %v956, %v1024
          %v1026 = vpop.f32.mrb[0].mxu0
          %1027 = vmatprep.mubr.f32.mxu0 0.0
          %1028 = vmatmul.mubr.f32.gmra.mrb[0].mxu0 %v567
          %v1029 = vpop.f32.mrb[0].mxu0
          %v1030 = vadd.f32 %v956, %v1029
          %v1031 = vpop.f32.mrb[0].mxu0
          %1032 = vdwg.mxu0
          %1035 = vrot.lane.b32.xlu0 %v1025, 120
          %v1036 = vpop.permute.xlu0 %1035
          %1037 = vrot.lane.b32.xlu0 %v1030, 120
          %v1038 = vpop.permute.xlu0 %1037
          %1041 = vrot.lane.b32.xlu0 %v1025, 112
          %v1042 = vpop.permute.xlu0 %1041
          %1043 = vrot.lane.b32.xlu0 %v1030, 112
          %v1044 = vpop.permute.xlu0 %1043
          %1047 = vrot.lane.b32.xlu0 %v1025, 104
          %v1048 = vpop.permute.xlu0 %1047
          %1049 = vrot.lane.b32.xlu0 %v1030, 104
          %v1050 = vpop.permute.xlu0 %1049
          %v1053 = vcombine.low %v1025, %v1042
          %v1054 = vcombine.high %v1025, %v1042
          %v1056 = vunpack.c.l.s4 1983009808
          %v1057 = vunpack.c.0.s8 %v1056
          %v1058 = vlaneseq
          %v1059 = vshrl.u32 %v1058, 7
          %v1060 = vsub.s32 %v1057, %v1059
          %v1061 = vrot.slane %v1053, %v1060
          %v1063 = vunpack.c.l.s4 1983009808
          %v1064 = vunpack.c.0.s8 %v1063
          %v1065 = vlaneseq
          %v1066 = vshrl.u32 %v1065, 7
          %v1067 = vsub.s32 %v1064, %v1066
          %v1068 = vrot.slane %v1054, %v1067
          %v1069 = vcombine.low %v1036, %v1048
          %v1070 = vcombine.high %v1036, %v1048
          %v1072 = vunpack.c.l.s4 1983009808
          %v1073 = vunpack.c.0.s8 %v1072
          %v1074 = vlaneseq
          %v1075 = vshrl.u32 %v1074, 7
          %v1076 = vsub.s32 %v1073, %v1075
          %v1077 = vrot.slane %v1069, %v1076
          %v1079 = vunpack.c.l.s4 1983009808
          %v1080 = vunpack.c.0.s8 %v1079
          %v1081 = vlaneseq
          %v1082 = vshrl.u32 %v1081, 7
          %v1083 = vsub.s32 %v1080, %v1082
          %v1084 = vrot.slane %v1070, %v1083
          %v1085 = vcombine.low %v1061, %v1077
          %v1086 = vcombine.high %v1061, %v1077
          %v1088 = vunpack.c.l.s4 1934713408
          %v1089 = vunpack.c.0.s8 %v1088
          %v1090 = vlaneseq
          %v1091 = vshrl.u32 %v1090, 7
          %v1092 = vsub.s32 %v1089, %v1091
          %v1093 = vrot.slane %v1085, %v1092
          %v1095 = vunpack.c.l.s4 1934713408
          %v1096 = vunpack.c.0.s8 %v1095
          %v1097 = vlaneseq
          %v1098 = vshrl.u32 %v1097, 7
          %v1099 = vsub.s32 %v1096, %v1098
          %v1100 = vrot.slane %v1086, %v1099
          %v1101 = vcombine.low %v1068, %v1084
          %v1102 = vcombine.high %v1068, %v1084
          %v1104 = vunpack.c.l.s4 1934713408
          %v1105 = vunpack.c.0.s8 %v1104
          %v1106 = vlaneseq
          %v1107 = vshrl.u32 %v1106, 7
          %v1108 = vsub.s32 %v1105, %v1107
          %v1109 = vrot.slane %v1101, %v1108
          %v1111 = vunpack.c.l.s4 1934713408
          %v1112 = vunpack.c.0.s8 %v1111
          %v1113 = vlaneseq
          %v1114 = vshrl.u32 %v1113, 7
          %v1115 = vsub.s32 %v1112, %v1114
          %v1116 = vrot.slane %v1102, %v1115
          %v1117 = vcombine.high %v1093, 0.0
          %v1118 = vcombine.high %v1100, 0.0
          %v1119 = vcombine.high %v1109, 0.0
          %v1120 = vcombine.high %v1116, 0.0
          %v1121 = vcombine.low %v1030, %v1044
          %v1122 = vcombine.high %v1030, %v1044
          %v1124 = vunpack.c.l.s4 1983009808
          %v1125 = vunpack.c.0.s8 %v1124
          %v1126 = vlaneseq
          %v1127 = vshrl.u32 %v1126, 7
          %v1128 = vsub.s32 %v1125, %v1127
          %v1129 = vrot.slane %v1121, %v1128
          %v1131 = vunpack.c.l.s4 1983009808
          %v1132 = vunpack.c.0.s8 %v1131
          %v1133 = vlaneseq
          %v1134 = vshrl.u32 %v1133, 7
          %v1135 = vsub.s32 %v1132, %v1134
          %v1136 = vrot.slane %v1122, %v1135
          %v1137 = vcombine.low %v1038, %v1050
          %v1138 = vcombine.high %v1038, %v1050
          %v1140 = vunpack.c.l.s4 1983009808
          %v1141 = vunpack.c.0.s8 %v1140
          %v1142 = vlaneseq
          %v1143 = vshrl.u32 %v1142, 7
          %v1144 = vsub.s32 %v1141, %v1143
          %v1145 = vrot.slane %v1137, %v1144
          %v1147 = vunpack.c.l.s4 1983009808
          %v1148 = vunpack.c.0.s8 %v1147
          %v1149 = vlaneseq
          %v1150 = vshrl.u32 %v1149, 7
          %v1151 = vsub.s32 %v1148, %v1150
          %v1152 = vrot.slane %v1138, %v1151
          %v1153 = vcombine.low %v1129, %v1145
          %v1154 = vcombine.high %v1129, %v1145
          %v1156 = vunpack.c.l.s4 1934713408
          %v1157 = vunpack.c.0.s8 %v1156
          %v1158 = vlaneseq
          %v1159 = vshrl.u32 %v1158, 7
          %v1160 = vsub.s32 %v1157, %v1159
          %v1161 = vrot.slane %v1153, %v1160
          %v1163 = vunpack.c.l.s4 1934713408
          %v1164 = vunpack.c.0.s8 %v1163
          %v1165 = vlaneseq
          %v1166 = vshrl.u32 %v1165, 7
          %v1167 = vsub.s32 %v1164, %v1166
          %v1168 = vrot.slane %v1154, %v1167
          %v1169 = vcombine.low %v1136, %v1152
          %v1170 = vcombine.high %v1136, %v1152
          %v1172 = vunpack.c.l.s4 1934713408
          %v1173 = vunpack.c.0.s8 %v1172
          %v1174 = vlaneseq
          %v1175 = vshrl.u32 %v1174, 7
          %v1176 = vsub.s32 %v1173, %v1175
          %v1177 = vrot.slane %v1169, %v1176
          %v1179 = vunpack.c.l.s4 1934713408
          %v1180 = vunpack.c.0.s8 %v1179
          %v1181 = vlaneseq
          %v1182 = vshrl.u32 %v1181, 7
          %v1183 = vsub.s32 %v1180, %v1182
          %v1184 = vrot.slane %v1170, %v1183
          %v1185 = vcombine.high %v1161, 0.0
          %v1186 = vcombine.high %v1168, 0.0
          %v1187 = vcombine.high %v1177, 0.0
          %v1188 = vcombine.high %v1184, 0.0
          %v1189 = vcombine.low %v1093, %v1100
          %v1191 = vunpack.c.l.s4 1983009808
          %v1192 = vunpack.c.0.s8 %v1191
          %v1193 = vlaneseq
          %v1194 = vshrl.u32 %v1193, 7
          %v1195 = vsub.s32 %v1192, %v1194
          %v1196 = vrot.slane %v1189, %v1195
          %v1197 = vcombine.low %v1117, %v1118
          %v1199 = vunpack.c.l.s4 1983009808
          %v1200 = vunpack.c.0.s8 %v1199
          %v1201 = vlaneseq
          %v1202 = vshrl.u32 %v1201, 7
          %v1203 = vsub.s32 %v1200, %v1202
          %v1204 = vrot.slane %v1197, %v1203
          %v1205 = vcombine.low %v1109, %v1116
          %v1207 = vunpack.c.l.s4 1983009808
          %v1208 = vunpack.c.0.s8 %v1207
          %v1209 = vlaneseq
          %v1210 = vshrl.u32 %v1209, 7
          %v1211 = vsub.s32 %v1208, %v1210
          %v1212 = vrot.slane %v1205, %v1211
          %v1213 = vcombine.low %v1119, %v1120
          %v1215 = vunpack.c.l.s4 1983009808
          %v1216 = vunpack.c.0.s8 %v1215
          %v1217 = vlaneseq
          %v1218 = vshrl.u32 %v1217, 7
          %v1219 = vsub.s32 %v1216, %v1218
          %v1220 = vrot.slane %v1213, %v1219
          %v1221 = vcombine.low %v1196, %v1204
          %v1222 = vcombine.high %v1196, %v1204
          %v1224 = vunpack.c.l.s4 1934713408
          %v1225 = vunpack.c.0.s8 %v1224
          %v1226 = vlaneseq
          %v1227 = vshrl.u32 %v1226, 7
          %v1228 = vsub.s32 %v1225, %v1227
          %v1229 = vrot.slane %v1221, %v1228
          %v1231 = vunpack.c.l.s4 1934713408
          %v1232 = vunpack.c.0.s8 %v1231
          %v1233 = vlaneseq
          %v1234 = vshrl.u32 %v1233, 7
          %v1235 = vsub.s32 %v1232, %v1234
          %v1236 = vrot.slane %v1222, %v1235
          %v1237 = vcombine.low %v1212, %v1220
          %v1238 = vcombine.high %v1212, %v1220
          %v1240 = vunpack.c.l.s4 1934713408
          %v1241 = vunpack.c.0.s8 %v1240
          %v1242 = vlaneseq
          %v1243 = vshrl.u32 %v1242, 7
          %v1244 = vsub.s32 %v1241, %v1243
          %v1245 = vrot.slane %v1237, %v1244
          %v1247 = vunpack.c.l.s4 1934713408
          %v1248 = vunpack.c.0.s8 %v1247
          %v1249 = vlaneseq
          %v1250 = vshrl.u32 %v1249, 7
          %v1251 = vsub.s32 %v1248, %v1250
          %v1252 = vrot.slane %v1238, %v1251
          %v1253 = vcombine.low %v1229, %v1245
          %v1254 = vcombine.high %v1229, %v1245
          %v1255 = vcombine.low %v1236, %v1252
          %v1256 = vcombine.high %v1236, %v1252
          %v1257 = vcombine.low %v1161, %v1168
          %v1259 = vunpack.c.l.s4 1983009808
          %v1260 = vunpack.c.0.s8 %v1259
          %v1261 = vlaneseq
          %v1262 = vshrl.u32 %v1261, 7
          %v1263 = vsub.s32 %v1260, %v1262
          %v1264 = vrot.slane %v1257, %v1263
          %v1265 = vcombine.low %v1185, %v1186
          %v1267 = vunpack.c.l.s4 1983009808
          %v1268 = vunpack.c.0.s8 %v1267
          %v1269 = vlaneseq
          %v1270 = vshrl.u32 %v1269, 7
          %v1271 = vsub.s32 %v1268, %v1270
          %v1272 = vrot.slane %v1265, %v1271
          %v1273 = vcombine.low %v1177, %v1184
          %v1275 = vunpack.c.l.s4 1983009808
          %v1276 = vunpack.c.0.s8 %v1275
          %v1277 = vlaneseq
          %v1278 = vshrl.u32 %v1277, 7
          %v1279 = vsub.s32 %v1276, %v1278
          %v1280 = vrot.slane %v1273, %v1279
          %v1281 = vcombine.low %v1187, %v1188
          %v1283 = vunpack.c.l.s4 1983009808
          %v1284 = vunpack.c.0.s8 %v1283
          %v1285 = vlaneseq
          %v1286 = vshrl.u32 %v1285, 7
          %v1287 = vsub.s32 %v1284, %v1286
          %v1288 = vrot.slane %v1281, %v1287
          %v1289 = vcombine.low %v1264, %v1272
          %v1290 = vcombine.high %v1264, %v1272
          %v1292 = vunpack.c.l.s4 1934713408
          %v1293 = vunpack.c.0.s8 %v1292
          %v1294 = vlaneseq
          %v1295 = vshrl.u32 %v1294, 7
          %v1296 = vsub.s32 %v1293, %v1295
          %v1297 = vrot.slane %v1289, %v1296
          %v1299 = vunpack.c.l.s4 1934713408
          %v1300 = vunpack.c.0.s8 %v1299
          %v1301 = vlaneseq
          %v1302 = vshrl.u32 %v1301, 7
          %v1303 = vsub.s32 %v1300, %v1302
          %v1304 = vrot.slane %v1290, %v1303
          %v1305 = vcombine.low %v1280, %v1288
          %v1306 = vcombine.high %v1280, %v1288
          %v1308 = vunpack.c.l.s4 1934713408
          %v1309 = vunpack.c.0.s8 %v1308
          %v1310 = vlaneseq
          %v1311 = vshrl.u32 %v1310, 7
          %v1312 = vsub.s32 %v1309, %v1311
          %v1313 = vrot.slane %v1305, %v1312
          %v1315 = vunpack.c.l.s4 1934713408
          %v1316 = vunpack.c.0.s8 %v1315
          %v1317 = vlaneseq
          %v1318 = vshrl.u32 %v1317, 7
          %v1319 = vsub.s32 %v1316, %v1318
          %v1320 = vrot.slane %v1306, %v1319
          %v1321 = vcombine.low %v1297, %v1313
          %v1322 = vcombine.high %v1297, %v1313
          %v1323 = vcombine.low %v1304, %v1320
          %v1324 = vcombine.high %v1304, %v1320
          %1325 = vst.msk [vmem:[#allocation3] sm:$0xff] %vm936, %v1253
          %1326 = vst.msk [vmem:[#allocation3 + $0x8] sm:$0xff] %vm936, %v1321
          %1327 = vst.msk [vmem:[#allocation3 + $0x10] sm:$0xff] %vm936, %v1254
          %1328 = vst.msk [vmem:[#allocation3 + $0x18] sm:$0xff] %vm936, %v1322
          %1329 = vst.msk [vmem:[#allocation3 + $0x20] sm:$0xff] %vm936, %v1255
          %1330 = vst.msk [vmem:[#allocation3 + $0x28] sm:$0xff] %vm936, %v1323
          %1331 = vst.msk [vmem:[#allocation3 + $0x30] sm:$0xff] %vm936, %v1256
          %1332 = vst.msk [vmem:[#allocation3 + $0x38] sm:$0xff] %vm936, %v1324
          %v1333 = vld [vmem:[%s479] sm:$0xff]
          %s1334 = scalar_lea.vmem [#allocation6], 160
          %v1335 = vld [vmem:[%s1334] sm:$0xff]
          %v1336 = vld [vmem:[%s1334 + $0x8] sm:$0xff]
          %v1337 = vld [vmem:[%s1334 + $0x10] sm:$0xff]
          %v1338 = vld [vmem:[%s1334 + $0x18] sm:$0xff]
          %s1339 = scalar_lea.vmem %s7, 5
          %v1340 = vld [vmem:[%s1339] sm:$0x1]
          %v1342 = vlaneseq
          %v1343 = vshrl.u32 %v1342, 7
          %v1344 = vsub.s32 0, %v1343
          %v1345 = vrot.slane %v1340, %v1344
          %v1348 = vsel %vm495, %v1333, 0
          %1350 = vmatprep.subr.mxu0 0.0
          %1351 = vmatpush1.msra.mxu0 %v1335
          %1352 = vmatprep.subr.mxu0 0.0
          %1353 = vmatpush1.msra.mxu0 %v1336
          %1354 = vmatprep.subr.mxu0 0.0
          %1355 = vmatpush1.msra.mxu0 %v1337
          %1356 = vmatprep.subr.mxu0 0.0
          %1357 = vmatpush1.msra.mxu0 %v1338
          %1358 = vmatprep.subr.mxu0 0.0
          %1359 = vmatpush1.msra.mxu0 0.0
          %1360 = vmatprep.subr.mxu0 0.0
          %1361 = vmatpush1.msra.mxu0 0.0
          %1362 = vmatprep.subr.mxu0 0.0
          %1363 = vmatpush1.msra.mxu0 0.0
          %1364 = vmatprep.subr.mxu0 0.0
          %1365 = vmatpush1.msra.mxu0 0.0
          %1366 = vmatprep.subr.mxu0 0.0
          %1367 = vmatpush1.msra.mxu0 0.0
          %1368 = vmatprep.subr.mxu0 0.0
          %1369 = vmatpush1.msra.mxu0 0.0
          %1370 = vmatprep.subr.mxu0 0.0
          %1371 = vmatpush1.msra.mxu0 0.0
          %1372 = vmatprep.subr.mxu0 0.0
          %1373 = vmatpush1.msra.mxu0 0.0
          %1374 = vmatprep.subr.mxu0 0.0
          %1375 = vmatpush1.msra.mxu0 0.0
          %1376 = vmatprep.subr.mxu0 0.0
          %1377 = vmatpush1.msra.mxu0 0.0
          %1378 = vmatprep.subr.mxu0 0.0
          %1379 = vmatpush1.msra.mxu0 0.0
          %1380 = vmatprep.subr.mxu0 0.0
          %1381 = vmatpush1.msra.mxu0 0.0
          %1382 = vmatprep.subr.mxu0 0.0
          %1383 = vmatpush1.msra.mxu0 0.0
          %1384 = vmatprep.subr.mxu0 0.0
          %1385 = vmatpush1.msra.mxu0 0.0
          %1386 = vmatprep.subr.mxu0 0.0
          %1387 = vmatpush1.msra.mxu0 0.0
          %1388 = vmatprep.subr.mxu0 0.0
          %1389 = vmatpush1.msra.mxu0 0.0
          %1390 = vmatprep.subr.mxu0 0.0
          %1391 = vmatpush1.msra.mxu0 0.0
          %1392 = vmatprep.subr.mxu0 0.0
          %1393 = vmatpush1.msra.mxu0 0.0
          %1394 = vmatprep.subr.mxu0 0.0
          %1395 = vmatpush1.msra.mxu0 0.0
          %1396 = vmatprep.subr.mxu0 0.0
          %1397 = vmatpush1.msra.mxu0 0.0
          %1398 = vmatprep.subr.mxu0 0.0
          %1399 = vmatpush1.msra.mxu0 0.0
          %1400 = vmatprep.subr.mxu0 0.0
          %1401 = vmatpush1.msra.mxu0 0.0
          %1402 = vmatprep.subr.mxu0 0.0
          %1403 = vmatpush1.msra.mxu0 0.0
          %1404 = vmatprep.subr.mxu0 0.0
          %1405 = vmatpush1.msra.mxu0 0.0
          %1406 = vmatprep.subr.mxu0 0.0
          %1407 = vmatpush1.msra.mxu0 0.0
          %1408 = vmatprep.subr.mxu0 0.0
          %1409 = vmatpush1.msra.mxu0 0.0
          %1410 = vmatprep.subr.mxu0 0.0
          %1411 = vmatpush1.msra.mxu0 0.0
          %1412 = vmatprep.subr.mxu0 0.0
          %1413 = vmatpush1.msra.mxu0 0.0
          %1414 = vmatprep.mubr.f32.mxu0 0.0
          %1415 = vmatmul.mubr.f32.gmra.mrb[0].mxu0 %v1348
          %v1416 = vpop.f32.mrb[0].mxu0
          %v1417 = vadd.f32 %v1345, %v1416
          %v1418 = vpop.f32.mrb[0].mxu0
          %1419 = vdwg.mxu0
          %1421 = vrot.lane.b32.xlu0 %v1417, 120
          %v1422 = vpop.permute.xlu0 %1421
          %1424 = vrot.lane.b32.xlu0 %v1417, 112
          %v1425 = vpop.permute.xlu0 %1424
          %1427 = vrot.lane.b32.xlu0 %v1417, 104
          %v1428 = vpop.permute.xlu0 %1427
          %v1430 = vcombine.low %v1417, %v1425
          %v1431 = vcombine.high %v1417, %v1425
          %v1433 = vunpack.c.l.s4 1983009808
          %v1434 = vunpack.c.0.s8 %v1433
          %v1435 = vlaneseq
          %v1436 = vshrl.u32 %v1435, 7
          %v1437 = vsub.s32 %v1434, %v1436
          %v1438 = vrot.slane %v1430, %v1437
          %v1440 = vunpack.c.l.s4 1983009808
          %v1441 = vunpack.c.0.s8 %v1440
          %v1442 = vlaneseq
          %v1443 = vshrl.u32 %v1442, 7
          %v1444 = vsub.s32 %v1441, %v1443
          %v1445 = vrot.slane %v1431, %v1444
          %v1446 = vcombine.low %v1422, %v1428
          %v1447 = vcombine.high %v1422, %v1428
          %v1449 = vunpack.c.l.s4 1983009808
          %v1450 = vunpack.c.0.s8 %v1449
          %v1451 = vlaneseq
          %v1452 = vshrl.u32 %v1451, 7
          %v1453 = vsub.s32 %v1450, %v1452
          %v1454 = vrot.slane %v1446, %v1453
          %v1456 = vunpack.c.l.s4 1983009808
          %v1457 = vunpack.c.0.s8 %v1456
          %v1458 = vlaneseq
          %v1459 = vshrl.u32 %v1458, 7
          %v1460 = vsub.s32 %v1457, %v1459
          %v1461 = vrot.slane %v1447, %v1460
          %v1462 = vcombine.low %v1438, %v1454
          %v1463 = vcombine.high %v1438, %v1454
          %v1465 = vunpack.c.l.s4 1934713408
          %v1466 = vunpack.c.0.s8 %v1465
          %v1467 = vlaneseq
          %v1468 = vshrl.u32 %v1467, 7
          %v1469 = vsub.s32 %v1466, %v1468
          %v1470 = vrot.slane %v1462, %v1469
          %v1472 = vunpack.c.l.s4 1934713408
          %v1473 = vunpack.c.0.s8 %v1472
          %v1474 = vlaneseq
          %v1475 = vshrl.u32 %v1474, 7
          %v1476 = vsub.s32 %v1473, %v1475
          %v1477 = vrot.slane %v1463, %v1476
          %v1478 = vcombine.low %v1445, %v1461
          %v1479 = vcombine.high %v1445, %v1461
          %v1481 = vunpack.c.l.s4 1934713408
          %v1482 = vunpack.c.0.s8 %v1481
          %v1483 = vlaneseq
          %v1484 = vshrl.u32 %v1483, 7
          %v1485 = vsub.s32 %v1482, %v1484
          %v1486 = vrot.slane %v1478, %v1485
          %v1488 = vunpack.c.l.s4 1934713408
          %v1489 = vunpack.c.0.s8 %v1488
          %v1490 = vlaneseq
          %v1491 = vshrl.u32 %v1490, 7
          %v1492 = vsub.s32 %v1489, %v1491
          %v1493 = vrot.slane %v1479, %v1492
          %v1494 = vcombine.high %v1470, 0.0
          %v1495 = vcombine.high %v1477, 0.0
          %v1496 = vcombine.high %v1486, 0.0
          %v1497 = vcombine.high %v1493, 0.0
          %v1498 = vcombine.low %v1470, %v1477
          %v1500 = vunpack.c.l.s4 1983009808
          %v1501 = vunpack.c.0.s8 %v1500
          %v1502 = vlaneseq
          %v1503 = vshrl.u32 %v1502, 7
          %v1504 = vsub.s32 %v1501, %v1503
          %v1505 = vrot.slane %v1498, %v1504
          %v1506 = vcombine.low %v1494, %v1495
          %v1508 = vunpack.c.l.s4 1983009808
          %v1509 = vunpack.c.0.s8 %v1508
          %v1510 = vlaneseq
          %v1511 = vshrl.u32 %v1510, 7
          %v1512 = vsub.s32 %v1509, %v1511
          %v1513 = vrot.slane %v1506, %v1512
          %v1514 = vcombine.low %v1486, %v1493
          %v1516 = vunpack.c.l.s4 1983009808
          %v1517 = vunpack.c.0.s8 %v1516
          %v1518 = vlaneseq
          %v1519 = vshrl.u32 %v1518, 7
          %v1520 = vsub.s32 %v1517, %v1519
          %v1521 = vrot.slane %v1514, %v1520
          %v1522 = vcombine.low %v1496, %v1497
          %v1524 = vunpack.c.l.s4 1983009808
          %v1525 = vunpack.c.0.s8 %v1524
          %v1526 = vlaneseq
          %v1527 = vshrl.u32 %v1526, 7
          %v1528 = vsub.s32 %v1525, %v1527
          %v1529 = vrot.slane %v1522, %v1528
          %v1530 = vcombine.low %v1505, %v1513
          %v1531 = vcombine.high %v1505, %v1513
          %v1533 = vunpack.c.l.s4 1934713408
          %v1534 = vunpack.c.0.s8 %v1533
          %v1535 = vlaneseq
          %v1536 = vshrl.u32 %v1535, 7
          %v1537 = vsub.s32 %v1534, %v1536
          %v1538 = vrot.slane %v1530, %v1537
          %v1540 = vunpack.c.l.s4 1934713408
          %v1541 = vunpack.c.0.s8 %v1540
          %v1542 = vlaneseq
          %v1543 = vshrl.u32 %v1542, 7
          %v1544 = vsub.s32 %v1541, %v1543
          %v1545 = vrot.slane %v1531, %v1544
          %v1546 = vcombine.low %v1521, %v1529
          %v1547 = vcombine.high %v1521, %v1529
          %v1549 = vunpack.c.l.s4 1934713408
          %v1550 = vunpack.c.0.s8 %v1549
          %v1551 = vlaneseq
          %v1552 = vshrl.u32 %v1551, 7
          %v1553 = vsub.s32 %v1550, %v1552
          %v1554 = vrot.slane %v1546, %v1553
          %v1556 = vunpack.c.l.s4 1934713408
          %v1557 = vunpack.c.0.s8 %v1556
          %v1558 = vlaneseq
          %v1559 = vshrl.u32 %v1558, 7
          %v1560 = vsub.s32 %v1557, %v1559
          %v1561 = vrot.slane %v1547, %v1560
          %v1562 = vcombine.low %v1538, %v1554
          %v1563 = vcombine.high %v1538, %v1554
          %v1564 = vcombine.low %v1545, %v1561
          %v1565 = vcombine.high %v1545, %v1561
          %1566 = vst.msk [vmem:[#allocation4] sm:$0xff] %vm936, %v1562
          %1567 = vst.msk [vmem:[#allocation4 + $0x8] sm:$0xff] %vm936, %v1563
          %1568 = vst.msk [vmem:[#allocation4 + $0x10] sm:$0xff] %vm936, %v1564
          %1569 = vst.msk [vmem:[#allocation4 + $0x18] sm:$0xff] %vm936, %v1565
          %s1570 = scalar_lea.vmem [#allocation6], 192
          %v1571 = vld [vmem:[%s1570] sm:$0xff]
          %v1572 = vld [vmem:[%s1570 + $0x8] sm:$0xff]
          %v1573 = vld [vmem:[%s1570 + $0x10] sm:$0xff]
          %v1574 = vld [vmem:[%s1570 + $0x18] sm:$0xff]
          %s1575 = scalar_lea.vmem %s7, 6
          %v1576 = vld [vmem:[%s1575] sm:$0x1]
          %v1578 = vlaneseq
          %v1579 = vshrl.u32 %v1578, 7
          %v1580 = vsub.s32 0, %v1579
          %v1581 = vrot.slane %v1576, %v1580
          %1583 = vmatprep.subr.mxu0 0.0
          %1584 = vmatpush1.msra.mxu0 %v1571
          %1585 = vmatprep.subr.mxu0 0.0
          %1586 = vmatpush1.msra.mxu0 %v1572
          %1587 = vmatprep.subr.mxu0 0.0
          %1588 = vmatpush1.msra.mxu0 %v1573
          %1589 = vmatprep.subr.mxu0 0.0
          %1590 = vmatpush1.msra.mxu0 %v1574
          %1591 = vmatprep.subr.mxu0 0.0
          %1592 = vmatpush1.msra.mxu0 0.0
          %1593 = vmatprep.subr.mxu0 0.0
          %1594 = vmatpush1.msra.mxu0 0.0
          %1595 = vmatprep.subr.mxu0 0.0
          %1596 = vmatpush1.msra.mxu0 0.0
          %1597 = vmatprep.subr.mxu0 0.0
          %1598 = vmatpush1.msra.mxu0 0.0
          %1599 = vmatprep.subr.mxu0 0.0
          %1600 = vmatpush1.msra.mxu0 0.0
          %1601 = vmatprep.subr.mxu0 0.0
          %1602 = vmatpush1.msra.mxu0 0.0
          %1603 = vmatprep.subr.mxu0 0.0
          %1604 = vmatpush1.msra.mxu0 0.0
          %1605 = vmatprep.subr.mxu0 0.0
          %1606 = vmatpush1.msra.mxu0 0.0
          %1607 = vmatprep.subr.mxu0 0.0
          %1608 = vmatpush1.msra.mxu0 0.0
          %1609 = vmatprep.subr.mxu0 0.0
          %1610 = vmatpush1.msra.mxu0 0.0
          %1611 = vmatprep.subr.mxu0 0.0
          %1612 = vmatpush1.msra.mxu0 0.0
          %1613 = vmatprep.subr.mxu0 0.0
          %1614 = vmatpush1.msra.mxu0 0.0
          %1615 = vmatprep.subr.mxu0 0.0
          %1616 = vmatpush1.msra.mxu0 0.0
          %1617 = vmatprep.subr.mxu0 0.0
          %1618 = vmatpush1.msra.mxu0 0.0
          %1619 = vmatprep.subr.mxu0 0.0
          %1620 = vmatpush1.msra.mxu0 0.0
          %1621 = vmatprep.subr.mxu0 0.0
          %1622 = vmatpush1.msra.mxu0 0.0
          %1623 = vmatprep.subr.mxu0 0.0
          %1624 = vmatpush1.msra.mxu0 0.0
          %1625 = vmatprep.subr.mxu0 0.0
          %1626 = vmatpush1.msra.mxu0 0.0
          %1627 = vmatprep.subr.mxu0 0.0
          %1628 = vmatpush1.msra.mxu0 0.0
          %1629 = vmatprep.subr.mxu0 0.0
          %1630 = vmatpush1.msra.mxu0 0.0
          %1631 = vmatprep.subr.mxu0 0.0
          %1632 = vmatpush1.msra.mxu0 0.0
          %1633 = vmatprep.subr.mxu0 0.0
          %1634 = vmatpush1.msra.mxu0 0.0
          %1635 = vmatprep.subr.mxu0 0.0
          %1636 = vmatpush1.msra.mxu0 0.0
          %1637 = vmatprep.subr.mxu0 0.0
          %1638 = vmatpush1.msra.mxu0 0.0
          %1639 = vmatprep.subr.mxu0 0.0
          %1640 = vmatpush1.msra.mxu0 0.0
          %1641 = vmatprep.subr.mxu0 0.0
          %1642 = vmatpush1.msra.mxu0 0.0
          %1643 = vmatprep.subr.mxu0 0.0
          %1644 = vmatpush1.msra.mxu0 0.0
          %1645 = vmatprep.subr.mxu0 0.0
          %1646 = vmatpush1.msra.mxu0 0.0
          %1647 = vmatprep.mubr.f32.mxu0 0.0
          %1648 = vmatmul.mubr.f32.gmra.mrb[0].mxu0 %v1348
          %v1649 = vpop.f32.mrb[0].mxu0
          %v1650 = vadd.f32 %v1581, %v1649
          %v1651 = vpop.f32.mrb[0].mxu0
          %1652 = vdwg.mxu0
          %1654 = vrot.lane.b32.xlu0 %v1650, 120
          %v1655 = vpop.permute.xlu0 %1654
          %1657 = vrot.lane.b32.xlu0 %v1650, 112
          %v1658 = vpop.permute.xlu0 %1657
          %1660 = vrot.lane.b32.xlu0 %v1650, 104
          %v1661 = vpop.permute.xlu0 %1660
          %v1663 = vcombine.low %v1650, %v1658
          %v1664 = vcombine.high %v1650, %v1658
          %v1666 = vunpack.c.l.s4 1983009808
          %v1667 = vunpack.c.0.s8 %v1666
          %v1668 = vlaneseq
          %v1669 = vshrl.u32 %v1668, 7
          %v1670 = vsub.s32 %v1667, %v1669
          %v1671 = vrot.slane %v1663, %v1670
          %v1673 = vunpack.c.l.s4 1983009808
          %v1674 = vunpack.c.0.s8 %v1673
          %v1675 = vlaneseq
          %v1676 = vshrl.u32 %v1675, 7
          %v1677 = vsub.s32 %v1674, %v1676
          %v1678 = vrot.slane %v1664, %v1677
          %v1679 = vcombine.low %v1655, %v1661
          %v1680 = vcombine.high %v1655, %v1661
          %v1682 = vunpack.c.l.s4 1983009808
          %v1683 = vunpack.c.0.s8 %v1682
          %v1684 = vlaneseq
          %v1685 = vshrl.u32 %v1684, 7
          %v1686 = vsub.s32 %v1683, %v1685
          %v1687 = vrot.slane %v1679, %v1686
          %v1689 = vunpack.c.l.s4 1983009808
          %v1690 = vunpack.c.0.s8 %v1689
          %v1691 = vlaneseq
          %v1692 = vshrl.u32 %v1691, 7
          %v1693 = vsub.s32 %v1690, %v1692
          %v1694 = vrot.slane %v1680, %v1693
          %v1695 = vcombine.low %v1671, %v1687
          %v1696 = vcombine.high %v1671, %v1687
          %v1698 = vunpack.c.l.s4 1934713408
          %v1699 = vunpack.c.0.s8 %v1698
          %v1700 = vlaneseq
          %v1701 = vshrl.u32 %v1700, 7
          %v1702 = vsub.s32 %v1699, %v1701
          %v1703 = vrot.slane %v1695, %v1702
          %v1705 = vunpack.c.l.s4 1934713408
          %v1706 = vunpack.c.0.s8 %v1705
          %v1707 = vlaneseq
          %v1708 = vshrl.u32 %v1707, 7
          %v1709 = vsub.s32 %v1706, %v1708
          %v1710 = vrot.slane %v1696, %v1709
          %v1711 = vcombine.low %v1678, %v1694
          %v1712 = vcombine.high %v1678, %v1694
          %v1714 = vunpack.c.l.s4 1934713408
          %v1715 = vunpack.c.0.s8 %v1714
          %v1716 = vlaneseq
          %v1717 = vshrl.u32 %v1716, 7
          %v1718 = vsub.s32 %v1715, %v1717
          %v1719 = vrot.slane %v1711, %v1718
          %v1721 = vunpack.c.l.s4 1934713408
          %v1722 = vunpack.c.0.s8 %v1721
          %v1723 = vlaneseq
          %v1724 = vshrl.u32 %v1723, 7
          %v1725 = vsub.s32 %v1722, %v1724
          %v1726 = vrot.slane %v1712, %v1725
          %v1727 = vcombine.high %v1703, 0.0
          %v1728 = vcombine.high %v1710, 0.0
          %v1729 = vcombine.high %v1719, 0.0
          %v1730 = vcombine.high %v1726, 0.0
          %v1731 = vcombine.low %v1703, %v1710
          %v1733 = vunpack.c.l.s4 1983009808
          %v1734 = vunpack.c.0.s8 %v1733
          %v1735 = vlaneseq
          %v1736 = vshrl.u32 %v1735, 7
          %v1737 = vsub.s32 %v1734, %v1736
          %v1738 = vrot.slane %v1731, %v1737
          %v1739 = vcombine.low %v1727, %v1728
          %v1741 = vunpack.c.l.s4 1983009808
          %v1742 = vunpack.c.0.s8 %v1741
          %v1743 = vlaneseq
          %v1744 = vshrl.u32 %v1743, 7
          %v1745 = vsub.s32 %v1742, %v1744
          %v1746 = vrot.slane %v1739, %v1745
          %v1747 = vcombine.low %v1719, %v1726
          %v1749 = vunpack.c.l.s4 1983009808
          %v1750 = vunpack.c.0.s8 %v1749
          %v1751 = vlaneseq
          %v1752 = vshrl.u32 %v1751, 7
          %v1753 = vsub.s32 %v1750, %v1752
          %v1754 = vrot.slane %v1747, %v1753
          %v1755 = vcombine.low %v1729, %v1730
          %v1757 = vunpack.c.l.s4 1983009808
          %v1758 = vunpack.c.0.s8 %v1757
          %v1759 = vlaneseq
          %v1760 = vshrl.u32 %v1759, 7
          %v1761 = vsub.s32 %v1758, %v1760
          %v1762 = vrot.slane %v1755, %v1761
          %v1763 = vcombine.low %v1738, %v1746
          %v1764 = vcombine.high %v1738, %v1746
          %v1766 = vunpack.c.l.s4 1934713408
          %v1767 = vunpack.c.0.s8 %v1766
          %v1768 = vlaneseq
          %v1769 = vshrl.u32 %v1768, 7
          %v1770 = vsub.s32 %v1767, %v1769
          %v1771 = vrot.slane %v1763, %v1770
          %v1773 = vunpack.c.l.s4 1934713408
          %v1774 = vunpack.c.0.s8 %v1773
          %v1775 = vlaneseq
          %v1776 = vshrl.u32 %v1775, 7
          %v1777 = vsub.s32 %v1774, %v1776
          %v1778 = vrot.slane %v1764, %v1777
          %v1779 = vcombine.low %v1754, %v1762
          %v1780 = vcombine.high %v1754, %v1762
          %v1782 = vunpack.c.l.s4 1934713408
          %v1783 = vunpack.c.0.s8 %v1782
          %v1784 = vlaneseq
          %v1785 = vshrl.u32 %v1784, 7
          %v1786 = vsub.s32 %v1783, %v1785
          %v1787 = vrot.slane %v1779, %v1786
          %v1789 = vunpack.c.l.s4 1934713408
          %v1790 = vunpack.c.0.s8 %v1789
          %v1791 = vlaneseq
          %v1792 = vshrl.u32 %v1791, 7
          %v1793 = vsub.s32 %v1790, %v1792
          %v1794 = vrot.slane %v1780, %v1793
          %v1795 = vcombine.low %v1771, %v1787
          %v1796 = vcombine.high %v1771, %v1787
          %v1797 = vcombine.low %v1778, %v1794
          %v1798 = vcombine.high %v1778, %v1794
          %1799 = vst.msk [vmem:[#allocation5] sm:$0xff] %vm936, %v1795
          %1800 = vst.msk [vmem:[#allocation5 + $0x8] sm:$0xff] %vm936, %v1796
          %1801 = vst.msk [vmem:[#allocation5 + $0x10] sm:$0xff] %vm936, %v1797
          %1802 = vst.msk [vmem:[#allocation5 + $0x18] sm:$0xff] %vm936, %v1798
        $region76: #{tpu_custom_call.1} parent=67 // pred_fallthru
          _
        %v1803 = vlaneseq
        %v1804 = vshrl.u32 %v1803, 7
        %v1805 = vstv %s486
        %v1806 = vadd.s32 %v1804, %v1805
        %v1807 = vlaneseq
        %v1808 = vand.u32 %v1807, 127
        %vm1809 = vcmp.ge.s32.totalorder %v1806, %v1808
        %v1810 = vsel %vm1809, 0.0, -1e+09
        %v1811 = vld [vmem:[%s482] sm:$0x1]
        %v1813 = vlaneseq
        %v1814 = vshrl.u32 %v1813, 7
        %v1815 = vsub.s32 0, %v1814
        %v1816 = vrot.slane %v1811, %v1815
        %v1818 = vadd.f32 %v1810, %v1816
        %v1819 = vld [vmem:[%s485] sm:$0x1]
        %s1820 = scalar_lea.vmem %s475, %s486
        %v1821 = vld [vmem:[%s1820] sm:$0xff]
        %v1822 = vld [vmem:[%s4] sm:$0x1]
        %v1823 = vld [vmem:[%s5] sm:$0x1]
        %vm1824 = vcmask 261120
        %v1825 = vsel %vm1824, %v1821, 0.0
        %1826 = vadd.xlane.f32.xlu0 %v1825
        %v1827 = vpop.xlane.xlu0 %1826
        %v1828 = vrcp.pop 32.0
        %v1829 = vmul.f32 %v1827, %v1828
        %v1830 = vsub.f32 %v1821, %v1829
        %v1831 = vmul.f32 %v1830, %v1830
        %v1832 = vsel %vm1824, %v1831, 0.0
        %1833 = vadd.xlane.f32.xlu0 %v1832
        %v1834 = vpop.xlane.xlu0 %1833
        %v1835 = vrcp.pop 31.0
        %v1836 = vmul.f32 %v1834, %v1835
        %v1837 = vlaneseq
        %v1838 = vshrl.u32 %v1837, 7
        %v1839 = vsub.s32 0, %v1838
        %v1840 = vrot.slane %v1822, %v1839
        %v1841 = vmul.f32 %v1840, %v1830
        %v1842 = vrsqrt.pop %v1836
        %v1843 = vmul.f32 %v1836, %v1842
        %vm1844 = vcmp.eq.f32.partialorder %v1836, inf
        %v1845 = vsel %vm1844, %v1836, %v1843
        %vm1846 = vcmp.eq.f32.partialorder %v1836, 0.0
        %v1847 = vand.u32 %v1836, 2147483648
        %v1848 = vsel %vm1846, %v1847, %v1845
        %v1849 = vadd.f32 %v1848, 1e-06
        %v1850 = vrcp.pop %v1849
        %v1851 = vmul.f32 %v1841, %v1850
        %v1852 = vlaneseq
        %v1853 = vshrl.u32 %v1852, 7
        %v1854 = vsub.s32 0, %v1853
        %v1855 = vrot.slane %v1823, %v1854
        %v1856 = vadd.f32 %v1851, %v1855
        %v1857 = vld [vmem:[#allocation6] sm:$0xff]
        %v1858 = vld [vmem:[#allocation6 + $0x8] sm:$0xff]
        %v1859 = vld [vmem:[#allocation6 + $0x10] sm:$0xff]
        %v1860 = vld [vmem:[#allocation6 + $0x18] sm:$0xff]
        %v1861 = vld [vmem:[%s7] sm:$0x1]
        %v1863 = vlaneseq
        %v1864 = vshrl.u32 %v1863, 7
        %v1865 = vsub.s32 0, %v1864
        %v1866 = vrot.slane %v1861, %v1865
        %v1869 = vsel %vm1824, %v1856, 0
        %1871 = vmatprep.subr.mxu0 0.0
        %1872 = vmatpush1.msra.mxu0 %v1857
        %1873 = vmatprep.subr.mxu0 0.0
        %1874 = vmatpush1.msra.mxu0 %v1858
        %1875 = vmatprep.subr.mxu0 0.0
        %1876 = vmatpush1.msra.mxu0 %v1859
        %1877 = vmatprep.subr.mxu0 0.0
        %1878 = vmatpush1.msra.mxu0 %v1860
        %1879 = vmatprep.subr.mxu0 0.0
        %1880 = vmatpush1.msra.mxu0 0.0
        %1881 = vmatprep.subr.mxu0 0.0
        %1882 = vmatpush1.msra.mxu0 0.0
        %1883 = vmatprep.subr.mxu0 0.0
        %1884 = vmatpush1.msra.mxu0 0.0
        %1885 = vmatprep.subr.mxu0 0.0
        %1886 = vmatpush1.msra.mxu0 0.0
        %1887 = vmatprep.subr.mxu0 0.0
        %1888 = vmatpush1.msra.mxu0 0.0
        %1889 = vmatprep.subr.mxu0 0.0
        %1890 = vmatpush1.msra.mxu0 0.0
        %1891 = vmatprep.subr.mxu0 0.0
        %1892 = vmatpush1.msra.mxu0 0.0
        %1893 = vmatprep.subr.mxu0 0.0
        %1894 = vmatpush1.msra.mxu0 0.0
        %1895 = vmatprep.subr.mxu0 0.0
        %1896 = vmatpush1.msra.mxu0 0.0
        %1897 = vmatprep.subr.mxu0 0.0
        %1898 = vmatpush1.msra.mxu0 0.0
        %1899 = vmatprep.subr.mxu0 0.0
        %1900 = vmatpush1.msra.mxu0 0.0
        %1901 = vmatprep.subr.mxu0 0.0
        %1902 = vmatpush1.msra.mxu0 0.0
        %1903 = vmatprep.subr.mxu0 0.0
        %1904 = vmatpush1.msra.mxu0 0.0
        %1905 = vmatprep.subr.mxu0 0.0
        %1906 = vmatpush1.msra.mxu0 0.0
        %1907 = vmatprep.subr.mxu0 0.0
        %1908 = vmatpush1.msra.mxu0 0.0
        %1909 = vmatprep.subr.mxu0 0.0
        %1910 = vmatpush1.msra.mxu0 0.0
        %1911 = vmatprep.subr.mxu0 0.0
        %1912 = vmatpush1.msra.mxu0 0.0
        %1913 = vmatprep.subr.mxu0 0.0
        %1914 = vmatpush1.msra.mxu0 0.0
        %1915 = vmatprep.subr.mxu0 0.0
        %1916 = vmatpush1.msra.mxu0 0.0
        %1917 = vmatprep.subr.mxu0 0.0
        %1918 = vmatpush1.msra.mxu0 0.0
        %1919 = vmatprep.subr.mxu0 0.0
        %1920 = vmatpush1.msra.mxu0 0.0
        %1921 = vmatprep.subr.mxu0 0.0
        %1922 = vmatpush1.msra.mxu0 0.0
        %1923 = vmatprep.subr.mxu0 0.0
        %1924 = vmatpush1.msra.mxu0 0.0
        %1925 = vmatprep.subr.mxu0 0.0
        %1926 = vmatpush1.msra.mxu0 0.0
        %1927 = vmatprep.subr.mxu0 0.0
        %1928 = vmatpush1.msra.mxu0 0.0
        %1929 = vmatprep.subr.mxu0 0.0
        %1930 = vmatpush1.msra.mxu0 0.0
        %1931 = vmatprep.subr.mxu0 0.0
        %1932 = vmatpush1.msra.mxu0 0.0
        %1933 = vmatprep.subr.mxu0 0.0
        %1934 = vmatpush1.msra.mxu0 0.0
        %1935 = vmatprep.mubr.f32.mxu0 0.0
        %1936 = vmatmul.mubr.f32.gmra.mrb[0].mxu0 %v1869
        %v1937 = vpop.f32.mrb[0].mxu0
        %v1938 = vadd.f32 %v1866, %v1937
        %v1939 = vpop.f32.mrb[0].mxu0
        %1940 = vdwg.mxu0
        %1942 = vrot.lane.b32.xlu0 %v1938, 120
        %v1943 = vpop.permute.xlu0 %1942
        %1945 = vrot.lane.b32.xlu0 %v1938, 112
        %v1946 = vpop.permute.xlu0 %1945
        %1948 = vrot.lane.b32.xlu0 %v1938, 104
        %v1949 = vpop.permute.xlu0 %1948
        %v1951 = vcombine.low %v1938, %v1946
        %v1952 = vcombine.high %v1938, %v1946
        %v1954 = vunpack.c.l.s4 1983009808
        %v1955 = vunpack.c.0.s8 %v1954
        %v1956 = vlaneseq
        %v1957 = vshrl.u32 %v1956, 7
        %v1958 = vsub.s32 %v1955, %v1957
        %v1959 = vrot.slane %v1951, %v1958
        %v1961 = vunpack.c.l.s4 1983009808
        %v1962 = vunpack.c.0.s8 %v1961
        %v1963 = vlaneseq
        %v1964 = vshrl.u32 %v1963, 7
        %v1965 = vsub.s32 %v1962, %v1964
        %v1966 = vrot.slane %v1952, %v1965
        %v1967 = vcombine.low %v1943, %v1949
        %v1968 = vcombine.high %v1943, %v1949
        %v1970 = vunpack.c.l.s4 1983009808
        %v1971 = vunpack.c.0.s8 %v1970
        %v1972 = vlaneseq
        %v1973 = vshrl.u32 %v1972, 7
        %v1974 = vsub.s32 %v1971, %v1973
        %v1975 = vrot.slane %v1967, %v1974
        %v1977 = vunpack.c.l.s4 1983009808
        %v1978 = vunpack.c.0.s8 %v1977
        %v1979 = vlaneseq
        %v1980 = vshrl.u32 %v1979, 7
        %v1981 = vsub.s32 %v1978, %v1980
        %v1982 = vrot.slane %v1968, %v1981
        %v1983 = vcombine.low %v1959, %v1975
        %v1984 = vcombine.high %v1959, %v1975
        %v1986 = vunpack.c.l.s4 1934713408
        %v1987 = vunpack.c.0.s8 %v1986
        %v1988 = vlaneseq
        %v1989 = vshrl.u32 %v1988, 7
        %v1990 = vsub.s32 %v1987, %v1989
        %v1991 = vrot.slane %v1983, %v1990
        %v1993 = vunpack.c.l.s4 1934713408
        %v1994 = vunpack.c.0.s8 %v1993
        %v1995 = vlaneseq
        %v1996 = vshrl.u32 %v1995, 7
        %v1997 = vsub.s32 %v1994, %v1996
        %v1998 = vrot.slane %v1984, %v1997
        %v1999 = vcombine.low %v1966, %v1982
        %v2000 = vcombine.high %v1966, %v1982
        %v2002 = vunpack.c.l.s4 1934713408
        %v2003 = vunpack.c.0.s8 %v2002
        %v2004 = vlaneseq
        %v2005 = vshrl.u32 %v2004, 7
        %v2006 = vsub.s32 %v2003, %v2005
        %v2007 = vrot.slane %v1999, %v2006
        %v2009 = vunpack.c.l.s4 1934713408
        %v2010 = vunpack.c.0.s8 %v2009
        %v2011 = vlaneseq
        %v2012 = vshrl.u32 %v2011, 7
        %v2013 = vsub.s32 %v2010, %v2012
        %v2014 = vrot.slane %v2000, %v2013
        %v2015 = vcombine.high %v1991, 0.0
        %v2016 = vcombine.high %v1998, 0.0
        %v2017 = vcombine.high %v2007, 0.0
        %v2018 = vcombine.high %v2014, 0.0
        %v2019 = vcombine.low %v1991, %v1998
        %v2021 = vunpack.c.l.s4 1983009808
        %v2022 = vunpack.c.0.s8 %v2021
        %v2023 = vlaneseq
        %v2024 = vshrl.u32 %v2023, 7
        %v2025 = vsub.s32 %v2022, %v2024
        %v2026 = vrot.slane %v2019, %v2025
        %v2027 = vcombine.low %v2015, %v2016
        %v2029 = vunpack.c.l.s4 1983009808
        %v2030 = vunpack.c.0.s8 %v2029
        %v2031 = vlaneseq
        %v2032 = vshrl.u32 %v2031, 7
        %v2033 = vsub.s32 %v2030, %v2032
        %v2034 = vrot.slane %v2027, %v2033
        %v2035 = vcombine.low %v2007, %v2014
        %v2037 = vunpack.c.l.s4 1983009808
        %v2038 = vunpack.c.0.s8 %v2037
        %v2039 = vlaneseq
        %v2040 = vshrl.u32 %v2039, 7
        %v2041 = vsub.s32 %v2038, %v2040
        %v2042 = vrot.slane %v2035, %v2041
        %v2043 = vcombine.low %v2017, %v2018
        %v2045 = vunpack.c.l.s4 1983009808
        %v2046 = vunpack.c.0.s8 %v2045
        %v2047 = vlaneseq
        %v2048 = vshrl.u32 %v2047, 7
        %v2049 = vsub.s32 %v2046, %v2048
        %v2050 = vrot.slane %v2043, %v2049
        %v2051 = vcombine.low %v2026, %v2034
        %v2052 = vcombine.high %v2026, %v2034
        %v2054 = vunpack.c.l.s4 1934713408
        %v2055 = vunpack.c.0.s8 %v2054
        %v2056 = vlaneseq
        %v2057 = vshrl.u32 %v2056, 7
        %v2058 = vsub.s32 %v2055, %v2057
        %v2059 = vrot.slane %v2051, %v2058
        %v2061 = vunpack.c.l.s4 1934713408
        %v2062 = vunpack.c.0.s8 %v2061
        %v2063 = vlaneseq
        %v2064 = vshrl.u32 %v2063, 7
        %v2065 = vsub.s32 %v2062, %v2064
        %v2066 = vrot.slane %v2052, %v2065
        %v2067 = vcombine.low %v2042, %v2050
        %v2068 = vcombine.high %v2042, %v2050
        %v2070 = vunpack.c.l.s4 1934713408
        %v2071 = vunpack.c.0.s8 %v2070
        %v2072 = vlaneseq
        %v2073 = vshrl.u32 %v2072, 7
        %v2074 = vsub.s32 %v2071, %v2073
        %v2075 = vrot.slane %v2067, %v2074
        %v2077 = vunpack.c.l.s4 1934713408
        %v2078 = vunpack.c.0.s8 %v2077
        %v2079 = vlaneseq
        %v2080 = vshrl.u32 %v2079, 7
        %v2081 = vsub.s32 %v2078, %v2080
        %v2082 = vrot.slane %v2068, %v2081
        %v2083 = vcombine.low %v2059, %v2075
        %v2084 = vcombine.high %v2059, %v2075
        %v2085 = vcombine.low %v2066, %v2082
        %v2086 = vcombine.high %v2066, %v2082
        %v2087 = vld [vmem:[#allocation2] sm:$0xff]
        %v2088 = vld [vmem:[#allocation2 + $0x8] sm:$0xff]
        %v2089 = vld [vmem:[#allocation2 + $0x10] sm:$0xff]
        %v2090 = vld [vmem:[#allocation2 + $0x18] sm:$0xff]
        %v2091 = vld [vmem:[#allocation2 + $0x20] sm:$0xff]
        %v2092 = vld [vmem:[#allocation2 + $0x28] sm:$0xff]
        %v2093 = vld [vmem:[#allocation2 + $0x30] sm:$0xff]
        %v2094 = vld [vmem:[#allocation2 + $0x38] sm:$0xff]
        %v2095 = vld [vmem:[#allocation3] sm:$0xff]
        %v2096 = vld [vmem:[#allocation3 + $0x8] sm:$0xff]
        %v2097 = vld [vmem:[#allocation3 + $0x10] sm:$0xff]
        %v2098 = vld [vmem:[#allocation3 + $0x18] sm:$0xff]
        %v2099 = vld [vmem:[#allocation3 + $0x20] sm:$0xff]
        %v2100 = vld [vmem:[#allocation3 + $0x28] sm:$0xff]
        %v2101 = vld [vmem:[#allocation3 + $0x30] sm:$0xff]
        %v2102 = vld [vmem:[#allocation3 + $0x38] sm:$0xff]
        %vm2103 = vcmask 64512
        %v2105 = vsel %vm2103, %v2083, 0
        %v2108 = vsel %vm2103, %v2087, 0
        %v2111 = vsel %vm2103, %v2088, 0
        %2113 = vmatprep.subr.mxu0 0.0
        %2114 = vmatpush1.xpose.msra.mxu0 %v2108
        %2115 = vmatprep.subr.mxu0 0.0
        %2116 = vmatpush1.xpose.msra.mxu0 %v2111
        %2117 = vmatprep.subr.mxu0 0.0
        %2118 = vmatpush1.xpose.msra.mxu0 0.0
        %2119 = vmatprep.subr.mxu0 0.0
        %2120 = vmatpush1.xpose.msra.mxu0 0.0
        %2121 = vmatprep.subr.mxu0 0.0
        %2122 = vmatpush1.xpose.msra.mxu0 0.0
        %2123 = vmatprep.subr.mxu0 0.0
        %2124 = vmatpush1.xpose.msra.mxu0 0.0
        %2125 = vmatprep.subr.mxu0 0.0
        %2126 = vmatpush1.xpose.msra.mxu0 0.0
        %2127 = vmatprep.subr.mxu0 0.0
        %2128 = vmatpush1.xpose.msra.mxu0 0.0
        %2129 = vmatprep.subr.mxu0 0.0
        %2130 = vmatpush1.xpose.msra.mxu0 0.0
        %2131 = vmatprep.subr.mxu0 0.0
        %2132 = vmatpush1.xpose.msra.mxu0 0.0
        %2133 = vmatprep.subr.mxu0 0.0
        %2134 = vmatpush1.xpose.msra.mxu0 0.0
        %2135 = vmatprep.subr.mxu0 0.0
        %2136 = vmatpush1.xpose.msra.mxu0 0.0
        %2137 = vmatprep.subr.mxu0 0.0
        %2138 = vmatpush1.xpose.msra.mxu0 0.0
        %2139 = vmatprep.subr.mxu0 0.0
        %2140 = vmatpush1.xpose.msra.mxu0 0.0
        %2141 = vmatprep.subr.mxu0 0.0
        %2142 = vmatpush1.xpose.msra.mxu0 0.0
        %2143 = vmatprep.subr.mxu0 0.0
        %2144 = vmatpush1.xpose.msra.mxu0 0.0
        %2145 = vmatprep.subr.mxu0 0.0
        %2146 = vmatpush1.xpose.msra.mxu0 0.0
        %2147 = vmatprep.subr.mxu0 0.0
        %2148 = vmatpush1.xpose.msra.mxu0 0.0
        %2149 = vmatprep.subr.mxu0 0.0
        %2150 = vmatpush1.xpose.msra.mxu0 0.0
        %2151 = vmatprep.subr.mxu0 0.0
        %2152 = vmatpush1.xpose.msra.mxu0 0.0
        %2153 = vmatprep.subr.mxu0 0.0
        %2154 = vmatpush1.xpose.msra.mxu0 0.0
        %2155 = vmatprep.subr.mxu0 0.0
        %2156 = vmatpush1.xpose.msra.mxu0 0.0
        %2157 = vmatprep.subr.mxu0 0.0
        %2158 = vmatpush1.xpose.msra.mxu0 0.0
        %2159 = vmatprep.subr.mxu0 0.0
        %2160 = vmatpush1.xpose.msra.mxu0 0.0
        %2161 = vmatprep.subr.mxu0 0.0
        %2162 = vmatpush1.xpose.msra.mxu0 0.0
        %2163 = vmatprep.subr.mxu0 0.0
        %2164 = vmatpush1.xpose.msra.mxu0 0.0
        %2165 = vmatprep.subr.mxu0 0.0
        %2166 = vmatpush1.xpose.msra.mxu0 0.0
        %2167 = vmatprep.subr.mxu0 0.0
        %2168 = vmatpush1.xpose.msra.mxu0 0.0
        %2169 = vmatprep.subr.mxu0 0.0
        %2170 = vmatpush1.xpose.msra.mxu0 0.0
        %2171 = vmatprep.subr.mxu0 0.0
        %2172 = vmatpush1.xpose.msra.mxu0 0.0
        %2173 = vmatprep.subr.mxu0 0.0
        %2174 = vmatpush1.xpose.msra.mxu0 0.0
        %2175 = vmatprep.subr.mxu0 0.0
        %2176 = vmatpush1.xpose.msra.mxu0 0.0
        %2177 = vmatprep.mubr.f32.mxu0 0.0
        %2178 = vmatmul.mubr.f32.gmra.mrb[0].mxu0 %v2105
        %v2179 = vpop.f32.mrb[0].mxu0
        %v2180 = vadd.f32 %v1818, %v2179
        %v2181 = vpop.f32.mrb[0].mxu0
        %2182 = vdwg.mxu0
        %v2184 = vsel %vm2103, %v2084, 0
        %v2187 = vsel %vm2103, %v2089, 0
        %v2190 = vsel %vm2103, %v2090, 0
        %2192 = vmatprep.subr.mxu0 0.0
        %2193 = vmatpush1.xpose.msra.mxu0 %v2187
        %2194 = vmatprep.subr.mxu0 0.0
        %2195 = vmatpush1.xpose.msra.mxu0 %v2190
        %2196 = vmatprep.subr.mxu0 0.0
        %2197 = vmatpush1.xpose.msra.mxu0 0.0
        %2198 = vmatprep.subr.mxu0 0.0
        %2199 = vmatpush1.xpose.msra.mxu0 0.0
        %2200 = vmatprep.subr.mxu0 0.0
        %2201 = vmatpush1.xpose.msra.mxu0 0.0
        %2202 = vmatprep.subr.mxu0 0.0
        %2203 = vmatpush1.xpose.msra.mxu0 0.0
        %2204 = vmatprep.subr.mxu0 0.0
        %2205 = vmatpush1.xpose.msra.mxu0 0.0
        %2206 = vmatprep.subr.mxu0 0.0
        %2207 = vmatpush1.xpose.msra.mxu0 0.0
        %2208 = vmatprep.subr.mxu0 0.0
        %2209 = vmatpush1.xpose.msra.mxu0 0.0
        %2210 = vmatprep.subr.mxu0 0.0
        %2211 = vmatpush1.xpose.msra.mxu0 0.0
        %2212 = vmatprep.subr.mxu0 0.0
        %2213 = vmatpush1.xpose.msra.mxu0 0.0
        %2214 = vmatprep.subr.mxu0 0.0
        %2215 = vmatpush1.xpose.msra.mxu0 0.0
        %2216 = vmatprep.subr.mxu0 0.0
        %2217 = vmatpush1.xpose.msra.mxu0 0.0
        %2218 = vmatprep.subr.mxu0 0.0
        %2219 = vmatpush1.xpose.msra.mxu0 0.0
        %2220 = vmatprep.subr.mxu0 0.0
        %2221 = vmatpush1.xpose.msra.mxu0 0.0
        %2222 = vmatprep.subr.mxu0 0.0
        %2223 = vmatpush1.xpose.msra.mxu0 0.0
        %2224 = vmatprep.subr.mxu0 0.0
        %2225 = vmatpush1.xpose.msra.mxu0 0.0
        %2226 = vmatprep.subr.mxu0 0.0
        %2227 = vmatpush1.xpose.msra.mxu0 0.0
        %2228 = vmatprep.subr.mxu0 0.0
        %2229 = vmatpush1.xpose.msra.mxu0 0.0
        %2230 = vmatprep.subr.mxu0 0.0
        %2231 = vmatpush1.xpose.msra.mxu0 0.0
        %2232 = vmatprep.subr.mxu0 0.0
        %2233 = vmatpush1.xpose.msra.mxu0 0.0
        %2234 = vmatprep.subr.mxu0 0.0
        %2235 = vmatpush1.xpose.msra.mxu0 0.0
        %2236 = vmatprep.subr.mxu0 0.0
        %2237 = vmatpush1.xpose.msra.mxu0 0.0
        %2238 = vmatprep.subr.mxu0 0.0
        %2239 = vmatpush1.xpose.msra.mxu0 0.0
        %2240 = vmatprep.subr.mxu0 0.0
        %2241 = vmatpush1.xpose.msra.mxu0 0.0
        %2242 = vmatprep.subr.mxu0 0.0
        %2243 = vmatpush1.xpose.msra.mxu0 0.0
        %2244 = vmatprep.subr.mxu0 0.0
        %2245 = vmatpush1.xpose.msra.mxu0 0.0
        %2246 = vmatprep.subr.mxu0 0.0
        %2247 = vmatpush1.xpose.msra.mxu0 0.0
        %2248 = vmatprep.subr.mxu0 0.0
        %2249 = vmatpush1.xpose.msra.mxu0 0.0
        %2250 = vmatprep.subr.mxu0 0.0
        %2251 = vmatpush1.xpose.msra.mxu0 0.0
        %2252 = vmatprep.subr.mxu0 0.0
        %2253 = vmatpush1.xpose.msra.mxu0 0.0
        %2254 = vmatprep.subr.mxu0 0.0
        %2255 = vmatpush1.xpose.msra.mxu0 0.0
        %2256 = vmatprep.mubr.f32.mxu0 0.0
        %2257 = vmatmul.mubr.f32.gmra.mrb[0].mxu0 %v2184
        %v2258 = vpop.f32.mrb[0].mxu0
        %v2259 = vadd.f32 %v1818, %v2258
        %v2260 = vpop.f32.mrb[0].mxu0
        %2261 = vdwg.mxu0
        %v2263 = vsel %vm2103, %v2085, 0
        %v2266 = vsel %vm2103, %v2091, 0
        %v2269 = vsel %vm2103, %v2092, 0
        %2271 = vmatprep.subr.mxu0 0.0
        %2272 = vmatpush1.xpose.msra.mxu0 %v2266
        %2273 = vmatprep.subr.mxu0 0.0
        %2274 = vmatpush1.xpose.msra.mxu0 %v2269
        %2275 = vmatprep.subr.mxu0 0.0
        %2276 = vmatpush1.xpose.msra.mxu0 0.0
        %2277 = vmatprep.subr.mxu0 0.0
        %2278 = vmatpush1.xpose.msra.mxu0 0.0
        %2279 = vmatprep.subr.mxu0 0.0
        %2280 = vmatpush1.xpose.msra.mxu0 0.0
        %2281 = vmatprep.subr.mxu0 0.0
        %2282 = vmatpush1.xpose.msra.mxu0 0.0
        %2283 = vmatprep.subr.mxu0 0.0
        %2284 = vmatpush1.xpose.msra.mxu0 0.0
        %2285 = vmatprep.subr.mxu0 0.0
        %2286 = vmatpush1.xpose.msra.mxu0 0.0
        %2287 = vmatprep.subr.mxu0 0.0
        %2288 = vmatpush1.xpose.msra.mxu0 0.0
        %2289 = vmatprep.subr.mxu0 0.0
        %2290 = vmatpush1.xpose.msra.mxu0 0.0
        %2291 = vmatprep.subr.mxu0 0.0
        %2292 = vmatpush1.xpose.msra.mxu0 0.0
        %2293 = vmatprep.subr.mxu0 0.0
        %2294 = vmatpush1.xpose.msra.mxu0 0.0
        %2295 = vmatprep.subr.mxu0 0.0
        %2296 = vmatpush1.xpose.msra.mxu0 0.0
        %2297 = vmatprep.subr.mxu0 0.0
        %2298 = vmatpush1.xpose.msra.mxu0 0.0
        %2299 = vmatprep.subr.mxu0 0.0
        %2300 = vmatpush1.xpose.msra.mxu0 0.0
        %2301 = vmatprep.subr.mxu0 0.0
        %2302 = vmatpush1.xpose.msra.mxu0 0.0
        %2303 = vmatprep.subr.mxu0 0.0
        %2304 = vmatpush1.xpose.msra.mxu0 0.0
        %2305 = vmatprep.subr.mxu0 0.0
        %2306 = vmatpush1.xpose.msra.mxu0 0.0
        %2307 = vmatprep.subr.mxu0 0.0
        %2308 = vmatpush1.xpose.msra.mxu0 0.0
        %2309 = vmatprep.subr.mxu0 0.0
        %2310 = vmatpush1.xpose.msra.mxu0 0.0
        %2311 = vmatprep.subr.mxu0 0.0
        %2312 = vmatpush1.xpose.msra.mxu0 0.0
        %2313 = vmatprep.subr.mxu0 0.0
        %2314 = vmatpush1.xpose.msra.mxu0 0.0
        %2315 = vmatprep.subr.mxu0 0.0
        %2316 = vmatpush1.xpose.msra.mxu0 0.0
        %2317 = vmatprep.subr.mxu0 0.0
        %2318 = vmatpush1.xpose.msra.mxu0 0.0
        %2319 = vmatprep.subr.mxu0 0.0
        %2320 = vmatpush1.xpose.msra.mxu0 0.0
        %2321 = vmatprep.subr.mxu0 0.0
        %2322 = vmatpush1.xpose.msra.mxu0 0.0
        %2323 = vmatprep.subr.mxu0 0.0
        %2324 = vmatpush1.xpose.msra.mxu0 0.0
        %2325 = vmatprep.subr.mxu0 0.0
        %2326 = vmatpush1.xpose.msra.mxu0 0.0
        %2327 = vmatprep.subr.mxu0 0.0
        %2328 = vmatpush1.xpose.msra.mxu0 0.0
        %2329 = vmatprep.subr.mxu0 0.0
        %2330 = vmatpush1.xpose.msra.mxu0 0.0
        %2331 = vmatprep.subr.mxu0 0.0
        %2332 = vmatpush1.xpose.msra.mxu0 0.0
        %2333 = vmatprep.subr.mxu0 0.0
        %2334 = vmatpush1.xpose.msra.mxu0 0.0
        %2335 = vmatprep.mubr.f32.mxu0 0.0
        %2336 = vmatmul.mubr.f32.gmra.mrb[0].mxu0 %v2263
        %v2337 = vpop.f32.mrb[0].mxu0
        %v2338 = vadd.f32 %v1818, %v2337
        %v2339 = vpop.f32.mrb[0].mxu0
        %2340 = vdwg.mxu0
        %v2342 = vsel %vm2103, %v2086, 0
        %v2345 = vsel %vm2103, %v2093, 0
        %v2348 = vsel %vm2103, %v2094, 0
        %2350 = vmatprep.subr.mxu0 0.0
        %2351 = vmatpush1.xpose.msra.mxu0 %v2345
        %2352 = vmatprep.subr.mxu0 0.0
        %2353 = vmatpush1.xpose.msra.mxu0 %v2348
        %2354 = vmatprep.subr.mxu0 0.0
        %2355 = vmatpush1.xpose.msra.mxu0 0.0
        %2356 = vmatprep.subr.mxu0 0.0
        %2357 = vmatpush1.xpose.msra.mxu0 0.0
        %2358 = vmatprep.subr.mxu0 0.0
        %2359 = vmatpush1.xpose.msra.mxu0 0.0
        %2360 = vmatprep.subr.mxu0 0.0
        %2361 = vmatpush1.xpose.msra.mxu0 0.0
        %2362 = vmatprep.subr.mxu0 0.0
        %2363 = vmatpush1.xpose.msra.mxu0 0.0
        %2364 = vmatprep.subr.mxu0 0.0
        %2365 = vmatpush1.xpose.msra.mxu0 0.0
        %2366 = vmatprep.subr.mxu0 0.0
        %2367 = vmatpush1.xpose.msra.mxu0 0.0
        %2368 = vmatprep.subr.mxu0 0.0
        %2369 = vmatpush1.xpose.msra.mxu0 0.0
        %2370 = vmatprep.subr.mxu0 0.0
        %2371 = vmatpush1.xpose.msra.mxu0 0.0
        %2372 = vmatprep.subr.mxu0 0.0
        %2373 = vmatpush1.xpose.msra.mxu0 0.0
        %2374 = vmatprep.subr.mxu0 0.0
        %2375 = vmatpush1.xpose.msra.mxu0 0.0
        %2376 = vmatprep.subr.mxu0 0.0
        %2377 = vmatpush1.xpose.msra.mxu0 0.0
        %2378 = vmatprep.subr.mxu0 0.0
        %2379 = vmatpush1.xpose.msra.mxu0 0.0
        %2380 = vmatprep.subr.mxu0 0.0
        %2381 = vmatpush1.xpose.msra.mxu0 0.0
        %2382 = vmatprep.subr.mxu0 0.0
        %2383 = vmatpush1.xpose.msra.mxu0 0.0
        %2384 = vmatprep.subr.mxu0 0.0
        %2385 = vmatpush1.xpose.msra.mxu0 0.0
        %2386 = vmatprep.subr.mxu0 0.0
        %2387 = vmatpush1.xpose.msra.mxu0 0.0
        %2388 = vmatprep.subr.mxu0 0.0
        %2389 = vmatpush1.xpose.msra.mxu0 0.0
        %2390 = vmatprep.subr.mxu0 0.0
        %2391 = vmatpush1.xpose.msra.mxu0 0.0
        %2392 = vmatprep.subr.mxu0 0.0
        %2393 = vmatpush1.xpose.msra.mxu0 0.0
        %2394 = vmatprep.subr.mxu0 0.0
        %2395 = vmatpush1.xpose.msra.mxu0 0.0
        %2396 = vmatprep.subr.mxu0 0.0
        %2397 = vmatpush1.xpose.msra.mxu0 0.0
        %2398 = vmatprep.subr.mxu0 0.0
        %2399 = vmatpush1.xpose.msra.mxu0 0.0
        %2400 = vmatprep.subr.mxu0 0.0
        %2401 = vmatpush1.xpose.msra.mxu0 0.0
        %2402 = vmatprep.subr.mxu0 0.0
        %2403 = vmatpush1.xpose.msra.mxu0 0.0
        %2404 = vmatprep.subr.mxu0 0.0
        %2405 = vmatpush1.xpose.msra.mxu0 0.0
        %2406 = vmatprep.subr.mxu0 0.0
        %2407 = vmatpush1.xpose.msra.mxu0 0.0
        %2408 = vmatprep.subr.mxu0 0.0
        %2409 = vmatpush1.xpose.msra.mxu0 0.0
        %2410 = vmatprep.subr.mxu0 0.0
        %2411 = vmatpush1.xpose.msra.mxu0 0.0
        %2412 = vmatprep.subr.mxu0 0.0
        %2413 = vmatpush1.xpose.msra.mxu0 0.0
        %2414 = vmatprep.mubr.f32.mxu0 0.0
        %2415 = vmatmul.mubr.f32.gmra.mrb[0].mxu0 %v2342
        %v2416 = vpop.f32.mrb[0].mxu0
        %v2417 = vadd.f32 %v1818, %v2416
        %v2418 = vpop.f32.mrb[0].mxu0
        %2419 = vdwg.mxu0
        %vm2420 = vcmask 130048
        %v2421 = vsel %vm2420, %v2180, -inf
        %2422 = vmax.xlane.f32.xlu0 %v2421
        %v2423 = vpop.xlane.xlu0 %2422
        %v2424 = vsel %vm2420, %v2259, -inf
        %2425 = vmax.xlane.f32.xlu0 %v2424
        %v2426 = vpop.xlane.xlu0 %2425
        %v2427 = vsel %vm2420, %v2338, -inf
        %2428 = vmax.xlane.f32.xlu0 %v2427
        %v2429 = vpop.xlane.xlu0 %2428
        %v2430 = vsel %vm2420, %v2417, -inf
        %2431 = vmax.xlane.f32.xlu0 %v2430
        %v2432 = vpop.xlane.xlu0 %2431
        %v2433 = vsub.f32 %v2180, %v2423
        %v2434 = vsub.f32 %v2259, %v2426
        %v2435 = vsub.f32 %v2338, %v2429
        %v2436 = vsub.f32 %v2417, %v2432
        %v2437 = vmul.f32 %v2433, 1.442695
        %v2438 = vpow.pop %v2437
        %v2439 = vmul.f32 %v2434, 1.442695
        %v2440 = vpow.pop %v2439
        %v2441 = vmul.f32 %v2435, 1.442695
        %v2442 = vpow.pop %v2441
        %v2443 = vmul.f32 %v2436, 1.442695
        %v2444 = vpow.pop %v2443
        %v2445 = vsel %vm2420, %v2438, 0.0
        %2446 = vadd.xlane.f32.xlu0 %v2445
        %v2447 = vpop.xlane.xlu0 %2446
        %v2448 = vsel %vm2420, %v2440, 0.0
        %2449 = vadd.xlane.f32.xlu0 %v2448
        %v2450 = vpop.xlane.xlu0 %2449
        %v2451 = vsel %vm2420, %v2442, 0.0
        %2452 = vadd.xlane.f32.xlu0 %v2451
        %v2453 = vpop.xlane.xlu0 %2452
        %v2454 = vsel %vm2420, %v2444, 0.0
        %2455 = vadd.xlane.f32.xlu0 %v2454
        %v2456 = vpop.xlane.xlu0 %2455
        %v2457 = vrcp.pop %v2447
        %v2458 = vmul.f32 %v2438, %v2457
        %v2459 = vrcp.pop %v2450
        %v2460 = vmul.f32 %v2440, %v2459
        %v2461 = vrcp.pop %v2453
        %v2462 = vmul.f32 %v2442, %v2461
        %v2463 = vrcp.pop %v2456
        %v2464 = vmul.f32 %v2444, %v2463
        %v2466 = vsel %vm2420, %v2458, 0
        %2468 = vmatprep.subr.mxu0 0.0
        %2469 = vmatpush1.msra.mxu0 %v2095
        %2470 = vmatprep.subr.mxu0 0.0
        %2471 = vmatpush1.msra.mxu0 %v2096
        %2472 = vmatprep.subr.mxu0 0.0
        %2473 = vmatpush1.msra.mxu0 0.0
        %2474 = vmatprep.subr.mxu0 0.0
        %2475 = vmatpush1.msra.mxu0 0.0
        %2476 = vmatprep.subr.mxu0 0.0
        %2477 = vmatpush1.msra.mxu0 0.0
        %2478 = vmatprep.subr.mxu0 0.0
        %2479 = vmatpush1.msra.mxu0 0.0
        %2480 = vmatprep.subr.mxu0 0.0
        %2481 = vmatpush1.msra.mxu0 0.0
        %2482 = vmatprep.subr.mxu0 0.0
        %2483 = vmatpush1.msra.mxu0 0.0
        %2484 = vmatprep.subr.mxu0 0.0
        %2485 = vmatpush1.msra.mxu0 0.0
        %2486 = vmatprep.subr.mxu0 0.0
        %2487 = vmatpush1.msra.mxu0 0.0
        %2488 = vmatprep.subr.mxu0 0.0
        %2489 = vmatpush1.msra.mxu0 0.0
        %2490 = vmatprep.subr.mxu0 0.0
        %2491 = vmatpush1.msra.mxu0 0.0
        %2492 = vmatprep.subr.mxu0 0.0
        %2493 = vmatpush1.msra.mxu0 0.0
        %2494 = vmatprep.subr.mxu0 0.0
        %2495 = vmatpush1.msra.mxu0 0.0
        %2496 = vmatprep.subr.mxu0 0.0
        %2497 = vmatpush1.msra.mxu0 0.0
        %2498 = vmatprep.subr.mxu0 0.0
        %2499 = vmatpush1.msra.mxu0 0.0
        %2500 = vmatprep.subr.mxu0 0.0
        %2501 = vmatpush1.msra.mxu0 0.0
        %2502 = vmatprep.subr.mxu0 0.0
        %2503 = vmatpush1.msra.mxu0 0.0
        %2504 = vmatprep.subr.mxu0 0.0
        %2505 = vmatpush1.msra.mxu0 0.0
        %2506 = vmatprep.subr.mxu0 0.0
        %2507 = vmatpush1.msra.mxu0 0.0
        %2508 = vmatprep.subr.mxu0 0.0
        %2509 = vmatpush1.msra.mxu0 0.0
        %2510 = vmatprep.subr.mxu0 0.0
        %2511 = vmatpush1.msra.mxu0 0.0
        %2512 = vmatprep.subr.mxu0 0.0
        %2513 = vmatpush1.msra.mxu0 0.0
        %2514 = vmatprep.subr.mxu0 0.0
        %2515 = vmatpush1.msra.mxu0 0.0
        %2516 = vmatprep.subr.mxu0 0.0
        %2517 = vmatpush1.msra.mxu0 0.0
        %2518 = vmatprep.subr.mxu0 0.0
        %2519 = vmatpush1.msra.mxu0 0.0
        %2520 = vmatprep.subr.mxu0 0.0
        %2521 = vmatpush1.msra.mxu0 0.0
        %2522 = vmatprep.subr.mxu0 0.0
        %2523 = vmatpush1.msra.mxu0 0.0
        %2524 = vmatprep.subr.mxu0 0.0
        %2525 = vmatpush1.msra.mxu0 0.0
        %2526 = vmatprep.subr.mxu0 0.0
        %2527 = vmatpush1.msra.mxu0 0.0
        %2528 = vmatprep.subr.mxu0 0.0
        %2529 = vmatpush1.msra.mxu0 0.0
        %2530 = vmatprep.subr.mxu0 0.0
        %2531 = vmatpush1.msra.mxu0 0.0
        %2532 = vmatprep.mubr.f32.mxu0 0.0
        %2533 = vmatmul.mubr.f32.gmra.mrb[0].mxu0 %v2466
        %v2534 = vpop.f32.mrb[0].mxu0
        %v2535 = vadd.f32 0.0, %v2534
        %v2536 = vpop.f32.mrb[0].mxu0
        %2537 = vdwg.mxu0
        %v2539 = vsel %vm2420, %v2460, 0
        %2541 = vmatprep.subr.mxu0 0.0
        %2542 = vmatpush1.msra.mxu0 %v2097
        %2543 = vmatprep.subr.mxu0 0.0
        %2544 = vmatpush1.msra.mxu0 %v2098
        %2545 = vmatprep.subr.mxu0 0.0
        %2546 = vmatpush1.msra.mxu0 0.0
        %2547 = vmatprep.subr.mxu0 0.0
        %2548 = vmatpush1.msra.mxu0 0.0
        %2549 = vmatprep.subr.mxu0 0.0
        %2550 = vmatpush1.msra.mxu0 0.0
        %2551 = vmatprep.subr.mxu0 0.0
        %2552 = vmatpush1.msra.mxu0 0.0
        %2553 = vmatprep.subr.mxu0 0.0
        %2554 = vmatpush1.msra.mxu0 0.0
        %2555 = vmatprep.subr.mxu0 0.0
        %2556 = vmatpush1.msra.mxu0 0.0
        %2557 = vmatprep.subr.mxu0 0.0
        %2558 = vmatpush1.msra.mxu0 0.0
        %2559 = vmatprep.subr.mxu0 0.0
        %2560 = vmatpush1.msra.mxu0 0.0
        %2561 = vmatprep.subr.mxu0 0.0
        %2562 = vmatpush1.msra.mxu0 0.0
        %2563 = vmatprep.subr.mxu0 0.0
        %2564 = vmatpush1.msra.mxu0 0.0
        %2565 = vmatprep.subr.mxu0 0.0
        %2566 = vmatpush1.msra.mxu0 0.0
        %2567 = vmatprep.subr.mxu0 0.0
        %2568 = vmatpush1.msra.mxu0 0.0
        %2569 = vmatprep.subr.mxu0 0.0
        %2570 = vmatpush1.msra.mxu0 0.0
        %2571 = vmatprep.subr.mxu0 0.0
        %2572 = vmatpush1.msra.mxu0 0.0
        %2573 = vmatprep.subr.mxu0 0.0
        %2574 = vmatpush1.msra.mxu0 0.0
        %2575 = vmatprep.subr.mxu0 0.0
        %2576 = vmatpush1.msra.mxu0 0.0
        %2577 = vmatprep.subr.mxu0 0.0
        %2578 = vmatpush1.msra.mxu0 0.0
        %2579 = vmatprep.subr.mxu0 0.0
        %2580 = vmatpush1.msra.mxu0 0.0
        %2581 = vmatprep.subr.mxu0 0.0
        %2582 = vmatpush1.msra.mxu0 0.0
        %2583 = vmatprep.subr.mxu0 0.0
        %2584 = vmatpush1.msra.mxu0 0.0
        %2585 = vmatprep.subr.mxu0 0.0
        %2586 = vmatpush1.msra.mxu0 0.0
        %2587 = vmatprep.subr.mxu0 0.0
        %2588 = vmatpush1.msra.mxu0 0.0
        %2589 = vmatprep.subr.mxu0 0.0
        %2590 = vmatpush1.msra.mxu0 0.0
        %2591 = vmatprep.subr.mxu0 0.0
        %2592 = vmatpush1.msra.mxu0 0.0
        %2593 = vmatprep.subr.mxu0 0.0
        %2594 = vmatpush1.msra.mxu0 0.0
        %2595 = vmatprep.subr.mxu0 0.0
        %2596 = vmatpush1.msra.mxu0 0.0
        %2597 = vmatprep.subr.mxu0 0.0
        %2598 = vmatpush1.msra.mxu0 0.0
        %2599 = vmatprep.subr.mxu0 0.0
        %2600 = vmatpush1.msra.mxu0 0.0
        %2601 = vmatprep.subr.mxu0 0.0
        %2602 = vmatpush1.msra.mxu0 0.0
        %2603 = vmatprep.subr.mxu0 0.0
        %2604 = vmatpush1.msra.mxu0 0.0
        %2605 = vmatprep.mubr.f32.mxu0 0.0
        %2606 = vmatmul.mubr.f32.gmra.mrb[0].mxu0 %v2539
        %v2607 = vpop.f32.mrb[0].mxu0
        %v2608 = vadd.f32 0.0, %v2607
        %v2609 = vpop.f32.mrb[0].mxu0
        %2610 = vdwg.mxu0
        %v2612 = vsel %vm2420, %v2462, 0
        %2614 = vmatprep.subr.mxu0 0.0
        %2615 = vmatpush1.msra.mxu0 %v2099
        %2616 = vmatprep.subr.mxu0 0.0
        %2617 = vmatpush1.msra.mxu0 %v2100
        %2618 = vmatprep.subr.mxu0 0.0
        %2619 = vmatpush1.msra.mxu0 0.0
        %2620 = vmatprep.subr.mxu0 0.0
        %2621 = vmatpush1.msra.mxu0 0.0
        %2622 = vmatprep.subr.mxu0 0.0
        %2623 = vmatpush1.msra.mxu0 0.0
        %2624 = vmatprep.subr.mxu0 0.0
        %2625 = vmatpush1.msra.mxu0 0.0
        %2626 = vmatprep.subr.mxu0 0.0
        %2627 = vmatpush1.msra.mxu0 0.0
        %2628 = vmatprep.subr.mxu0 0.0
        %2629 = vmatpush1.msra.mxu0 0.0
        %2630 = vmatprep.subr.mxu0 0.0
        %2631 = vmatpush1.msra.mxu0 0.0
        %2632 = vmatprep.subr.mxu0 0.0
        %2633 = vmatpush1.msra.mxu0 0.0
        %2634 = vmatprep.subr.mxu0 0.0
        %2635 = vmatpush1.msra.mxu0 0.0
        %2636 = vmatprep.subr.mxu0 0.0
        %2637 = vmatpush1.msra.mxu0 0.0
        %2638 = vmatprep.subr.mxu0 0.0
        %2639 = vmatpush1.msra.mxu0 0.0
        %2640 = vmatprep.subr.mxu0 0.0
        %2641 = vmatpush1.msra.mxu0 0.0
        %2642 = vmatprep.subr.mxu0 0.0
        %2643 = vmatpush1.msra.mxu0 0.0
        %2644 = vmatprep.subr.mxu0 0.0
        %2645 = vmatpush1.msra.mxu0 0.0
        %2646 = vmatprep.subr.mxu0 0.0
        %2647 = vmatpush1.msra.mxu0 0.0
        %2648 = vmatprep.subr.mxu0 0.0
        %2649 = vmatpush1.msra.mxu0 0.0
        %2650 = vmatprep.subr.mxu0 0.0
        %2651 = vmatpush1.msra.mxu0 0.0
        %2652 = vmatprep.subr.mxu0 0.0
        %2653 = vmatpush1.msra.mxu0 0.0
        %2654 = vmatprep.subr.mxu0 0.0
        %2655 = vmatpush1.msra.mxu0 0.0
        %2656 = vmatprep.subr.mxu0 0.0
        %2657 = vmatpush1.msra.mxu0 0.0
        %2658 = vmatprep.subr.mxu0 0.0
        %2659 = vmatpush1.msra.mxu0 0.0
        %2660 = vmatprep.subr.mxu0 0.0
        %2661 = vmatpush1.msra.mxu0 0.0
        %2662 = vmatprep.subr.mxu0 0.0
        %2663 = vmatpush1.msra.mxu0 0.0
        %2664 = vmatprep.subr.mxu0 0.0
        %2665 = vmatpush1.msra.mxu0 0.0
        %2666 = vmatprep.subr.mxu0 0.0
        %2667 = vmatpush1.msra.mxu0 0.0
        %2668 = vmatprep.subr.mxu0 0.0
        %2669 = vmatpush1.msra.mxu0 0.0
        %2670 = vmatprep.subr.mxu0 0.0
        %2671 = vmatpush1.msra.mxu0 0.0
        %2672 = vmatprep.subr.mxu0 0.0
        %2673 = vmatpush1.msra.mxu0 0.0
        %2674 = vmatprep.subr.mxu0 0.0
        %2675 = vmatpush1.msra.mxu0 0.0
        %2676 = vmatprep.subr.mxu0 0.0
        %2677 = vmatpush1.msra.mxu0 0.0
        %2678 = vmatprep.mubr.f32.mxu0 0.0
        %2679 = vmatmul.mubr.f32.gmra.mrb[0].mxu0 %v2612
        %v2680 = vpop.f32.mrb[0].mxu0
        %v2681 = vadd.f32 0.0, %v2680
        %v2682 = vpop.f32.mrb[0].mxu0
        %2683 = vdwg.mxu0
        %v2685 = vsel %vm2420, %v2464, 0
        %2687 = vmatprep.subr.mxu0 0.0
        %2688 = vmatpush1.msra.mxu0 %v2101
        %2689 = vmatprep.subr.mxu0 0.0
        %2690 = vmatpush1.msra.mxu0 %v2102
        %2691 = vmatprep.subr.mxu0 0.0
        %2692 = vmatpush1.msra.mxu0 0.0
        %2693 = vmatprep.subr.mxu0 0.0
        %2694 = vmatpush1.msra.mxu0 0.0
        %2695 = vmatprep.subr.mxu0 0.0
        %2696 = vmatpush1.msra.mxu0 0.0
        %2697 = vmatprep.subr.mxu0 0.0
        %2698 = vmatpush1.msra.mxu0 0.0
        %2699 = vmatprep.subr.mxu0 0.0
        %2700 = vmatpush1.msra.mxu0 0.0
        %2701 = vmatprep.subr.mxu0 0.0
        %2702 = vmatpush1.msra.mxu0 0.0
        %2703 = vmatprep.subr.mxu0 0.0
        %2704 = vmatpush1.msra.mxu0 0.0
        %2705 = vmatprep.subr.mxu0 0.0
        %2706 = vmatpush1.msra.mxu0 0.0
        %2707 = vmatprep.subr.mxu0 0.0
        %2708 = vmatpush1.msra.mxu0 0.0
        %2709 = vmatprep.subr.mxu0 0.0
        %2710 = vmatpush1.msra.mxu0 0.0
        %2711 = vmatprep.subr.mxu0 0.0
        %2712 = vmatpush1.msra.mxu0 0.0
        %2713 = vmatprep.subr.mxu0 0.0
        %2714 = vmatpush1.msra.mxu0 0.0
        %2715 = vmatprep.subr.mxu0 0.0
        %2716 = vmatpush1.msra.mxu0 0.0
        %2717 = vmatprep.subr.mxu0 0.0
        %2718 = vmatpush1.msra.mxu0 0.0
        %2719 = vmatprep.subr.mxu0 0.0
        %2720 = vmatpush1.msra.mxu0 0.0
        %2721 = vmatprep.subr.mxu0 0.0
        %2722 = vmatpush1.msra.mxu0 0.0
        %2723 = vmatprep.subr.mxu0 0.0
        %2724 = vmatpush1.msra.mxu0 0.0
        %2725 = vmatprep.subr.mxu0 0.0
        %2726 = vmatpush1.msra.mxu0 0.0
        %2727 = vmatprep.subr.mxu0 0.0
        %2728 = vmatpush1.msra.mxu0 0.0
        %2729 = vmatprep.subr.mxu0 0.0
        %2730 = vmatpush1.msra.mxu0 0.0
        %2731 = vmatprep.subr.mxu0 0.0
        %2732 = vmatpush1.msra.mxu0 0.0
        %2733 = vmatprep.subr.mxu0 0.0
        %2734 = vmatpush1.msra.mxu0 0.0
        %2735 = vmatprep.subr.mxu0 0.0
        %2736 = vmatpush1.msra.mxu0 0.0
        %2737 = vmatprep.subr.mxu0 0.0
        %2738 = vmatpush1.msra.mxu0 0.0
        %2739 = vmatprep.subr.mxu0 0.0
        %2740 = vmatpush1.msra.mxu0 0.0
        %2741 = vmatprep.subr.mxu0 0.0
        %2742 = vmatpush1.msra.mxu0 0.0
        %2743 = vmatprep.subr.mxu0 0.0
        %2744 = vmatpush1.msra.mxu0 0.0
        %2745 = vmatprep.subr.mxu0 0.0
        %2746 = vmatpush1.msra.mxu0 0.0
        %2747 = vmatprep.subr.mxu0 0.0
        %2748 = vmatpush1.msra.mxu0 0.0
        %2749 = vmatprep.subr.mxu0 0.0
        %2750 = vmatpush1.msra.mxu0 0.0
        %2751 = vmatprep.mubr.f32.mxu0 0.0
        %2752 = vmatmul.mubr.f32.gmra.mrb[0].mxu0 %v2685
        %v2753 = vpop.f32.mrb[0].mxu0
        %v2754 = vadd.f32 0.0, %v2753
        %v2755 = vpop.f32.mrb[0].mxu0
        %2756 = vdwg.mxu0
        %v2757 = vcombine.low %v2535, %v2681
        %v2758 = vcombine.high %v2535, %v2681
        %v2760 = vunpack.c.l.s4 1983009808
        %v2761 = vunpack.c.0.s8 %v2760
        %v2762 = vlaneseq
        %v2763 = vshrl.u32 %v2762, 7
        %v2764 = vsub.s32 %v2761, %v2763
        %v2765 = vrot.slane %v2757, %v2764
        %v2767 = vunpack.c.l.s4 1983009808
        %v2768 = vunpack.c.0.s8 %v2767
        %v2769 = vlaneseq
        %v2770 = vshrl.u32 %v2769, 7
        %v2771 = vsub.s32 %v2768, %v2770
        %v2772 = vrot.slane %v2758, %v2771
        %v2773 = vcombine.low %v2608, %v2754
        %v2774 = vcombine.high %v2608, %v2754
        %v2776 = vunpack.c.l.s4 1983009808
        %v2777 = vunpack.c.0.s8 %v2776
        %v2778 = vlaneseq
        %v2779 = vshrl.u32 %v2778, 7
        %v2780 = vsub.s32 %v2777, %v2779
        %v2781 = vrot.slane %v2773, %v2780
        %v2783 = vunpack.c.l.s4 1983009808
        %v2784 = vunpack.c.0.s8 %v2783
        %v2785 = vlaneseq
        %v2786 = vshrl.u32 %v2785, 7
        %v2787 = vsub.s32 %v2784, %v2786
        %v2788 = vrot.slane %v2774, %v2787
        %v2789 = vcombine.low %v2765, %v2781
        %v2790 = vcombine.high %v2765, %v2781
        %v2792 = vunpack.c.l.s4 1934713408
        %v2793 = vunpack.c.0.s8 %v2792
        %v2794 = vlaneseq
        %v2795 = vshrl.u32 %v2794, 7
        %v2796 = vsub.s32 %v2793, %v2795
        %v2797 = vrot.slane %v2789, %v2796
        %v2799 = vunpack.c.l.s4 1934713408
        %v2800 = vunpack.c.0.s8 %v2799
        %v2801 = vlaneseq
        %v2802 = vshrl.u32 %v2801, 7
        %v2803 = vsub.s32 %v2800, %v2802
        %v2804 = vrot.slane %v2790, %v2803
        %v2805 = vcombine.low %v2772, %v2788
        %v2806 = vcombine.high %v2772, %v2788
        %v2808 = vunpack.c.l.s4 1934713408
        %v2809 = vunpack.c.0.s8 %v2808
        %v2810 = vlaneseq
        %v2811 = vshrl.u32 %v2810, 7
        %v2812 = vsub.s32 %v2809, %v2811
        %v2813 = vrot.slane %v2805, %v2812
        %v2815 = vunpack.c.l.s4 1934713408
        %v2816 = vunpack.c.0.s8 %v2815
        %v2817 = vlaneseq
        %v2818 = vshrl.u32 %v2817, 7
        %v2819 = vsub.s32 %v2816, %v2818
        %v2820 = vrot.slane %v2806, %v2819
        %v2821 = vcombine.high %v2797, 0.0
        %v2822 = vcombine.high %v2804, 0.0
        %v2823 = vcombine.high %v2813, 0.0
        %v2824 = vcombine.high %v2820, 0.0
        %v2825 = vcombine.low %v2797, %v2804
        %v2827 = vunpack.c.l.s4 1983009808
        %v2828 = vunpack.c.0.s8 %v2827
        %v2829 = vlaneseq
        %v2830 = vshrl.u32 %v2829, 7
        %v2831 = vsub.s32 %v2828, %v2830
        %v2832 = vrot.slane %v2825, %v2831
        %v2833 = vcombine.low %v2821, %v2822
        %v2835 = vunpack.c.l.s4 1983009808
        %v2836 = vunpack.c.0.s8 %v2835
        %v2837 = vlaneseq
        %v2838 = vshrl.u32 %v2837, 7
        %v2839 = vsub.s32 %v2836, %v2838
        %v2840 = vrot.slane %v2833, %v2839
        %v2841 = vcombine.low %v2813, %v2820
        %v2843 = vunpack.c.l.s4 1983009808
        %v2844 = vunpack.c.0.s8 %v2843
        %v2845 = vlaneseq
        %v2846 = vshrl.u32 %v2845, 7
        %v2847 = vsub.s32 %v2844, %v2846
        %v2848 = vrot.slane %v2841, %v2847
        %v2849 = vcombine.low %v2823, %v2824
        %v2851 = vunpack.c.l.s4 1983009808
        %v2852 = vunpack.c.0.s8 %v2851
        %v2853 = vlaneseq
        %v2854 = vshrl.u32 %v2853, 7
        %v2855 = vsub.s32 %v2852, %v2854
        %v2856 = vrot.slane %v2849, %v2855
        %v2857 = vcombine.low %v2832, %v2840
        %v2858 = vcombine.high %v2832, %v2840
        %v2860 = vunpack.c.l.s4 1934713408
        %v2861 = vunpack.c.0.s8 %v2860
        %v2862 = vlaneseq
        %v2863 = vshrl.u32 %v2862, 7
        %v2864 = vsub.s32 %v2861, %v2863
        %v2865 = vrot.slane %v2857, %v2864
        %v2867 = vunpack.c.l.s4 1934713408
        %v2868 = vunpack.c.0.s8 %v2867
        %v2869 = vlaneseq
        %v2870 = vshrl.u32 %v2869, 7
        %v2871 = vsub.s32 %v2868, %v2870
        %v2872 = vrot.slane %v2858, %v2871
        %v2873 = vcombine.low %v2848, %v2856
        %v2874 = vcombine.high %v2848, %v2856
        %v2876 = vunpack.c.l.s4 1934713408
        %v2877 = vunpack.c.0.s8 %v2876
        %v2878 = vlaneseq
        %v2879 = vshrl.u32 %v2878, 7
        %v2880 = vsub.s32 %v2877, %v2879
        %v2881 = vrot.slane %v2873, %v2880
        %v2883 = vunpack.c.l.s4 1934713408
        %v2884 = vunpack.c.0.s8 %v2883
        %v2885 = vlaneseq
        %v2886 = vshrl.u32 %v2885, 7
        %v2887 = vsub.s32 %v2884, %v2886
        %v2888 = vrot.slane %v2874, %v2887
        %v2889 = vcombine.low %v2865, %v2881
        %v2890 = vcombine.high %v2865, %v2881
        %v2891 = vcombine.low %v2872, %v2888
        %v2892 = vcombine.high %v2872, %v2888
        %2894 = vrot.lane.b32.xlu0 %v2890, 8
        %v2895 = vpop.permute.xlu0 %2894
        %2898 = vrot.lane.b32.xlu0 %v2891, 16
        %v2899 = vpop.permute.xlu0 %2898
        %2902 = vrot.lane.b32.xlu0 %v2892, 24
        %v2903 = vpop.permute.xlu0 %2902
        %v2905 = vsel %vm2103, %v2889, %v2895
        %v2906 = vsel %vm2420, %v2905, %v2899
        %vm2907 = vcmask 195584
        %v2908 = vsel %vm2907, %v2906, %v2903
        %s2909 = scalar_lea.vmem [#allocation6], 96
        %v2910 = vld [vmem:[%s2909] sm:$0xff]
        %v2911 = vld [vmem:[%s2909 + $0x8] sm:$0xff]
        %v2912 = vld [vmem:[%s2909 + $0x10] sm:$0xff]
        %v2913 = vld [vmem:[%s2909 + $0x18] sm:$0xff]
        %s2914 = scalar_lea.vmem %s7, 3
        %v2915 = vld [vmem:[%s2914] sm:$0x1]
        %v2917 = vlaneseq
        %v2918 = vshrl.u32 %v2917, 7
        %v2919 = vsub.s32 0, %v2918
        %v2920 = vrot.slane %v2915, %v2919
        %v2923 = vsel %vm1824, %v2908, 0
        %2925 = vmatprep.subr.mxu0 0.0
        %2926 = vmatpush1.msra.mxu0 %v2910
        %2927 = vmatprep.subr.mxu0 0.0
        %2928 = vmatpush1.msra.mxu0 %v2911
        %2929 = vmatprep.subr.mxu0 0.0
        %2930 = vmatpush1.msra.mxu0 %v2912
        %2931 = vmatprep.subr.mxu0 0.0
        %2932 = vmatpush1.msra.mxu0 %v2913
        %2933 = vmatprep.subr.mxu0 0.0
        %2934 = vmatpush1.msra.mxu0 0.0
        %2935 = vmatprep.subr.mxu0 0.0
        %2936 = vmatpush1.msra.mxu0 0.0
        %2937 = vmatprep.subr.mxu0 0.0
        %2938 = vmatpush1.msra.mxu0 0.0
        %2939 = vmatprep.subr.mxu0 0.0
        %2940 = vmatpush1.msra.mxu0 0.0
        %2941 = vmatprep.subr.mxu0 0.0
        %2942 = vmatpush1.msra.mxu0 0.0
        %2943 = vmatprep.subr.mxu0 0.0
        %2944 = vmatpush1.msra.mxu0 0.0
        %2945 = vmatprep.subr.mxu0 0.0
        %2946 = vmatpush1.msra.mxu0 0.0
        %2947 = vmatprep.subr.mxu0 0.0
        %2948 = vmatpush1.msra.mxu0 0.0
        %2949 = vmatprep.subr.mxu0 0.0
        %2950 = vmatpush1.msra.mxu0 0.0
        %2951 = vmatprep.subr.mxu0 0.0
        %2952 = vmatpush1.msra.mxu0 0.0
        %2953 = vmatprep.subr.mxu0 0.0
        %2954 = vmatpush1.msra.mxu0 0.0
        %2955 = vmatprep.subr.mxu0 0.0
        %2956 = vmatpush1.msra.mxu0 0.0
        %2957 = vmatprep.subr.mxu0 0.0
        %2958 = vmatpush1.msra.mxu0 0.0
        %2959 = vmatprep.subr.mxu0 0.0
        %2960 = vmatpush1.msra.mxu0 0.0
        %2961 = vmatprep.subr.mxu0 0.0
        %2962 = vmatpush1.msra.mxu0 0.0
        %2963 = vmatprep.subr.mxu0 0.0
        %2964 = vmatpush1.msra.mxu0 0.0
        %2965 = vmatprep.subr.mxu0 0.0
        %2966 = vmatpush1.msra.mxu0 0.0
        %2967 = vmatprep.subr.mxu0 0.0
        %2968 = vmatpush1.msra.mxu0 0.0
        %2969 = vmatprep.subr.mxu0 0.0
        %2970 = vmatpush1.msra.mxu0 0.0
        %2971 = vmatprep.subr.mxu0 0.0
        %2972 = vmatpush1.msra.mxu0 0.0
        %2973 = vmatprep.subr.mxu0 0.0
        %2974 = vmatpush1.msra.mxu0 0.0
        %2975 = vmatprep.subr.mxu0 0.0
        %2976 = vmatpush1.msra.mxu0 0.0
        %2977 = vmatprep.subr.mxu0 0.0
        %2978 = vmatpush1.msra.mxu0 0.0
        %2979 = vmatprep.subr.mxu0 0.0
        %2980 = vmatpush1.msra.mxu0 0.0
        %2981 = vmatprep.subr.mxu0 0.0
        %2982 = vmatpush1.msra.mxu0 0.0
        %2983 = vmatprep.subr.mxu0 0.0
        %2984 = vmatpush1.msra.mxu0 0.0
        %2985 = vmatprep.subr.mxu0 0.0
        %2986 = vmatpush1.msra.mxu0 0.0
        %2987 = vmatprep.subr.mxu0 0.0
        %2988 = vmatpush1.msra.mxu0 0.0
        %2989 = vmatprep.mubr.f32.mxu0 0.0
        %2990 = vmatmul.mubr.f32.gmra.mrb[0].mxu0 %v2923
        %v2991 = vpop.f32.mrb[0].mxu0
        %v2992 = vadd.f32 %v2920, %v2991
        %v2993 = vpop.f32.mrb[0].mxu0
        %2994 = vdwg.mxu0
        %v2995 = vadd.f32 %v1821, %v2992
        %v2996 = vld [vmem:[%s4 + $0x1] sm:$0x1]
        %v2997 = vld [vmem:[%s5 + $0x1] sm:$0x1]
        %v2998 = vsel %vm1824, %v2995, 0.0
        %2999 = vadd.xlane.f32.xlu0 %v2998
        %v3000 = vpop.xlane.xlu0 %2999
        %v3001 = vmul.f32 %v3000, %v1828
        %v3002 = vsub.f32 %v2995, %v3001
        %v3003 = vmul.f32 %v3002, %v3002
        %v3004 = vsel %vm1824, %v3003, 0.0
        %3005 = vadd.xlane.f32.xlu0 %v3004
        %v3006 = vpop.xlane.xlu0 %3005
        %v3007 = vmul.f32 %v3006, %v1835
        %v3008 = vlaneseq
        %v3009 = vshrl.u32 %v3008, 7
        %v3010 = vsub.s32 0, %v3009
        %v3011 = vrot.slane %v2996, %v3010
        %v3012 = vmul.f32 %v3011, %v3002
        %v3013 = vrsqrt.pop %v3007
        %v3014 = vmul.f32 %v3007, %v3013
        %vm3015 = vcmp.eq.f32.partialorder %v3007, inf
        %v3016 = vsel %vm3015, %v3007, %v3014
        %vm3017 = vcmp.eq.f32.partialorder %v3007, 0.0
        %v3018 = vand.u32 %v3007, 2147483648
        %v3019 = vsel %vm3017, %v3018, %v3016
        %v3020 = vadd.f32 %v3019, 1e-06
        %v3021 = vrcp.pop %v3020
        %v3022 = vmul.f32 %v3012, %v3021
        %v3023 = vlaneseq
        %v3024 = vshrl.u32 %v3023, 7
        %v3025 = vsub.s32 0, %v3024
        %v3026 = vrot.slane %v2997, %v3025
        %v3027 = vadd.f32 %v3022, %v3026
        %s3028 = scalar_lea.vmem [#allocation6], 128
        %v3029 = vld [vmem:[%s3028] sm:$0xff]
        %v3030 = vld [vmem:[%s3028 + $0x8] sm:$0xff]
        %v3031 = vld [vmem:[%s3028 + $0x10] sm:$0xff]
        %v3032 = vld [vmem:[%s3028 + $0x18] sm:$0xff]
        %s3033 = scalar_lea.vmem %s7, 4
        %v3034 = vld [vmem:[%s3033] sm:$0x1]
        %v3036 = vlaneseq
        %v3037 = vshrl.u32 %v3036, 7
        %v3038 = vsub.s32 0, %v3037
        %v3039 = vrot.slane %v3034, %v3038
        %v3042 = vsel %vm1824, %v3027, 0
        %3044 = vmatprep.subr.mxu0 0.0
        %3045 = vmatpush1.msra.mxu0 %v3029
        %3046 = vmatprep.subr.mxu0 0.0
        %3047 = vmatpush1.msra.mxu0 %v3030
        %3048 = vmatprep.subr.mxu0 0.0
        %3049 = vmatpush1.msra.mxu0 %v3031
        %3050 = vmatprep.subr.mxu0 0.0
        %3051 = vmatpush1.msra.mxu0 %v3032
        %3052 = vmatprep.subr.mxu0 0.0
        %3053 = vmatpush1.msra.mxu0 0.0
        %3054 = vmatprep.subr.mxu0 0.0
        %3055 = vmatpush1.msra.mxu0 0.0
        %3056 = vmatprep.subr.mxu0 0.0
        %3057 = vmatpush1.msra.mxu0 0.0
        %3058 = vmatprep.subr.mxu0 0.0
        %3059 = vmatpush1.msra.mxu0 0.0
        %3060 = vmatprep.subr.mxu0 0.0
        %3061 = vmatpush1.msra.mxu0 0.0
        %3062 = vmatprep.subr.mxu0 0.0
        %3063 = vmatpush1.msra.mxu0 0.0
        %3064 = vmatprep.subr.mxu0 0.0
        %3065 = vmatpush1.msra.mxu0 0.0
        %3066 = vmatprep.subr.mxu0 0.0
        %3067 = vmatpush1.msra.mxu0 0.0
        %3068 = vmatprep.subr.mxu0 0.0
        %3069 = vmatpush1.msra.mxu0 0.0
        %3070 = vmatprep.subr.mxu0 0.0
        %3071 = vmatpush1.msra.mxu0 0.0
        %3072 = vmatprep.subr.mxu0 0.0
        %3073 = vmatpush1.msra.mxu0 0.0
        %3074 = vmatprep.subr.mxu0 0.0
        %3075 = vmatpush1.msra.mxu0 0.0
        %3076 = vmatprep.subr.mxu0 0.0
        %3077 = vmatpush1.msra.mxu0 0.0
        %3078 = vmatprep.subr.mxu0 0.0
        %3079 = vmatpush1.msra.mxu0 0.0
        %3080 = vmatprep.subr.mxu0 0.0
        %3081 = vmatpush1.msra.mxu0 0.0
        %3082 = vmatprep.subr.mxu0 0.0
        %3083 = vmatpush1.msra.mxu0 0.0
        %3084 = vmatprep.subr.mxu0 0.0
        %3085 = vmatpush1.msra.mxu0 0.0
        %3086 = vmatprep.subr.mxu0 0.0
        %3087 = vmatpush1.msra.mxu0 0.0
        %3088 = vmatprep.subr.mxu0 0.0
        %3089 = vmatpush1.msra.mxu0 0.0
        %3090 = vmatprep.subr.mxu0 0.0
        %3091 = vmatpush1.msra.mxu0 0.0
        %3092 = vmatprep.subr.mxu0 0.0
        %3093 = vmatpush1.msra.mxu0 0.0
        %3094 = vmatprep.subr.mxu0 0.0
        %3095 = vmatpush1.msra.mxu0 0.0
        %3096 = vmatprep.subr.mxu0 0.0
        %3097 = vmatpush1.msra.mxu0 0.0
        %3098 = vmatprep.subr.mxu0 0.0
        %3099 = vmatpush1.msra.mxu0 0.0
        %3100 = vmatprep.subr.mxu0 0.0
        %3101 = vmatpush1.msra.mxu0 0.0
        %3102 = vmatprep.subr.mxu0 0.0
        %3103 = vmatpush1.msra.mxu0 0.0
        %3104 = vmatprep.subr.mxu0 0.0
        %3105 = vmatpush1.msra.mxu0 0.0
        %3106 = vmatprep.subr.mxu0 0.0
        %3107 = vmatpush1.msra.mxu0 0.0
        %3108 = vmatprep.mubr.f32.mxu0 0.0
        %3109 = vmatmul.mubr.f32.gmra.mrb[0].mxu0 %v3042
        %v3110 = vpop.f32.mrb[0].mxu0
        %v3111 = vadd.f32 %v3039, %v3110
        %v3112 = vpop.f32.mrb[0].mxu0
        %3113 = vdwg.mxu0
        %3115 = vrot.lane.b32.xlu0 %v3111, 120
        %v3116 = vpop.permute.xlu0 %3115
        %3118 = vrot.lane.b32.xlu0 %v3111, 112
        %v3119 = vpop.permute.xlu0 %3118
        %3121 = vrot.lane.b32.xlu0 %v3111, 104
        %v3122 = vpop.permute.xlu0 %3121
        %v3124 = vcombine.low %v3111, %v3119
        %v3125 = vcombine.high %v3111, %v3119
        %v3127 = vunpack.c.l.s4 1983009808
        %v3128 = vunpack.c.0.s8 %v3127
        %v3129 = vlaneseq
        %v3130 = vshrl.u32 %v3129, 7
        %v3131 = vsub.s32 %v3128, %v3130
        %v3132 = vrot.slane %v3124, %v3131
        %v3134 = vunpack.c.l.s4 1983009808
        %v3135 = vunpack.c.0.s8 %v3134
        %v3136 = vlaneseq
        %v3137 = vshrl.u32 %v3136, 7
        %v3138 = vsub.s32 %v3135, %v3137
        %v3139 = vrot.slane %v3125, %v3138
        %v3140 = vcombine.low %v3116, %v3122
        %v3141 = vcombine.high %v3116, %v3122
        %v3143 = vunpack.c.l.s4 1983009808
        %v3144 = vunpack.c.0.s8 %v3143
        %v3145 = vlaneseq
        %v3146 = vshrl.u32 %v3145, 7
        %v3147 = vsub.s32 %v3144, %v3146
        %v3148 = vrot.slane %v3140, %v3147
        %v3150 = vunpack.c.l.s4 1983009808
        %v3151 = vunpack.c.0.s8 %v3150
        %v3152 = vlaneseq
        %v3153 = vshrl.u32 %v3152, 7
        %v3154 = vsub.s32 %v3151, %v3153
        %v3155 = vrot.slane %v3141, %v3154
        %v3156 = vcombine.low %v3132, %v3148
        %v3157 = vcombine.high %v3132, %v3148
        %v3159 = vunpack.c.l.s4 1934713408
        %v3160 = vunpack.c.0.s8 %v3159
        %v3161 = vlaneseq
        %v3162 = vshrl.u32 %v3161, 7
        %v3163 = vsub.s32 %v3160, %v3162
        %v3164 = vrot.slane %v3156, %v3163
        %v3166 = vunpack.c.l.s4 1934713408
        %v3167 = vunpack.c.0.s8 %v3166
        %v3168 = vlaneseq
        %v3169 = vshrl.u32 %v3168, 7
        %v3170 = vsub.s32 %v3167, %v3169
        %v3171 = vrot.slane %v3157, %v3170
        %v3172 = vcombine.low %v3139, %v3155
        %v3173 = vcombine.high %v3139, %v3155
        %v3175 = vunpack.c.l.s4 1934713408
        %v3176 = vunpack.c.0.s8 %v3175
        %v3177 = vlaneseq
        %v3178 = vshrl.u32 %v3177, 7
        %v3179 = vsub.s32 %v3176, %v3178
        %v3180 = vrot.slane %v3172, %v3179
        %v3182 = vunpack.c.l.s4 1934713408
        %v3183 = vunpack.c.0.s8 %v3182
        %v3184 = vlaneseq
        %v3185 = vshrl.u32 %v3184, 7
        %v3186 = vsub.s32 %v3183, %v3185
        %v3187 = vrot.slane %v3173, %v3186
        %v3188 = vcombine.high %v3164, 0.0
        %v3189 = vcombine.high %v3171, 0.0
        %v3190 = vcombine.high %v3180, 0.0
        %v3191 = vcombine.high %v3187, 0.0
        %v3192 = vcombine.low %v3164, %v3171
        %v3194 = vunpack.c.l.s4 1983009808
        %v3195 = vunpack.c.0.s8 %v3194
        %v3196 = vlaneseq
        %v3197 = vshrl.u32 %v3196, 7
        %v3198 = vsub.s32 %v3195, %v3197
        %v3199 = vrot.slane %v3192, %v3198
        %v3200 = vcombine.low %v3188, %v3189
        %v3202 = vunpack.c.l.s4 1983009808
        %v3203 = vunpack.c.0.s8 %v3202
        %v3204 = vlaneseq
        %v3205 = vshrl.u32 %v3204, 7
        %v3206 = vsub.s32 %v3203, %v3205
        %v3207 = vrot.slane %v3200, %v3206
        %v3208 = vcombine.low %v3180, %v3187
        %v3210 = vunpack.c.l.s4 1983009808
        %v3211 = vunpack.c.0.s8 %v3210
        %v3212 = vlaneseq
        %v3213 = vshrl.u32 %v3212, 7
        %v3214 = vsub.s32 %v3211, %v3213
        %v3215 = vrot.slane %v3208, %v3214
        %v3216 = vcombine.low %v3190, %v3191
        %v3218 = vunpack.c.l.s4 1983009808
        %v3219 = vunpack.c.0.s8 %v3218
        %v3220 = vlaneseq
        %v3221 = vshrl.u32 %v3220, 7
        %v3222 = vsub.s32 %v3219, %v3221
        %v3223 = vrot.slane %v3216, %v3222
        %v3224 = vcombine.low %v3199, %v3207
        %v3225 = vcombine.high %v3199, %v3207
        %v3227 = vunpack.c.l.s4 1934713408
        %v3228 = vunpack.c.0.s8 %v3227
        %v3229 = vlaneseq
        %v3230 = vshrl.u32 %v3229, 7
        %v3231 = vsub.s32 %v3228, %v3230
        %v3232 = vrot.slane %v3224, %v3231
        %v3234 = vunpack.c.l.s4 1934713408
        %v3235 = vunpack.c.0.s8 %v3234
        %v3236 = vlaneseq
        %v3237 = vshrl.u32 %v3236, 7
        %v3238 = vsub.s32 %v3235, %v3237
        %v3239 = vrot.slane %v3225, %v3238
        %v3240 = vcombine.low %v3215, %v3223
        %v3241 = vcombine.high %v3215, %v3223
        %v3243 = vunpack.c.l.s4 1934713408
        %v3244 = vunpack.c.0.s8 %v3243
        %v3245 = vlaneseq
        %v3246 = vshrl.u32 %v3245, 7
        %v3247 = vsub.s32 %v3244, %v3246
        %v3248 = vrot.slane %v3240, %v3247
        %v3250 = vunpack.c.l.s4 1934713408
        %v3251 = vunpack.c.0.s8 %v3250
        %v3252 = vlaneseq
        %v3253 = vshrl.u32 %v3252, 7
        %v3254 = vsub.s32 %v3251, %v3253
        %v3255 = vrot.slane %v3241, %v3254
        %v3256 = vcombine.low %v3232, %v3248
        %v3257 = vcombine.high %v3232, %v3248
        %v3258 = vcombine.low %v3239, %v3255
        %v3259 = vcombine.high %v3239, %v3255
        %v3260 = vld [vmem:[#allocation4] sm:$0xff]
        %v3261 = vld [vmem:[#allocation4 + $0x8] sm:$0xff]
        %v3262 = vld [vmem:[#allocation4 + $0x10] sm:$0xff]
        %v3263 = vld [vmem:[#allocation4 + $0x18] sm:$0xff]
        %v3264 = vld [vmem:[#allocation5] sm:$0xff]
        %v3265 = vld [vmem:[#allocation5 + $0x8] sm:$0xff]
        %v3266 = vld [vmem:[#allocation5 + $0x10] sm:$0xff]
        %v3267 = vld [vmem:[#allocation5 + $0x18] sm:$0xff]
        %v3269 = vlaneseq
        %v3270 = vshrl.u32 %v3269, 7
        %v3271 = vsub.s32 0, %v3270
        %v3272 = vrot.slane %v1819, %v3271
        %v3275 = vsel %vm2103, %v3256, 0
        %v3278 = vsel %vm2103, %v3260, 0
        %3280 = vmatprep.subr.mxu0 0.0
        %3281 = vmatpush1.xpose.msra.mxu0 %v3278
        %3282 = vmatprep.subr.mxu0 0.0
        %3283 = vmatpush1.xpose.msra.mxu0 0.0
        %3284 = vmatprep.subr.mxu0 0.0
        %3285 = vmatpush1.xpose.msra.mxu0 0.0
        %3286 = vmatprep.subr.mxu0 0.0
        %3287 = vmatpush1.xpose.msra.mxu0 0.0
        %3288 = vmatprep.subr.mxu0 0.0
        %3289 = vmatpush1.xpose.msra.mxu0 0.0
        %3290 = vmatprep.subr.mxu0 0.0
        %3291 = vmatpush1.xpose.msra.mxu0 0.0
        %3292 = vmatprep.subr.mxu0 0.0
        %3293 = vmatpush1.xpose.msra.mxu0 0.0
        %3294 = vmatprep.subr.mxu0 0.0
        %3295 = vmatpush1.xpose.msra.mxu0 0.0
        %3296 = vmatprep.subr.mxu0 0.0
        %3297 = vmatpush1.xpose.msra.mxu0 0.0
        %3298 = vmatprep.subr.mxu0 0.0
        %3299 = vmatpush1.xpose.msra.mxu0 0.0
        %3300 = vmatprep.subr.mxu0 0.0
        %3301 = vmatpush1.xpose.msra.mxu0 0.0
        %3302 = vmatprep.subr.mxu0 0.0
        %3303 = vmatpush1.xpose.msra.mxu0 0.0
        %3304 = vmatprep.subr.mxu0 0.0
        %3305 = vmatpush1.xpose.msra.mxu0 0.0
        %3306 = vmatprep.subr.mxu0 0.0
        %3307 = vmatpush1.xpose.msra.mxu0 0.0
        %3308 = vmatprep.subr.mxu0 0.0
        %3309 = vmatpush1.xpose.msra.mxu0 0.0
        %3310 = vmatprep.subr.mxu0 0.0
        %3311 = vmatpush1.xpose.msra.mxu0 0.0
        %3312 = vmatprep.subr.mxu0 0.0
        %3313 = vmatpush1.xpose.msra.mxu0 0.0
        %3314 = vmatprep.subr.mxu0 0.0
        %3315 = vmatpush1.xpose.msra.mxu0 0.0
        %3316 = vmatprep.subr.mxu0 0.0
        %3317 = vmatpush1.xpose.msra.mxu0 0.0
        %3318 = vmatprep.subr.mxu0 0.0
        %3319 = vmatpush1.xpose.msra.mxu0 0.0
        %3320 = vmatprep.subr.mxu0 0.0
        %3321 = vmatpush1.xpose.msra.mxu0 0.0
        %3322 = vmatprep.subr.mxu0 0.0
        %3323 = vmatpush1.xpose.msra.mxu0 0.0
        %3324 = vmatprep.subr.mxu0 0.0
        %3325 = vmatpush1.xpose.msra.mxu0 0.0
        %3326 = vmatprep.subr.mxu0 0.0
        %3327 = vmatpush1.xpose.msra.mxu0 0.0
        %3328 = vmatprep.subr.mxu0 0.0
        %3329 = vmatpush1.xpose.msra.mxu0 0.0
        %3330 = vmatprep.subr.mxu0 0.0
        %3331 = vmatpush1.xpose.msra.mxu0 0.0
        %3332 = vmatprep.subr.mxu0 0.0
        %3333 = vmatpush1.xpose.msra.mxu0 0.0
        %3334 = vmatprep.subr.mxu0 0.0
        %3335 = vmatpush1.xpose.msra.mxu0 0.0
        %3336 = vmatprep.subr.mxu0 0.0
        %3337 = vmatpush1.xpose.msra.mxu0 0.0
        %3338 = vmatprep.subr.mxu0 0.0
        %3339 = vmatpush1.xpose.msra.mxu0 0.0
        %3340 = vmatprep.subr.mxu0 0.0
        %3341 = vmatpush1.xpose.msra.mxu0 0.0
        %3342 = vmatprep.subr.mxu0 0.0
        %3343 = vmatpush1.xpose.msra.mxu0 0.0
        %3344 = vmatprep.mubr.f32.mxu0 0.0
        %3345 = vmatmul.mubr.f32.gmra.mrb[0].mxu0 %v3275
        %v3346 = vpop.f32.mrb[0].mxu0
        %v3347 = vadd.f32 %v3272, %v3346
        %v3348 = vpop.f32.mrb[0].mxu0
        %3349 = vdwg.mxu0
        %v3351 = vsel %vm2103, %v3257, 0
        %v3354 = vsel %vm2103, %v3261, 0
        %3356 = vmatprep.subr.mxu0 0.0
        %3357 = vmatpush1.xpose.msra.mxu0 %v3354
        %3358 = vmatprep.subr.mxu0 0.0
        %3359 = vmatpush1.xpose.msra.mxu0 0.0
        %3360 = vmatprep.subr.mxu0 0.0
        %3361 = vmatpush1.xpose.msra.mxu0 0.0
        %3362 = vmatprep.subr.mxu0 0.0
        %3363 = vmatpush1.xpose.msra.mxu0 0.0
        %3364 = vmatprep.subr.mxu0 0.0
        %3365 = vmatpush1.xpose.msra.mxu0 0.0
        %3366 = vmatprep.subr.mxu0 0.0
        %3367 = vmatpush1.xpose.msra.mxu0 0.0
        %3368 = vmatprep.subr.mxu0 0.0
        %3369 = vmatpush1.xpose.msra.mxu0 0.0
        %3370 = vmatprep.subr.mxu0 0.0
        %3371 = vmatpush1.xpose.msra.mxu0 0.0
        %3372 = vmatprep.subr.mxu0 0.0
        %3373 = vmatpush1.xpose.msra.mxu0 0.0
        %3374 = vmatprep.subr.mxu0 0.0
        %3375 = vmatpush1.xpose.msra.mxu0 0.0
        %3376 = vmatprep.subr.mxu0 0.0
        %3377 = vmatpush1.xpose.msra.mxu0 0.0
        %3378 = vmatprep.subr.mxu0 0.0
        %3379 = vmatpush1.xpose.msra.mxu0 0.0
        %3380 = vmatprep.subr.mxu0 0.0
        %3381 = vmatpush1.xpose.msra.mxu0 0.0
        %3382 = vmatprep.subr.mxu0 0.0
        %3383 = vmatpush1.xpose.msra.mxu0 0.0
        %3384 = vmatprep.subr.mxu0 0.0
        %3385 = vmatpush1.xpose.msra.mxu0 0.0
        %3386 = vmatprep.subr.mxu0 0.0
        %3387 = vmatpush1.xpose.msra.mxu0 0.0
        %3388 = vmatprep.subr.mxu0 0.0
        %3389 = vmatpush1.xpose.msra.mxu0 0.0
        %3390 = vmatprep.subr.mxu0 0.0
        %3391 = vmatpush1.xpose.msra.mxu0 0.0
        %3392 = vmatprep.subr.mxu0 0.0
        %3393 = vmatpush1.xpose.msra.mxu0 0.0
        %3394 = vmatprep.subr.mxu0 0.0
        %3395 = vmatpush1.xpose.msra.mxu0 0.0
        %3396 = vmatprep.subr.mxu0 0.0
        %3397 = vmatpush1.xpose.msra.mxu0 0.0
        %3398 = vmatprep.subr.mxu0 0.0
        %3399 = vmatpush1.xpose.msra.mxu0 0.0
        %3400 = vmatprep.subr.mxu0 0.0
        %3401 = vmatpush1.xpose.msra.mxu0 0.0
        %3402 = vmatprep.subr.mxu0 0.0
        %3403 = vmatpush1.xpose.msra.mxu0 0.0
        %3404 = vmatprep.subr.mxu0 0.0
        %3405 = vmatpush1.xpose.msra.mxu0 0.0
        %3406 = vmatprep.subr.mxu0 0.0
        %3407 = vmatpush1.xpose.msra.mxu0 0.0
        %3408 = vmatprep.subr.mxu0 0.0
        %3409 = vmatpush1.xpose.msra.mxu0 0.0
        %3410 = vmatprep.subr.mxu0 0.0
        %3411 = vmatpush1.xpose.msra.mxu0 0.0
        %3412 = vmatprep.subr.mxu0 0.0
        %3413 = vmatpush1.xpose.msra.mxu0 0.0
        %3414 = vmatprep.subr.mxu0 0.0
        %3415 = vmatpush1.xpose.msra.mxu0 0.0
        %3416 = vmatprep.subr.mxu0 0.0
        %3417 = vmatpush1.xpose.msra.mxu0 0.0
        %3418 = vmatprep.subr.mxu0 0.0
        %3419 = vmatpush1.xpose.msra.mxu0 0.0
        %3420 = vmatprep.mubr.f32.mxu0 0.0
        %3421 = vmatmul.mubr.f32.gmra.mrb[0].mxu0 %v3351
        %v3422 = vpop.f32.mrb[0].mxu0
        %v3423 = vadd.f32 %v3272, %v3422
        %v3424 = vpop.f32.mrb[0].mxu0
        %3425 = vdwg.mxu0
        %v3427 = vsel %vm2103, %v3258, 0
        %v3430 = vsel %vm2103, %v3262, 0
        %3432 = vmatprep.subr.mxu0 0.0
        %3433 = vmatpush1.xpose.msra.mxu0 %v3430
        %3434 = vmatprep.subr.mxu0 0.0
        %3435 = vmatpush1.xpose.msra.mxu0 0.0
        %3436 = vmatprep.subr.mxu0 0.0
        %3437 = vmatpush1.xpose.msra.mxu0 0.0
        %3438 = vmatprep.subr.mxu0 0.0
        %3439 = vmatpush1.xpose.msra.mxu0 0.0
        %3440 = vmatprep.subr.mxu0 0.0
        %3441 = vmatpush1.xpose.msra.mxu0 0.0
        %3442 = vmatprep.subr.mxu0 0.0
        %3443 = vmatpush1.xpose.msra.mxu0 0.0
        %3444 = vmatprep.subr.mxu0 0.0
        %3445 = vmatpush1.xpose.msra.mxu0 0.0
        %3446 = vmatprep.subr.mxu0 0.0
        %3447 = vmatpush1.xpose.msra.mxu0 0.0
        %3448 = vmatprep.subr.mxu0 0.0
        %3449 = vmatpush1.xpose.msra.mxu0 0.0
        %3450 = vmatprep.subr.mxu0 0.0
        %3451 = vmatpush1.xpose.msra.mxu0 0.0
        %3452 = vmatprep.subr.mxu0 0.0
        %3453 = vmatpush1.xpose.msra.mxu0 0.0
        %3454 = vmatprep.subr.mxu0 0.0
        %3455 = vmatpush1.xpose.msra.mxu0 0.0
        %3456 = vmatprep.subr.mxu0 0.0
        %3457 = vmatpush1.xpose.msra.mxu0 0.0
        %3458 = vmatprep.subr.mxu0 0.0
        %3459 = vmatpush1.xpose.msra.mxu0 0.0
        %3460 = vmatprep.subr.mxu0 0.0
        %3461 = vmatpush1.xpose.msra.mxu0 0.0
        %3462 = vmatprep.subr.mxu0 0.0
        %3463 = vmatpush1.xpose.msra.mxu0 0.0
        %3464 = vmatprep.subr.mxu0 0.0
        %3465 = vmatpush1.xpose.msra.mxu0 0.0
        %3466 = vmatprep.subr.mxu0 0.0
        %3467 = vmatpush1.xpose.msra.mxu0 0.0
        %3468 = vmatprep.subr.mxu0 0.0
        %3469 = vmatpush1.xpose.msra.mxu0 0.0
        %3470 = vmatprep.subr.mxu0 0.0
        %3471 = vmatpush1.xpose.msra.mxu0 0.0
        %3472 = vmatprep.subr.mxu0 0.0
        %3473 = vmatpush1.xpose.msra.mxu0 0.0
        %3474 = vmatprep.subr.mxu0 0.0
        %3475 = vmatpush1.xpose.msra.mxu0 0.0
        %3476 = vmatprep.subr.mxu0 0.0
        %3477 = vmatpush1.xpose.msra.mxu0 0.0
        %3478 = vmatprep.subr.mxu0 0.0
        %3479 = vmatpush1.xpose.msra.mxu0 0.0
        %3480 = vmatprep.subr.mxu0 0.0
        %3481 = vmatpush1.xpose.msra.mxu0 0.0
        %3482 = vmatprep.subr.mxu0 0.0
        %3483 = vmatpush1.xpose.msra.mxu0 0.0
        %3484 = vmatprep.subr.mxu0 0.0
        %3485 = vmatpush1.xpose.msra.mxu0 0.0
        %3486 = vmatprep.subr.mxu0 0.0
        %3487 = vmatpush1.xpose.msra.mxu0 0.0
        %3488 = vmatprep.subr.mxu0 0.0
        %3489 = vmatpush1.xpose.msra.mxu0 0.0
        %3490 = vmatprep.subr.mxu0 0.0
        %3491 = vmatpush1.xpose.msra.mxu0 0.0
        %3492 = vmatprep.subr.mxu0 0.0
        %3493 = vmatpush1.xpose.msra.mxu0 0.0
        %3494 = vmatprep.subr.mxu0 0.0
        %3495 = vmatpush1.xpose.msra.mxu0 0.0
        %3496 = vmatprep.mubr.f32.mxu0 0.0
        %3497 = vmatmul.mubr.f32.gmra.mrb[0].mxu0 %v3427
        %v3498 = vpop.f32.mrb[0].mxu0
        %v3499 = vadd.f32 %v3272, %v3498
        %v3500 = vpop.f32.mrb[0].mxu0
        %3501 = vdwg.mxu0
        %v3503 = vsel %vm2103, %v3259, 0
        %v3506 = vsel %vm2103, %v3263, 0
        %3508 = vmatprep.subr.mxu0 0.0
        %3509 = vmatpush1.xpose.msra.mxu0 %v3506
        %3510 = vmatprep.subr.mxu0 0.0
        %3511 = vmatpush1.xpose.msra.mxu0 0.0
        %3512 = vmatprep.subr.mxu0 0.0
        %3513 = vmatpush1.xpose.msra.mxu0 0.0
        %3514 = vmatprep.subr.mxu0 0.0
        %3515 = vmatpush1.xpose.msra.mxu0 0.0
        %3516 = vmatprep.subr.mxu0 0.0
        %3517 = vmatpush1.xpose.msra.mxu0 0.0
        %3518 = vmatprep.subr.mxu0 0.0
        %3519 = vmatpush1.xpose.msra.mxu0 0.0
        %3520 = vmatprep.subr.mxu0 0.0
        %3521 = vmatpush1.xpose.msra.mxu0 0.0
        %3522 = vmatprep.subr.mxu0 0.0
        %3523 = vmatpush1.xpose.msra.mxu0 0.0
        %3524 = vmatprep.subr.mxu0 0.0
        %3525 = vmatpush1.xpose.msra.mxu0 0.0
        %3526 = vmatprep.subr.mxu0 0.0
        %3527 = vmatpush1.xpose.msra.mxu0 0.0
        %3528 = vmatprep.subr.mxu0 0.0
        %3529 = vmatpush1.xpose.msra.mxu0 0.0
        %3530 = vmatprep.subr.mxu0 0.0
        %3531 = vmatpush1.xpose.msra.mxu0 0.0
        %3532 = vmatprep.subr.mxu0 0.0
        %3533 = vmatpush1.xpose.msra.mxu0 0.0
        %3534 = vmatprep.subr.mxu0 0.0
        %3535 = vmatpush1.xpose.msra.mxu0 0.0
        %3536 = vmatprep.subr.mxu0 0.0
        %3537 = vmatpush1.xpose.msra.mxu0 0.0
        %3538 = vmatprep.subr.mxu0 0.0
        %3539 = vmatpush1.xpose.msra.mxu0 0.0
        %3540 = vmatprep.subr.mxu0 0.0
        %3541 = vmatpush1.xpose.msra.mxu0 0.0
        %3542 = vmatprep.subr.mxu0 0.0
        %3543 = vmatpush1.xpose.msra.mxu0 0.0
        %3544 = vmatprep.subr.mxu0 0.0
        %3545 = vmatpush1.xpose.msra.mxu0 0.0
        %3546 = vmatprep.subr.mxu0 0.0
        %3547 = vmatpush1.xpose.msra.mxu0 0.0
        %3548 = vmatprep.subr.mxu0 0.0
        %3549 = vmatpush1.xpose.msra.mxu0 0.0
        %3550 = vmatprep.subr.mxu0 0.0
        %3551 = vmatpush1.xpose.msra.mxu0 0.0
        %3552 = vmatprep.subr.mxu0 0.0
        %3553 = vmatpush1.xpose.msra.mxu0 0.0
        %3554 = vmatprep.subr.mxu0 0.0
        %3555 = vmatpush1.xpose.msra.mxu0 0.0
        %3556 = vmatprep.subr.mxu0 0.0
        %3557 = vmatpush1.xpose.msra.mxu0 0.0
        %3558 = vmatprep.subr.mxu0 0.0
        %3559 = vmatpush1.xpose.msra.mxu0 0.0
        %3560 = vmatprep.subr.mxu0 0.0
        %3561 = vmatpush1.xpose.msra.mxu0 0.0
        %3562 = vmatprep.subr.mxu0 0.0
        %3563 = vmatpush1.xpose.msra.mxu0 0.0
        %3564 = vmatprep.subr.mxu0 0.0
        %3565 = vmatpush1.xpose.msra.mxu0 0.0
        %3566 = vmatprep.subr.mxu0 0.0
        %3567 = vmatpush1.xpose.msra.mxu0 0.0
        %3568 = vmatprep.subr.mxu0 0.0
        %3569 = vmatpush1.xpose.msra.mxu0 0.0
        %3570 = vmatprep.subr.mxu0 0.0
        %3571 = vmatpush1.xpose.msra.mxu0 0.0
        %3572 = vmatprep.mubr.f32.mxu0 0.0
        %3573 = vmatmul.mubr.f32.gmra.mrb[0].mxu0 %v3503
        %v3574 = vpop.f32.mrb[0].mxu0
        %v3575 = vadd.f32 %v3272, %v3574
        %v3576 = vpop.f32.mrb[0].mxu0
        %3577 = vdwg.mxu0
        %v3578 = vsel %vm2103, %v3347, -inf
        %3579 = vmax.xlane.f32.xlu0 %v3578
        %v3580 = vpop.xlane.xlu0 %3579
        %v3581 = vsel %vm2103, %v3423, -inf
        %3582 = vmax.xlane.f32.xlu0 %v3581
        %v3583 = vpop.xlane.xlu0 %3582
        %v3584 = vsel %vm2103, %v3499, -inf
        %3585 = vmax.xlane.f32.xlu0 %v3584
        %v3586 = vpop.xlane.xlu0 %3585
        %v3587 = vsel %vm2103, %v3575, -inf
        %3588 = vmax.xlane.f32.xlu0 %v3587
        %v3589 = vpop.xlane.xlu0 %3588
        %v3590 = vsub.f32 %v3347, %v3580
        %v3591 = vsub.f32 %v3423, %v3583
        %v3592 = vsub.f32 %v3499, %v3586
        %v3593 = vsub.f32 %v3575, %v3589
        %v3594 = vmul.f32 %v3590, 1.442695
        %v3595 = vpow.pop %v3594
        %v3596 = vmul.f32 %v3591, 1.442695
        %v3597 = vpow.pop %v3596
        %v3598 = vmul.f32 %v3592, 1.442695
        %v3599 = vpow.pop %v3598
        %v3600 = vmul.f32 %v3593, 1.442695
        %v3601 = vpow.pop %v3600
        %v3602 = vsel %vm2103, %v3595, 0.0
        %3603 = vadd.xlane.f32.xlu0 %v3602
        %v3604 = vpop.xlane.xlu0 %3603
        %v3605 = vsel %vm2103, %v3597, 0.0
        %3606 = vadd.xlane.f32.xlu0 %v3605
        %v3607 = vpop.xlane.xlu0 %3606
        %v3608 = vsel %vm2103, %v3599, 0.0
        %3609 = vadd.xlane.f32.xlu0 %v3608
        %v3610 = vpop.xlane.xlu0 %3609
        %v3611 = vsel %vm2103, %v3601, 0.0
        %3612 = vadd.xlane.f32.xlu0 %v3611
        %v3613 = vpop.xlane.xlu0 %3612
        %v3614 = vrcp.pop %v3604
        %v3615 = vmul.f32 %v3595, %v3614
        %v3616 = vrcp.pop %v3607
        %v3617 = vmul.f32 %v3597, %v3616
        %v3618 = vrcp.pop %v3610
        %v3619 = vmul.f32 %v3599, %v3618
        %v3620 = vrcp.pop %v3613
        %v3621 = vmul.f32 %v3601, %v3620
        %v3623 = vsel %vm2103, %v3615, 0
        %3625 = vmatprep.subr.mxu0 0.0
        %3626 = vmatpush1.msra.mxu0 %v3264
        %3627 = vmatprep.subr.mxu0 0.0
        %3628 = vmatpush1.msra.mxu0 0.0
        %3629 = vmatprep.subr.mxu0 0.0
        %3630 = vmatpush1.msra.mxu0 0.0
        %3631 = vmatprep.subr.mxu0 0.0
        %3632 = vmatpush1.msra.mxu0 0.0
        %3633 = vmatprep.subr.mxu0 0.0
        %3634 = vmatpush1.msra.mxu0 0.0
        %3635 = vmatprep.subr.mxu0 0.0
        %3636 = vmatpush1.msra.mxu0 0.0
        %3637 = vmatprep.subr.mxu0 0.0
        %3638 = vmatpush1.msra.mxu0 0.0
        %3639 = vmatprep.subr.mxu0 0.0
        %3640 = vmatpush1.msra.mxu0 0.0
        %3641 = vmatprep.subr.mxu0 0.0
        %3642 = vmatpush1.msra.mxu0 0.0
        %3643 = vmatprep.subr.mxu0 0.0
        %3644 = vmatpush1.msra.mxu0 0.0
        %3645 = vmatprep.subr.mxu0 0.0
        %3646 = vmatpush1.msra.mxu0 0.0
        %3647 = vmatprep.subr.mxu0 0.0
        %3648 = vmatpush1.msra.mxu0 0.0
        %3649 = vmatprep.subr.mxu0 0.0
        %3650 = vmatpush1.msra.mxu0 0.0
        %3651 = vmatprep.subr.mxu0 0.0
        %3652 = vmatpush1.msra.mxu0 0.0
        %3653 = vmatprep.subr.mxu0 0.0
        %3654 = vmatpush1.msra.mxu0 0.0
        %3655 = vmatprep.subr.mxu0 0.0
        %3656 = vmatpush1.msra.mxu0 0.0
        %3657 = vmatprep.subr.mxu0 0.0
        %3658 = vmatpush1.msra.mxu0 0.0
        %3659 = vmatprep.subr.mxu0 0.0
        %3660 = vmatpush1.msra.mxu0 0.0
        %3661 = vmatprep.subr.mxu0 0.0
        %3662 = vmatpush1.msra.mxu0 0.0
        %3663 = vmatprep.subr.mxu0 0.0
        %3664 = vmatpush1.msra.mxu0 0.0
        %3665 = vmatprep.subr.mxu0 0.0
        %3666 = vmatpush1.msra.mxu0 0.0
        %3667 = vmatprep.subr.mxu0 0.0
        %3668 = vmatpush1.msra.mxu0 0.0
        %3669 = vmatprep.subr.mxu0 0.0
        %3670 = vmatpush1.msra.mxu0 0.0
        %3671 = vmatprep.subr.mxu0 0.0
        %3672 = vmatpush1.msra.mxu0 0.0
        %3673 = vmatprep.subr.mxu0 0.0
        %3674 = vmatpush1.msra.mxu0 0.0
        %3675 = vmatprep.subr.mxu0 0.0
        %3676 = vmatpush1.msra.mxu0 0.0
        %3677 = vmatprep.subr.mxu0 0.0
        %3678 = vmatpush1.msra.mxu0 0.0
        %3679 = vmatprep.subr.mxu0 0.0
        %3680 = vmatpush1.msra.mxu0 0.0
        %3681 = vmatprep.subr.mxu0 0.0
        %3682 = vmatpush1.msra.mxu0 0.0
        %3683 = vmatprep.subr.mxu0 0.0
        %3684 = vmatpush1.msra.mxu0 0.0
        %3685 = vmatprep.subr.mxu0 0.0
        %3686 = vmatpush1.msra.mxu0 0.0
        %3687 = vmatprep.subr.mxu0 0.0
        %3688 = vmatpush1.msra.mxu0 0.0
        %3689 = vmatprep.mubr.f32.mxu0 0.0
        %3690 = vmatmul.mubr.f32.gmra.mrb[0].mxu0 %v3623
        %v3691 = vpop.f32.mrb[0].mxu0
        %v3692 = vadd.f32 0.0, %v3691
        %v3693 = vpop.f32.mrb[0].mxu0
        %3694 = vdwg.mxu0
        %v3696 = vsel %vm2103, %v3617, 0
        %3698 = vmatprep.subr.mxu0 0.0
        %3699 = vmatpush1.msra.mxu0 %v3265
        %3700 = vmatprep.subr.mxu0 0.0
        %3701 = vmatpush1.msra.mxu0 0.0
        %3702 = vmatprep.subr.mxu0 0.0
        %3703 = vmatpush1.msra.mxu0 0.0
        %3704 = vmatprep.subr.mxu0 0.0
        %3705 = vmatpush1.msra.mxu0 0.0
        %3706 = vmatprep.subr.mxu0 0.0
        %3707 = vmatpush1.msra.mxu0 0.0
        %3708 = vmatprep.subr.mxu0 0.0
        %3709 = vmatpush1.msra.mxu0 0.0
        %3710 = vmatprep.subr.mxu0 0.0
        %3711 = vmatpush1.msra.mxu0 0.0
        %3712 = vmatprep.subr.mxu0 0.0
        %3713 = vmatpush1.msra.mxu0 0.0
        %3714 = vmatprep.subr.mxu0 0.0
        %3715 = vmatpush1.msra.mxu0 0.0
        %3716 = vmatprep.subr.mxu0 0.0
        %3717 = vmatpush1.msra.mxu0 0.0
        %3718 = vmatprep.subr.mxu0 0.0
        %3719 = vmatpush1.msra.mxu0 0.0
        %3720 = vmatprep.subr.mxu0 0.0
        %3721 = vmatpush1.msra.mxu0 0.0
        %3722 = vmatprep.subr.mxu0 0.0
        %3723 = vmatpush1.msra.mxu0 0.0
        %3724 = vmatprep.subr.mxu0 0.0
        %3725 = vmatpush1.msra.mxu0 0.0
        %3726 = vmatprep.subr.mxu0 0.0
        %3727 = vmatpush1.msra.mxu0 0.0
        %3728 = vmatprep.subr.mxu0 0.0
        %3729 = vmatpush1.msra.mxu0 0.0
        %3730 = vmatprep.subr.mxu0 0.0
        %3731 = vmatpush1.msra.mxu0 0.0
        %3732 = vmatprep.subr.mxu0 0.0
        %3733 = vmatpush1.msra.mxu0 0.0
        %3734 = vmatprep.subr.mxu0 0.0
        %3735 = vmatpush1.msra.mxu0 0.0
        %3736 = vmatprep.subr.mxu0 0.0
        %3737 = vmatpush1.msra.mxu0 0.0
        %3738 = vmatprep.subr.mxu0 0.0
        %3739 = vmatpush1.msra.mxu0 0.0
        %3740 = vmatprep.subr.mxu0 0.0
        %3741 = vmatpush1.msra.mxu0 0.0
        %3742 = vmatprep.subr.mxu0 0.0
        %3743 = vmatpush1.msra.mxu0 0.0
        %3744 = vmatprep.subr.mxu0 0.0
        %3745 = vmatpush1.msra.mxu0 0.0
        %3746 = vmatprep.subr.mxu0 0.0
        %3747 = vmatpush1.msra.mxu0 0.0
        %3748 = vmatprep.subr.mxu0 0.0
        %3749 = vmatpush1.msra.mxu0 0.0
        %3750 = vmatprep.subr.mxu0 0.0
        %3751 = vmatpush1.msra.mxu0 0.0
        %3752 = vmatprep.subr.mxu0 0.0
        %3753 = vmatpush1.msra.mxu0 0.0
        %3754 = vmatprep.subr.mxu0 0.0
        %3755 = vmatpush1.msra.mxu0 0.0
        %3756 = vmatprep.subr.mxu0 0.0
        %3757 = vmatpush1.msra.mxu0 0.0
        %3758 = vmatprep.subr.mxu0 0.0
        %3759 = vmatpush1.msra.mxu0 0.0
        %3760 = vmatprep.subr.mxu0 0.0
        %3761 = vmatpush1.msra.mxu0 0.0
        %3762 = vmatprep.mubr.f32.mxu0 0.0
        %3763 = vmatmul.mubr.f32.gmra.mrb[0].mxu0 %v3696
        %v3764 = vpop.f32.mrb[0].mxu0
        %v3765 = vadd.f32 0.0, %v3764
        %v3766 = vpop.f32.mrb[0].mxu0
        %3767 = vdwg.mxu0
        %v3769 = vsel %vm2103, %v3619, 0
        %3771 = vmatprep.subr.mxu0 0.0
        %3772 = vmatpush1.msra.mxu0 %v3266
        %3773 = vmatprep.subr.mxu0 0.0
        %3774 = vmatpush1.msra.mxu0 0.0
        %3775 = vmatprep.subr.mxu0 0.0
        %3776 = vmatpush1.msra.mxu0 0.0
        %3777 = vmatprep.subr.mxu0 0.0
        %3778 = vmatpush1.msra.mxu0 0.0
        %3779 = vmatprep.subr.mxu0 0.0
        %3780 = vmatpush1.msra.mxu0 0.0
        %3781 = vmatprep.subr.mxu0 0.0
        %3782 = vmatpush1.msra.mxu0 0.0
        %3783 = vmatprep.subr.mxu0 0.0
        %3784 = vmatpush1.msra.mxu0 0.0
        %3785 = vmatprep.subr.mxu0 0.0
        %3786 = vmatpush1.msra.mxu0 0.0
        %3787 = vmatprep.subr.mxu0 0.0
        %3788 = vmatpush1.msra.mxu0 0.0
        %3789 = vmatprep.subr.mxu0 0.0
        %3790 = vmatpush1.msra.mxu0 0.0
        %3791 = vmatprep.subr.mxu0 0.0
        %3792 = vmatpush1.msra.mxu0 0.0
        %3793 = vmatprep.subr.mxu0 0.0
        %3794 = vmatpush1.msra.mxu0 0.0
        %3795 = vmatprep.subr.mxu0 0.0
        %3796 = vmatpush1.msra.mxu0 0.0
        %3797 = vmatprep.subr.mxu0 0.0
        %3798 = vmatpush1.msra.mxu0 0.0
        %3799 = vmatprep.subr.mxu0 0.0
        %3800 = vmatpush1.msra.mxu0 0.0
        %3801 = vmatprep.subr.mxu0 0.0
        %3802 = vmatpush1.msra.mxu0 0.0
        %3803 = vmatprep.subr.mxu0 0.0
        %3804 = vmatpush1.msra.mxu0 0.0
        %3805 = vmatprep.subr.mxu0 0.0
        %3806 = vmatpush1.msra.mxu0 0.0
        %3807 = vmatprep.subr.mxu0 0.0
        %3808 = vmatpush1.msra.mxu0 0.0
        %3809 = vmatprep.subr.mxu0 0.0
        %3810 = vmatpush1.msra.mxu0 0.0
        %3811 = vmatprep.subr.mxu0 0.0
        %3812 = vmatpush1.msra.mxu0 0.0
        %3813 = vmatprep.subr.mxu0 0.0
        %3814 = vmatpush1.msra.mxu0 0.0
        %3815 = vmatprep.subr.mxu0 0.0
        %3816 = vmatpush1.msra.mxu0 0.0
        %3817 = vmatprep.subr.mxu0 0.0
        %3818 = vmatpush1.msra.mxu0 0.0
        %3819 = vmatprep.subr.mxu0 0.0
        %3820 = vmatpush1.msra.mxu0 0.0
        %3821 = vmatprep.subr.mxu0 0.0
        %3822 = vmatpush1.msra.mxu0 0.0
        %3823 = vmatprep.subr.mxu0 0.0
        %3824 = vmatpush1.msra.mxu0 0.0
        %3825 = vmatprep.subr.mxu0 0.0
        %3826 = vmatpush1.msra.mxu0 0.0
        %3827 = vmatprep.subr.mxu0 0.0
        %3828 = vmatpush1.msra.mxu0 0.0
        %3829 = vmatprep.subr.mxu0 0.0
        %3830 = vmatpush1.msra.mxu0 0.0
        %3831 = vmatprep.subr.mxu0 0.0
        %3832 = vmatpush1.msra.mxu0 0.0
        %3833 = vmatprep.subr.mxu0 0.0
        %3834 = vmatpush1.msra.mxu0 0.0
        %3835 = vmatprep.mubr.f32.mxu0 0.0
        %3836 = vmatmul.mubr.f32.gmra.mrb[0].mxu0 %v3769
        %v3837 = vpop.f32.mrb[0].mxu0
        %v3838 = vadd.f32 0.0, %v3837
        %v3839 = vpop.f32.mrb[0].mxu0
        %3840 = vdwg.mxu0
        %v3842 = vsel %vm2103, %v3621, 0
        %3844 = vmatprep.subr.mxu0 0.0
        %3845 = vmatpush1.msra.mxu0 %v3267
        %3846 = vmatprep.subr.mxu0 0.0
        %3847 = vmatpush1.msra.mxu0 0.0
        %3848 = vmatprep.subr.mxu0 0.0
        %3849 = vmatpush1.msra.mxu0 0.0
        %3850 = vmatprep.subr.mxu0 0.0
        %3851 = vmatpush1.msra.mxu0 0.0
        %3852 = vmatprep.subr.mxu0 0.0
        %3853 = vmatpush1.msra.mxu0 0.0
        %3854 = vmatprep.subr.mxu0 0.0
        %3855 = vmatpush1.msra.mxu0 0.0
        %3856 = vmatprep.subr.mxu0 0.0
        %3857 = vmatpush1.msra.mxu0 0.0
        %3858 = vmatprep.subr.mxu0 0.0
        %3859 = vmatpush1.msra.mxu0 0.0
        %3860 = vmatprep.subr.mxu0 0.0
        %3861 = vmatpush1.msra.mxu0 0.0
        %3862 = vmatprep.subr.mxu0 0.0
        %3863 = vmatpush1.msra.mxu0 0.0
        %3864 = vmatprep.subr.mxu0 0.0
        %3865 = vmatpush1.msra.mxu0 0.0
        %3866 = vmatprep.subr.mxu0 0.0
        %3867 = vmatpush1.msra.mxu0 0.0
        %3868 = vmatprep.subr.mxu0 0.0
        %3869 = vmatpush1.msra.mxu0 0.0
        %3870 = vmatprep.subr.mxu0 0.0
        %3871 = vmatpush1.msra.mxu0 0.0
        %3872 = vmatprep.subr.mxu0 0.0
        %3873 = vmatpush1.msra.mxu0 0.0
        %3874 = vmatprep.subr.mxu0 0.0
        %3875 = vmatpush1.msra.mxu0 0.0
        %3876 = vmatprep.subr.mxu0 0.0
        %3877 = vmatpush1.msra.mxu0 0.0
        %3878 = vmatprep.subr.mxu0 0.0
        %3879 = vmatpush1.msra.mxu0 0.0
        %3880 = vmatprep.subr.mxu0 0.0
        %3881 = vmatpush1.msra.mxu0 0.0
        %3882 = vmatprep.subr.mxu0 0.0
        %3883 = vmatpush1.msra.mxu0 0.0
        %3884 = vmatprep.subr.mxu0 0.0
        %3885 = vmatpush1.msra.mxu0 0.0
        %3886 = vmatprep.subr.mxu0 0.0
        %3887 = vmatpush1.msra.mxu0 0.0
        %3888 = vmatprep.subr.mxu0 0.0
        %3889 = vmatpush1.msra.mxu0 0.0
        %3890 = vmatprep.subr.mxu0 0.0
        %3891 = vmatpush1.msra.mxu0 0.0
        %3892 = vmatprep.subr.mxu0 0.0
        %3893 = vmatpush1.msra.mxu0 0.0
        %3894 = vmatprep.subr.mxu0 0.0
        %3895 = vmatpush1.msra.mxu0 0.0
        %3896 = vmatprep.subr.mxu0 0.0
        %3897 = vmatpush1.msra.mxu0 0.0
        %3898 = vmatprep.subr.mxu0 0.0
        %3899 = vmatpush1.msra.mxu0 0.0
        %3900 = vmatprep.subr.mxu0 0.0
        %3901 = vmatpush1.msra.mxu0 0.0
        %3902 = vmatprep.subr.mxu0 0.0
        %3903 = vmatpush1.msra.mxu0 0.0
        %3904 = vmatprep.subr.mxu0 0.0
        %3905 = vmatpush1.msra.mxu0 0.0
        %3906 = vmatprep.subr.mxu0 0.0
        %3907 = vmatpush1.msra.mxu0 0.0
        %3908 = vmatprep.mubr.f32.mxu0 0.0
        %3909 = vmatmul.mubr.f32.gmra.mrb[0].mxu0 %v3842
        %v3910 = vpop.f32.mrb[0].mxu0
        %v3911 = vadd.f32 0.0, %v3910
        %v3912 = vpop.f32.mrb[0].mxu0
        %3913 = vdwg.mxu0
        %v3914 = vcombine.low %v3692, %v3838
        %v3915 = vcombine.high %v3692, %v3838
        %v3917 = vunpack.c.l.s4 1983009808
        %v3918 = vunpack.c.0.s8 %v3917
        %v3919 = vlaneseq
        %v3920 = vshrl.u32 %v3919, 7
        %v3921 = vsub.s32 %v3918, %v3920
        %v3922 = vrot.slane %v3914, %v3921
        %v3924 = vunpack.c.l.s4 1983009808
        %v3925 = vunpack.c.0.s8 %v3924
        %v3926 = vlaneseq
        %v3927 = vshrl.u32 %v3926, 7
        %v3928 = vsub.s32 %v3925, %v3927
        %v3929 = vrot.slane %v3915, %v3928
        %v3930 = vcombine.low %v3765, %v3911
        %v3931 = vcombine.high %v3765, %v3911
        %v3933 = vunpack.c.l.s4 1983009808
        %v3934 = vunpack.c.0.s8 %v3933
        %v3935 = vlaneseq
        %v3936 = vshrl.u32 %v3935, 7
        %v3937 = vsub.s32 %v3934, %v3936
        %v3938 = vrot.slane %v3930, %v3937
        %v3940 = vunpack.c.l.s4 1983009808
        %v3941 = vunpack.c.0.s8 %v3940
        %v3942 = vlaneseq
        %v3943 = vshrl.u32 %v3942, 7
        %v3944 = vsub.s32 %v3941, %v3943
        %v3945 = vrot.slane %v3931, %v3944
        %v3946 = vcombine.low %v3922, %v3938
        %v3947 = vcombine.high %v3922, %v3938
        %v3949 = vunpack.c.l.s4 1934713408
        %v3950 = vunpack.c.0.s8 %v3949
        %v3951 = vlaneseq
        %v3952 = vshrl.u32 %v3951, 7
        %v3953 = vsub.s32 %v3950, %v3952
        %v3954 = vrot.slane %v3946, %v3953
        %v3956 = vunpack.c.l.s4 1934713408
        %v3957 = vunpack.c.0.s8 %v3956
        %v3958 = vlaneseq
        %v3959 = vshrl.u32 %v3958, 7
        %v3960 = vsub.s32 %v3957, %v3959
        %v3961 = vrot.slane %v3947, %v3960
        %v3962 = vcombine.low %v3929, %v3945
        %v3963 = vcombine.high %v3929, %v3945
        %v3965 = vunpack.c.l.s4 1934713408
        %v3966 = vunpack.c.0.s8 %v3965
        %v3967 = vlaneseq
        %v3968 = vshrl.u32 %v3967, 7
        %v3969 = vsub.s32 %v3966, %v3968
        %v3970 = vrot.slane %v3962, %v3969
        %v3972 = vunpack.c.l.s4 1934713408
        %v3973 = vunpack.c.0.s8 %v3972
        %v3974 = vlaneseq
        %v3975 = vshrl.u32 %v3974, 7
        %v3976 = vsub.s32 %v3973, %v3975
        %v3977 = vrot.slane %v3963, %v3976
        %v3978 = vcombine.high %v3954, 0.0
        %v3979 = vcombine.high %v3961, 0.0
        %v3980 = vcombine.high %v3970, 0.0
        %v3981 = vcombine.high %v3977, 0.0
        %v3982 = vcombine.low %v3954, %v3961
        %v3984 = vunpack.c.l.s4 1983009808
        %v3985 = vunpack.c.0.s8 %v3984
        %v3986 = vlaneseq
        %v3987 = vshrl.u32 %v3986, 7
        %v3988 = vsub.s32 %v3985, %v3987
        %v3989 = vrot.slane %v3982, %v3988
        %v3990 = vcombine.low %v3978, %v3979
        %v3992 = vunpack.c.l.s4 1983009808
        %v3993 = vunpack.c.0.s8 %v3992
        %v3994 = vlaneseq
        %v3995 = vshrl.u32 %v3994, 7
        %v3996 = vsub.s32 %v3993, %v3995
        %v3997 = vrot.slane %v3990, %v3996
        %v3998 = vcombine.low %v3970, %v3977
        %v4000 = vunpack.c.l.s4 1983009808
        %v4001 = vunpack.c.0.s8 %v4000
        %v4002 = vlaneseq
        %v4003 = vshrl.u32 %v4002, 7
        %v4004 = vsub.s32 %v4001, %v4003
        %v4005 = vrot.slane %v3998, %v4004
        %v4006 = vcombine.low %v3980, %v3981
        %v4008 = vunpack.c.l.s4 1983009808
        %v4009 = vunpack.c.0.s8 %v4008
        %v4010 = vlaneseq
        %v4011 = vshrl.u32 %v4010, 7
        %v4012 = vsub.s32 %v4009, %v4011
        %v4013 = vrot.slane %v4006, %v4012
        %v4014 = vcombine.low %v3989, %v3997
        %v4015 = vcombine.high %v3989, %v3997
        %v4017 = vunpack.c.l.s4 1934713408
        %v4018 = vunpack.c.0.s8 %v4017
        %v4019 = vlaneseq
        %v4020 = vshrl.u32 %v4019, 7
        %v4021 = vsub.s32 %v4018, %v4020
        %v4022 = vrot.slane %v4014, %v4021
        %v4024 = vunpack.c.l.s4 1934713408
        %v4025 = vunpack.c.0.s8 %v4024
        %v4026 = vlaneseq
        %v4027 = vshrl.u32 %v4026, 7
        %v4028 = vsub.s32 %v4025, %v4027
        %v4029 = vrot.slane %v4015, %v4028
        %v4030 = vcombine.low %v4005, %v4013
        %v4031 = vcombine.high %v4005, %v4013
        %v4033 = vunpack.c.l.s4 1934713408
        %v4034 = vunpack.c.0.s8 %v4033
        %v4035 = vlaneseq
        %v4036 = vshrl.u32 %v4035, 7
        %v4037 = vsub.s32 %v4034, %v4036
        %v4038 = vrot.slane %v4030, %v4037
        %v4040 = vunpack.c.l.s4 1934713408
        %v4041 = vunpack.c.0.s8 %v4040
        %v4042 = vlaneseq
        %v4043 = vshrl.u32 %v4042, 7
        %v4044 = vsub.s32 %v4041, %v4043
        %v4045 = vrot.slane %v4031, %v4044
        %v4046 = vcombine.low %v4022, %v4038
        %v4047 = vcombine.high %v4022, %v4038
        %v4048 = vcombine.low %v4029, %v4045
        %v4049 = vcombine.high %v4029, %v4045
        %4051 = vrot.lane.b32.xlu0 %v4047, 8
        %v4052 = vpop.permute.xlu0 %4051
        %4055 = vrot.lane.b32.xlu0 %v4048, 16
        %v4056 = vpop.permute.xlu0 %4055
        %4059 = vrot.lane.b32.xlu0 %v4049, 24
        %v4060 = vpop.permute.xlu0 %4059
        %v4062 = vsel %vm2103, %v4046, %v4052
        %v4063 = vsel %vm2420, %v4062, %v4056
        %v4064 = vsel %vm2907, %v4063, %v4060
        %s4065 = scalar_lea.vmem [#allocation6], 224
        %v4066 = vld [vmem:[%s4065] sm:$0xff]
        %v4067 = vld [vmem:[%s4065 + $0x8] sm:$0xff]
        %v4068 = vld [vmem:[%s4065 + $0x10] sm:$0xff]
        %v4069 = vld [vmem:[%s4065 + $0x18] sm:$0xff]
        %s4070 = scalar_lea.vmem %s7, 7
        %v4071 = vld [vmem:[%s4070] sm:$0x1]
        %v4073 = vlaneseq
        %v4074 = vshrl.u32 %v4073, 7
        %v4075 = vsub.s32 0, %v4074
        %v4076 = vrot.slane %v4071, %v4075
        %v4079 = vsel %vm1824, %v4064, 0
        %4081 = vmatprep.subr.mxu0 0.0
        %4082 = vmatpush1.msra.mxu0 %v4066
        %4083 = vmatprep.subr.mxu0 0.0
        %4084 = vmatpush1.msra.mxu0 %v4067
        %4085 = vmatprep.subr.mxu0 0.0
        %4086 = vmatpush1.msra.mxu0 %v4068
        %4087 = vmatprep.subr.mxu0 0.0
        %4088 = vmatpush1.msra.mxu0 %v4069
        %4089 = vmatprep.subr.mxu0 0.0
        %4090 = vmatpush1.msra.mxu0 0.0
        %4091 = vmatprep.subr.mxu0 0.0
        %4092 = vmatpush1.msra.mxu0 0.0
        %4093 = vmatprep.subr.mxu0 0.0
        %4094 = vmatpush1.msra.mxu0 0.0
        %4095 = vmatprep.subr.mxu0 0.0
        %4096 = vmatpush1.msra.mxu0 0.0
        %4097 = vmatprep.subr.mxu0 0.0
        %4098 = vmatpush1.msra.mxu0 0.0
        %4099 = vmatprep.subr.mxu0 0.0
        %4100 = vmatpush1.msra.mxu0 0.0
        %4101 = vmatprep.subr.mxu0 0.0
        %4102 = vmatpush1.msra.mxu0 0.0
        %4103 = vmatprep.subr.mxu0 0.0
        %4104 = vmatpush1.msra.mxu0 0.0
        %4105 = vmatprep.subr.mxu0 0.0
        %4106 = vmatpush1.msra.mxu0 0.0
        %4107 = vmatprep.subr.mxu0 0.0
        %4108 = vmatpush1.msra.mxu0 0.0
        %4109 = vmatprep.subr.mxu0 0.0
        %4110 = vmatpush1.msra.mxu0 0.0
        %4111 = vmatprep.subr.mxu0 0.0
        %4112 = vmatpush1.msra.mxu0 0.0
        %4113 = vmatprep.subr.mxu0 0.0
        %4114 = vmatpush1.msra.mxu0 0.0
        %4115 = vmatprep.subr.mxu0 0.0
        %4116 = vmatpush1.msra.mxu0 0.0
        %4117 = vmatprep.subr.mxu0 0.0
        %4118 = vmatpush1.msra.mxu0 0.0
        %4119 = vmatprep.subr.mxu0 0.0
        %4120 = vmatpush1.msra.mxu0 0.0
        %4121 = vmatprep.subr.mxu0 0.0
        %4122 = vmatpush1.msra.mxu0 0.0
        %4123 = vmatprep.subr.mxu0 0.0
        %4124 = vmatpush1.msra.mxu0 0.0
        %4125 = vmatprep.subr.mxu0 0.0
        %4126 = vmatpush1.msra.mxu0 0.0
        %4127 = vmatprep.subr.mxu0 0.0
        %4128 = vmatpush1.msra.mxu0 0.0
        %4129 = vmatprep.subr.mxu0 0.0
        %4130 = vmatpush1.msra.mxu0 0.0
        %4131 = vmatprep.subr.mxu0 0.0
        %4132 = vmatpush1.msra.mxu0 0.0
        %4133 = vmatprep.subr.mxu0 0.0
        %4134 = vmatpush1.msra.mxu0 0.0
        %4135 = vmatprep.subr.mxu0 0.0
        %4136 = vmatpush1.msra.mxu0 0.0
        %4137 = vmatprep.subr.mxu0 0.0
        %4138 = vmatpush1.msra.mxu0 0.0
        %4139 = vmatprep.subr.mxu0 0.0
        %4140 = vmatpush1.msra.mxu0 0.0
        %4141 = vmatprep.subr.mxu0 0.0
        %4142 = vmatpush1.msra.mxu0 0.0
        %4143 = vmatprep.subr.mxu0 0.0
        %4144 = vmatpush1.msra.mxu0 0.0
        %4145 = vmatprep.mubr.f32.mxu0 0.0
        %4146 = vmatmul.mubr.f32.gmra.mrb[0].mxu0 %v4079
        %v4147 = vpop.f32.mrb[0].mxu0
        %v4148 = vadd.f32 %v4076, %v4147
        %v4149 = vpop.f32.mrb[0].mxu0
        %4150 = vdwg.mxu0
        %v4151 = vadd.f32 %v2995, %v4148
        %v4152 = vld [vmem:[%s4 + $0x2] sm:$0x1]
        %v4153 = vld [vmem:[%s5 + $0x2] sm:$0x1]
        %v4154 = vsel %vm1824, %v4151, 0.0
        %4155 = vadd.xlane.f32.xlu0 %v4154
        %v4156 = vpop.xlane.xlu0 %4155
        %v4157 = vmul.f32 %v4156, %v1828
        %v4158 = vsub.f32 %v4151, %v4157
        %v4159 = vmul.f32 %v4158, %v4158
        %v4160 = vsel %vm1824, %v4159, 0.0
        %4161 = vadd.xlane.f32.xlu0 %v4160
        %v4162 = vpop.xlane.xlu0 %4161
        %v4163 = vmul.f32 %v4162, %v1835
        %v4164 = vlaneseq
        %v4165 = vshrl.u32 %v4164, 7
        %v4166 = vsub.s32 0, %v4165
        %v4167 = vrot.slane %v4152, %v4166
        %v4168 = vmul.f32 %v4167, %v4158
        %v4169 = vrsqrt.pop %v4163
        %v4170 = vmul.f32 %v4163, %v4169
        %vm4171 = vcmp.eq.f32.partialorder %v4163, inf
        %v4172 = vsel %vm4171, %v4163, %v4170
        %vm4173 = vcmp.eq.f32.partialorder %v4163, 0.0
        %v4174 = vand.u32 %v4163, 2147483648
        %v4175 = vsel %vm4173, %v4174, %v4172
        %v4176 = vadd.f32 %v4175, 1e-06
        %v4177 = vrcp.pop %v4176
        %v4178 = vmul.f32 %v4168, %v4177
        %v4179 = vlaneseq
        %v4180 = vshrl.u32 %v4179, 7
        %v4181 = vsub.s32 0, %v4180
        %v4182 = vrot.slane %v4153, %v4181
        %v4183 = vadd.f32 %v4178, %v4182
        %v4184 = vld [vmem:[%s8] sm:$0xff]
        %v4185 = vld [vmem:[%s8 + $0x8] sm:$0xff]
        %v4186 = vld [vmem:[%s8 + $0x10] sm:$0xff]
        %v4187 = vld [vmem:[%s8 + $0x18] sm:$0xff]
        %v4188 = vld [vmem:[%s9] sm:$0x1]
        %v4190 = vlaneseq
        %v4191 = vshrl.u32 %v4190, 7
        %v4192 = vsub.s32 0, %v4191
        %v4193 = vrot.slane %v4188, %v4192
        %v4196 = vsel %vm1824, %v4183, 0
        %4198 = vmatprep.subr.mxu0 0.0
        %4199 = vmatpush1.msra.mxu0 %v4184
        %4200 = vmatprep.subr.mxu0 0.0
        %4201 = vmatpush1.msra.mxu0 %v4185
        %4202 = vmatprep.subr.mxu0 0.0
        %4203 = vmatpush1.msra.mxu0 %v4186
        %4204 = vmatprep.subr.mxu0 0.0
        %4205 = vmatpush1.msra.mxu0 %v4187
        %4206 = vmatprep.subr.mxu0 0.0
        %4207 = vmatpush1.msra.mxu0 0.0
        %4208 = vmatprep.subr.mxu0 0.0
        %4209 = vmatpush1.msra.mxu0 0.0
        %4210 = vmatprep.subr.mxu0 0.0
        %4211 = vmatpush1.msra.mxu0 0.0
        %4212 = vmatprep.subr.mxu0 0.0
        %4213 = vmatpush1.msra.mxu0 0.0
        %4214 = vmatprep.subr.mxu0 0.0
        %4215 = vmatpush1.msra.mxu0 0.0
        %4216 = vmatprep.subr.mxu0 0.0
        %4217 = vmatpush1.msra.mxu0 0.0
        %4218 = vmatprep.subr.mxu0 0.0
        %4219 = vmatpush1.msra.mxu0 0.0
        %4220 = vmatprep.subr.mxu0 0.0
        %4221 = vmatpush1.msra.mxu0 0.0
        %4222 = vmatprep.subr.mxu0 0.0
        %4223 = vmatpush1.msra.mxu0 0.0
        %4224 = vmatprep.subr.mxu0 0.0
        %4225 = vmatpush1.msra.mxu0 0.0
        %4226 = vmatprep.subr.mxu0 0.0
        %4227 = vmatpush1.msra.mxu0 0.0
        %4228 = vmatprep.subr.mxu0 0.0
        %4229 = vmatpush1.msra.mxu0 0.0
        %4230 = vmatprep.subr.mxu0 0.0
        %4231 = vmatpush1.msra.mxu0 0.0
        %4232 = vmatprep.subr.mxu0 0.0
        %4233 = vmatpush1.msra.mxu0 0.0
        %4234 = vmatprep.subr.mxu0 0.0
        %4235 = vmatpush1.msra.mxu0 0.0
        %4236 = vmatprep.subr.mxu0 0.0
        %4237 = vmatpush1.msra.mxu0 0.0
        %4238 = vmatprep.subr.mxu0 0.0
        %4239 = vmatpush1.msra.mxu0 0.0
        %4240 = vmatprep.subr.mxu0 0.0
        %4241 = vmatpush1.msra.mxu0 0.0
        %4242 = vmatprep.subr.mxu0 0.0
        %4243 = vmatpush1.msra.mxu0 0.0
        %4244 = vmatprep.subr.mxu0 0.0
        %4245 = vmatpush1.msra.mxu0 0.0
        %4246 = vmatprep.subr.mxu0 0.0
        %4247 = vmatpush1.msra.mxu0 0.0
        %4248 = vmatprep.subr.mxu0 0.0
        %4249 = vmatpush1.msra.mxu0 0.0
        %4250 = vmatprep.subr.mxu0 0.0
        %4251 = vmatpush1.msra.mxu0 0.0
        %4252 = vmatprep.subr.mxu0 0.0
        %4253 = vmatpush1.msra.mxu0 0.0
        %4254 = vmatprep.subr.mxu0 0.0
        %4255 = vmatpush1.msra.mxu0 0.0
        %4256 = vmatprep.subr.mxu0 0.0
        %4257 = vmatpush1.msra.mxu0 0.0
        %4258 = vmatprep.subr.mxu0 0.0
        %4259 = vmatpush1.msra.mxu0 0.0
        %4260 = vmatprep.subr.mxu0 0.0
        %4261 = vmatpush1.msra.mxu0 0.0
        %4262 = vmatprep.mubr.f32.mxu0 0.0
        %4263 = vmatmul.mubr.f32.gmra.mrb[0].mxu0 %v4196
        %v4264 = vpop.f32.mrb[0].mxu0
        %v4265 = vadd.f32 %v4193, %v4264
        %v4266 = vpop.f32.mrb[0].mxu0
        %4267 = vdwg.mxu0
        %v4268 = vmax.f32 %v4265, 0.0
        %v4269 = vld [vmem:[%s10] sm:$0xff]
        %v4270 = vld [vmem:[%s10 + $0x8] sm:$0xff]
        %v4271 = vld [vmem:[%s10 + $0x10] sm:$0xff]
        %v4272 = vld [vmem:[%s10 + $0x18] sm:$0xff]
        %v4273 = vld [vmem:[%s10 + $0x20] sm:$0xff]
        %v4274 = vld [vmem:[%s10 + $0x28] sm:$0xff]
        %v4275 = vld [vmem:[%s10 + $0x30] sm:$0xff]
        %v4276 = vld [vmem:[%s10 + $0x38] sm:$0xff]
        %vm4277 = vcmask 523264
        %v4279 = vsel %vm4277, %v4268, 0
        %4281 = vmatprep.subr.mxu0 0.0
        %4282 = vmatpush1.msra.mxu0 %v4269
        %4283 = vmatprep.subr.mxu0 0.0
        %4284 = vmatpush1.msra.mxu0 %v4270
        %4285 = vmatprep.subr.mxu0 0.0
        %4286 = vmatpush1.msra.mxu0 %v4271
        %4287 = vmatprep.subr.mxu0 0.0
        %4288 = vmatpush1.msra.mxu0 %v4272
        %4289 = vmatprep.subr.mxu0 0.0
        %4290 = vmatpush1.msra.mxu0 %v4273
        %4291 = vmatprep.subr.mxu0 0.0
        %4292 = vmatpush1.msra.mxu0 %v4274
        %4293 = vmatprep.subr.mxu0 0.0
        %4294 = vmatpush1.msra.mxu0 %v4275
        %4295 = vmatprep.subr.mxu0 0.0
        %4296 = vmatpush1.msra.mxu0 %v4276
        %4297 = vmatprep.subr.mxu0 0.0
        %4298 = vmatpush1.msra.mxu0 0.0
        %4299 = vmatprep.subr.mxu0 0.0
        %4300 = vmatpush1.msra.mxu0 0.0
        %4301 = vmatprep.subr.mxu0 0.0
        %4302 = vmatpush1.msra.mxu0 0.0
        %4303 = vmatprep.subr.mxu0 0.0
        %4304 = vmatpush1.msra.mxu0 0.0
        %4305 = vmatprep.subr.mxu0 0.0
        %4306 = vmatpush1.msra.mxu0 0.0
        %4307 = vmatprep.subr.mxu0 0.0
        %4308 = vmatpush1.msra.mxu0 0.0
        %4309 = vmatprep.subr.mxu0 0.0
        %4310 = vmatpush1.msra.mxu0 0.0
        %4311 = vmatprep.subr.mxu0 0.0
        %4312 = vmatpush1.msra.mxu0 0.0
        %4313 = vmatprep.subr.mxu0 0.0
        %4314 = vmatpush1.msra.mxu0 0.0
        %4315 = vmatprep.subr.mxu0 0.0
        %4316 = vmatpush1.msra.mxu0 0.0
        %4317 = vmatprep.subr.mxu0 0.0
        %4318 = vmatpush1.msra.mxu0 0.0
        %4319 = vmatprep.subr.mxu0 0.0
        %4320 = vmatpush1.msra.mxu0 0.0
        %4321 = vmatprep.subr.mxu0 0.0
        %4322 = vmatpush1.msra.mxu0 0.0
        %4323 = vmatprep.subr.mxu0 0.0
        %4324 = vmatpush1.msra.mxu0 0.0
        %4325 = vmatprep.subr.mxu0 0.0
        %4326 = vmatpush1.msra.mxu0 0.0
        %4327 = vmatprep.subr.mxu0 0.0
        %4328 = vmatpush1.msra.mxu0 0.0
        %4329 = vmatprep.subr.mxu0 0.0
        %4330 = vmatpush1.msra.mxu0 0.0
        %4331 = vmatprep.subr.mxu0 0.0
        %4332 = vmatpush1.msra.mxu0 0.0
        %4333 = vmatprep.subr.mxu0 0.0
        %4334 = vmatpush1.msra.mxu0 0.0
        %4335 = vmatprep.subr.mxu0 0.0
        %4336 = vmatpush1.msra.mxu0 0.0
        %4337 = vmatprep.subr.mxu0 0.0
        %4338 = vmatpush1.msra.mxu0 0.0
        %4339 = vmatprep.subr.mxu0 0.0
        %4340 = vmatpush1.msra.mxu0 0.0
        %4341 = vmatprep.subr.mxu0 0.0
        %4342 = vmatpush1.msra.mxu0 0.0
        %4343 = vmatprep.subr.mxu0 0.0
        %4344 = vmatpush1.msra.mxu0 0.0
        %4345 = vmatprep.mubr.f32.mxu0 0.0
        %4346 = vmatmul.mubr.f32.gmra.mrb[0].mxu0 %v4279
        %v4347 = vpop.f32.mrb[0].mxu0
        %v4348 = vadd.f32 0.0, %v4347
        %v4349 = vpop.f32.mrb[0].mxu0
        %4350 = vdwg.mxu0
        %v4351 = vadd.f32 %v4151, %v4348
        %v4352 = vld [vmem:[%s11] sm:$0x1]
        %v4354 = vlaneseq
        %v4355 = vshrl.u32 %v4354, 7
        %v4356 = vsub.s32 0, %v4355
        %v4357 = vrot.slane %v4352, %v4356
        %v4359 = vadd.f32 %v4351, %v4357
        %4360 = vst.msk [vmem:[%s470] sm:$0xff] %vm1824, %v4359
        %s4361 = sand.u32 %s321, 1
        %s4362 = scalar_lea.sflag [#allocation8], %s4361
        %s4363 = sand.u32 %s321, 1
        %s4364 = smul.addr %s4363, 8
        %s4365 = scalar_lea.vmem [#allocation9], %s4364
        // Predicated region
        $region77: #{tpu_custom_call.1} parent=67 // pred_check
          %p4366 = pneg %p331
        $region78: #{tpu_custom_call.1} parent=67 // pred_check_branch
          %4368 = sbr.rel (%p4366) target = $region80
        $region79: #{tpu_custom_call.1} parent=67 // pred_region
          %s4370 = ssub.s32 128, 128
          %4371 = vsyncadd %s4362, %s4370
          %s4372 = smul.addr %s31, 2
          %s4373 = sadd.s32 %s32, %s4372
          %s4374 = smul.addr %s4373, 128
          %s4375 = scalar_lea.hbm %s12, %s4374
          %s4377 = sshll.u32 %s4365, 4
          %s4378 = int_to_ptr.vmem [resolvable:$true] %s4377
          %4380 = dma.vmem_to_hbm [thread:$0]  %s4378, 128, %s4375, %s4362
        $region80: #{tpu_custom_call.1} parent=67 // pred_fallthru
          _
      $region68: #{tpu_custom_call.1} parent=5 // pred_fallthru
        _
      %p4381 = scmp.le.s32.totalorder 2, %s22
      // Predicated region
      $region81: #{tpu_custom_call.1} parent=5 // pred_check
        %p4382 = pneg %p4381
      $region82: #{tpu_custom_call.1} parent=5 // pred_check_branch
        %4384 = sbr.rel (%p4382) target = $region84
      $region83: #{tpu_custom_call.1} parent=5 // pred_region
        %s4385 = ssub.s32 %s22, 2
        // Predicated region
        $region85: #{tpu_custom_call.1} parent=83 // pred_check
          %p4386 = pneg %p337
        $region86: #{tpu_custom_call.1} parent=83 // pred_check_branch
          %4388 = sbr.rel (%p4386) target = $region88
        $region87: #{tpu_custom_call.1} parent=83 // pred_region
          %s4389 = sand.u32 %s322, 1
          %s4390 = scalar_lea.sflag [#allocation8], %s4389
          %s4391 = sand.u32 %s322, 1
          %s4392 = smul.addr %s4391, 8
          %s4393 = scalar_lea.vmem [#allocation9], %s4392
          %4394 = dma.done %s4390, 128
        $region88: #{tpu_custom_call.1} parent=83 // pred_fallthru
          _
      $region84: #{tpu_custom_call.1} parent=5 // pred_fallthru
        _
    $region6: #{tpu_custom_call.1} parent=1 // loop_footer
      %s26 = sadd.s32 1, %s22
    $region7: #{tpu_custom_call.1} parent=1 // loop_footer_branch
      %21 = sbr.rel target = $region3
    $region8: #{tpu_custom_call.1} parent=1 // loop_exit
      _
    %4395 = vsyncpa [#allocation7], 1
    %s4396 = scalar_lea.sflag [#allocation7], 1
    %4397 = vsyncpa %s4396, 1
    %4398 = vsyncpa [#allocation8], 1
    %s4399 = scalar_lea.sflag [#allocation8], 1
    %4400 = vsyncpa %s4399, 1

</llo_original>
